<compile_context>
chip_gen: v5e
topology: v5e:2x2
jax: 0.10.0
libtpu: 0.0.40
codegen_flags: <defaults>
</compile_context>

<pallas_src>
import functools
import math

import jax
import jax.numpy as jnp
from jax.experimental import pallas as pl
from jax.experimental.pallas import tpu as pltpu


def encoder_layer_kernel(x_ref,
                         wq_ref, bq_ref, wkv_ref, bkv_ref, wo_ref, bo_ref,
                         g1_ref, be1_ref, w1_ref, bb1_ref, w2_ref, bb2_ref,
                         g2_ref, be2_ref,
                         out_ref,
                         k_scr, v_scr, q_scr, o_scr):
    f32, bf16 = jnp.float32, jnp.bfloat16
    S, D = x_ref.shape[1], x_ref.shape[2]
    H, _, hd = k_scr.shape
    TQ = out_ref.shape[1]
    qi = pl.program_id(1)

    # ---- once per batch: fused lane-dense K/V projection, cached head-major ----
    @pl.when(qi == 0)
    def _():
        x_all = x_ref[0].astype(bf16)                                  # (S, D)
        kv = jnp.dot(x_all, wkv_ref[...],
                     preferred_element_type=f32) + bkv_ref[...]        # (S, 2D)
        k_all = kv[:, :D]
        v_all = kv[:, D:]
        for h in range(H):                 # head split: H cheap 32-lane copies
            sl = slice(h * hd, (h + 1) * hd)
            k_scr[h] = k_all[:, sl].astype(bf16)
            v_scr[h] = v_all[:, sl].astype(bf16)

    # ---- per query tile --------------------------------------------------------
    row0 = pl.multiple_of(qi * TQ, TQ)
    xq = x_ref[0, pl.ds(row0, TQ), :]                                  # (TQ, D) f32
    # Q projection (1/sqrt(hd) already folded into wq/bq in the wrapper).
    q2d = jnp.dot(xq.astype(bf16), wq_ref[...],
                  preferred_element_type=f32) + bq_ref[...]            # (TQ, D)
    for h in range(H):
        q_scr[h] = q2d[:, h * hd:(h + 1) * hd].astype(bf16)

    # Head-batched attention (leading batch dim = H), like the flash pattern.
    # TODO(synk): switch to an online (flash-style) softmax for very long S so
    # the (H, TQ, S) score tensor does not have to fit VMEM.
    s = jnp.einsum("hqe,hke->hqk", q_scr[...], k_scr[...],
                   preferred_element_type=f32)                         # (H, TQ, S)
    m = jnp.max(s, axis=-1, keepdims=True)
    e = jnp.exp(s - m)
    p = (e * pl.reciprocal(jnp.sum(e, axis=-1, keepdims=True),
                           approx=True)).astype(bf16)                  # EUP recip
    o = jnp.einsum("hqk,hke->hqe", p, v_scr[...],
                   preferred_element_type=f32)                         # (H, TQ, hd)

    # Assemble heads lane-dense so the output projection is ONE K=D MXU dot
    # (head reduction fused into the contraction).
    for h in range(H):
        o_scr[:, h * hd:(h + 1) * hd] = o[h].astype(bf16)
    attn = jnp.dot(o_scr[...], wo_ref[...],
                   preferred_element_type=f32) + bo_ref[...]           # (TQ, D)

    # ---- residual + LayerNorm 1 (dropout1 == identity, eval mode) --------------
    y = xq + attn
    mu = jnp.mean(y, axis=-1, keepdims=True)
    yc = y - mu
    var = jnp.mean(yc * yc, axis=-1, keepdims=True)
    y = yc * jax.lax.rsqrt(var + 1e-5) * g1_ref[...] + be1_ref[...]

    # ---- feed-forward: linear1 -> relu -> linear2 (bf16 in, f32 accum) ---------
    h1 = jnp.dot(y.astype(bf16), w1_ref[...],
                 preferred_element_type=f32) + bb1_ref[...]
    h1 = jnp.maximum(h1, 0.0)
    h2 = jnp.dot(h1.astype(bf16), w2_ref[...],
                 preferred_element_type=f32) + bb2_ref[...]

    # ---- residual + LayerNorm 2 (dropout2 == identity, eval mode) --------------
    z = y + h2
    mu2 = jnp.mean(z, axis=-1, keepdims=True)
    zc = z - mu2
    var2 = jnp.mean(zc * zc, axis=-1, keepdims=True)
    z = zc * jax.lax.rsqrt(var2 + 1e-5) * g2_ref[...] + be2_ref[...]

    out_ref[0] = z.astype(out_ref.dtype)


def make_params(key, d_model, nhead, dim_feedforward):
    ks = jax.random.split(key, 16)
    n = lambda k, s, sc=0.05: (sc * jax.random.normal(k, s)).astype(jnp.float32)
    # Linear weights stored pre-transposed: (in_features, out_features), so
    # y = x @ W + b (equivalent to torch's x @ W^T + b).
    return dict(
        wq=n(ks[0], (d_model, d_model)), bq=n(ks[1], (1, d_model), 0.02),
        wk=n(ks[2], (d_model, d_model)), bk=n(ks[3], (1, d_model), 0.02),
        wv=n(ks[4], (d_model, d_model)), bv=n(ks[5], (1, d_model), 0.02),
        wo=n(ks[6], (d_model, d_model)), bo=n(ks[7], (1, d_model), 0.02),
        g1=1.0 + n(ks[8], (1, d_model), 0.1), be1=n(ks[9], (1, d_model), 0.1),
        w1=n(ks[10], (d_model, dim_feedforward)),
        bb1=n(ks[11], (1, dim_feedforward), 0.02),
        w2=n(ks[12], (dim_feedforward, d_model)),
        bb2=n(ks[13], (1, d_model), 0.02),
        g2=1.0 + n(ks[14], (1, d_model), 0.1), be2=n(ks[15], (1, d_model), 0.1),
    )


def prepare_kernel_params(p, nhead, compute_dtype=jnp.bfloat16):
    """Fold 1/sqrt(hd) into wq/bq (consistent with scaling q after the bias),
    fuse wk/wv into one lane-dense (D, 2D) weight, and cast matmul weights to
    bf16.  Biases and LayerNorm params stay f32."""
    D = p["wq"].shape[0]
    hd = D // nhead
    scale = 1.0 / (hd ** 0.5)
    return dict(
        wq=(p["wq"] * scale).astype(compute_dtype),
        bq=p["bq"] * scale,
        wkv=jnp.concatenate([p["wk"], p["wv"]], axis=1).astype(compute_dtype),
        bkv=jnp.concatenate([p["bk"], p["bv"]], axis=1),
        wo=p["wo"].astype(compute_dtype), bo=p["bo"],
        g1=p["g1"], be1=p["be1"],
        w1=p["w1"].astype(compute_dtype), bb1=p["bb1"],
        w2=p["w2"].astype(compute_dtype), bb2=p["bb2"],
        g2=p["g2"], be2=p["be2"],
    )


WEIGHT_ORDER = ("wq", "bq", "wkv", "bkv", "wo", "bo",
                "g1", "be1", "w1", "bb1", "w2", "bb2", "g2", "be2")


def _tile_vmem_bytes(tq, S, D, F, H, weight_bytes):
    """Rough per-step VMEM model (review item: derive the budget, don't guess)."""
    hd_pad = max(D // H, 128)                       # hd < 128 lanes pad to 128
    scratch = (2 * H * S + H * tq) * hd_pad * 2 + tq * D * 2
    temps = 3 * H * tq * S * 4 + tq * F * 4 + 6 * tq * D * 4
    blocks = 2 * S * D * 4 + 2 * tq * D * 4         # double-buffered x / out blocks
    return blocks + 2 * weight_bytes + scratch + temps


def _choose_q_tile(S, D, F, H, weight_bytes, budget=40 * 1024 * 1024):
    """Largest legal query tile (divisor of S, multiple of 8 or == S) that fits."""
    legal = [t for t in range(S, 0, -1) if S % t == 0 and (t == S or t % 8 == 0)]
    for t in legal:
        if _tile_vmem_bytes(t, S, D, F, H, weight_bytes) <= budget:
            return t
    return legal[-1]


@functools.partial(jax.jit, static_argnames=("nhead", "q_tile"))
def encoder_layer_pallas(src, kp, nhead, q_tile=None):
    """src: (S, B, D) float32, matching torch's MultiheadAttention convention."""
    S, B, D = src.shape
    F = kp["w1"].shape[1]
    H = nhead
    hd = D // H

    # TODO(synk): index the (S, B, D) layout directly (squeezed-batch BlockSpec)
    # to drop these two HBM transpose round-trips (perf-review item 5).
    # TODO(synk): optionally ship activations as bf16 at the boundary (item 6).
    x = jnp.transpose(src, (1, 0, 2))                       # (B, S, D)

    weight_args = tuple(kp[name] for name in WEIGHT_ORDER)
    weight_bytes = sum(math.prod(w.shape) * w.dtype.itemsize for w in weight_args)

    TQ = q_tile if q_tile is not None else _choose_q_tile(S, D, F, H, weight_bytes)
    if S % TQ != 0 or (TQ != S and TQ % 8 != 0):
        TQ = S                                              # fall back to untiled
    num_q = S // TQ

    def full_spec(shape):
        zeros = (0,) * len(shape)
        return pl.BlockSpec(shape, lambda b, qi: zeros)     # revisited, not re-DMA'd

    # TODO(synk): single-buffer these grid-invariant weight blocks with
    # pipeline_mode=pl.Buffered(1) to halve their VMEM on v7x.
    weight_specs = [full_spec(w.shape) for w in weight_args]

    est = _tile_vmem_bytes(TQ, S, D, F, H, weight_bytes)
    vmem_limit = int(min(64 * 1024 * 1024,                  # v7x physical ceiling
                         max(32 * 1024 * 1024, 2 * est)))

    out = pl.pallas_call(
        encoder_layer_kernel,
        out_shape=jax.ShapeDtypeStruct((B, S, D), jnp.float32),
        grid=(B, num_q),
        in_specs=[pl.BlockSpec((1, S, D), lambda b, qi: (b, 0, 0)),  # rows + K/V
                  *weight_specs],
        out_specs=pl.BlockSpec((1, TQ, D), lambda b, qi: (b, qi, 0)),
        scratch_shapes=[
            pltpu.VMEM((H, S, hd), jnp.bfloat16),    # K cache (head-major)
            pltpu.VMEM((H, S, hd), jnp.bfloat16),    # V cache (head-major)
            pltpu.VMEM((H, TQ, hd), jnp.bfloat16),   # per-tile Q (head-major)
            pltpu.VMEM((TQ, D), jnp.bfloat16),       # lane-dense attention output
        ],
        compiler_params=pltpu.CompilerParams(
            dimension_semantics=("parallel", "arbitrary"),
            vmem_limit_bytes=vmem_limit),
    )(x, *weight_args)

    return jnp.transpose(out, (1, 0, 2))                    # back to (S, B, D)


def encoder_layer_ref(src, p, nhead):
    """Pure-JAX f32 reference mirroring the PyTorch module in eval mode."""
    S, B, D = src.shape
    hd = D // nhead
    x = jnp.transpose(src, (1, 0, 2))                       # (B, S, D)
    q = x @ p["wq"] + p["bq"]
    k = x @ p["wk"] + p["bk"]
    v = x @ p["wv"] + p["bv"]
    qh = q.reshape(B, S, nhead, hd) / jnp.sqrt(jnp.float32(hd))
    kh = k.reshape(B, S, nhead, hd)
    vh = v.reshape(B, S, nhead, hd)
    s = jnp.einsum("bqhd,bkhd->bhqk", qh, kh)
    a = jax.nn.softmax(s, axis=-1)
    o = jnp.einsum("bhqk,bkhd->bqhd", a, vh).reshape(B, S, D)
    o = o @ p["wo"] + p["bo"]

    def ln(t, g, b):
        mu = jnp.mean(t, axis=-1, keepdims=True)
        var = jnp.mean((t - mu) ** 2, axis=-1, keepdims=True)
        return (t - mu) * jax.lax.rsqrt(var + 1e-5) * g + b

    y = ln(x + o, p["g1"], p["be1"])
    h = jnp.maximum(y @ p["w1"] + p["bb1"], 0.0)
    z = ln(y + h @ p["w2"] + p["bb2"], p["g2"], p["be2"])
    return jnp.transpose(z, (1, 0, 2))


if __name__ == "__main__":
    # Lane/sublane-dense small shapes: D, F multiples of 128, S multiple of 8.
    d_model, nhead, dim_feedforward = 128, 4, 256
    seq, batch = 128, 2

    key = jax.random.PRNGKey(0)
    k_src, k_par = jax.random.split(key)
    src = jax.random.normal(k_src, (seq, batch, d_model), dtype=jnp.float32)
    params = make_params(k_par, d_model, nhead, dim_feedforward)
    kparams = prepare_kernel_params(params, nhead)

    ref = encoder_layer_ref(src, params, nhead)

    # Default: largest tile that fits -> TQ == S, grid (B, 1).
    out = jax.block_until_ready(encoder_layer_pallas(src, kparams, nhead=nhead))
    assert out.shape == (seq, batch, d_model)
    err = float(jnp.max(jnp.abs(out - ref)))
    # bf16 matmul operands with f32 accumulation vs. an all-f32 reference.
    assert err < 7.5e-2, f"max err (TQ=S) {err}"

    # Also exercise the tiled path (grid (B, 2)) with the cached-K/V branch.
    out_t = jax.block_until_ready(
        encoder_layer_pallas(src, kparams, nhead=nhead, q_tile=64))
    err_t = float(jnp.max(jnp.abs(out_t - ref)))
    assert err_t < 7.5e-2, f"max err (TQ=64) {err_t}"

    print("KERNEL_OK")
</pallas_src>

<mosaic_0001>
module attributes {stable_mosaic.version = 11 : i64} {
  func.func @encoder_layer_kernel(%arg0: i32, %arg1: i32, %arg2: memref<1x128x128xf32, #tpu.memory_space<vmem>>, %arg3: memref<128x128xbf16, #tpu.memory_space<vmem>>, %arg4: memref<1x128xf32, #tpu.memory_space<vmem>>, %arg5: memref<128x256xbf16, #tpu.memory_space<vmem>>, %arg6: memref<1x256xf32, #tpu.memory_space<vmem>>, %arg7: memref<128x128xbf16, #tpu.memory_space<vmem>>, %arg8: memref<1x128xf32, #tpu.memory_space<vmem>>, %arg9: memref<1x128xf32, #tpu.memory_space<vmem>>, %arg10: memref<1x128xf32, #tpu.memory_space<vmem>>, %arg11: memref<128x256xbf16, #tpu.memory_space<vmem>>, %arg12: memref<1x256xf32, #tpu.memory_space<vmem>>, %arg13: memref<256x128xbf16, #tpu.memory_space<vmem>>, %arg14: memref<1x128xf32, #tpu.memory_space<vmem>>, %arg15: memref<1x128xf32, #tpu.memory_space<vmem>>, %arg16: memref<1x128xf32, #tpu.memory_space<vmem>>, %arg17: memref<1x128x128xf32, #tpu.memory_space<vmem>>, %arg18: memref<4x128x32xbf16, #tpu.memory_space<vmem>>, %arg19: memref<4x128x32xbf16, #tpu.memory_space<vmem>>, %arg20: memref<4x128x32xbf16, #tpu.memory_space<vmem>>, %arg21: memref<128x128xbf16, #tpu.memory_space<vmem>>) attributes {dimension_semantics = [#tpu.dimension_semantics<parallel>, #tpu.dimension_semantics<arbitrary>], iteration_bounds = array<i64: 2, 1>, scalar_prefetch = 0 : i64, scratch_operands = 4 : i64, tpu.core_type = #tpu.core_type<tc>, window_params = [{transform_indices = @transform_0, window_bounds = array<i64: 1, 128, 128>}, {pipeline_mode = #tpu.pipeline_mode<synchronous>, transform_indices = @transform_1, window_bounds = array<i64: 128, 128>}, {pipeline_mode = #tpu.pipeline_mode<synchronous>, transform_indices = @transform_2, window_bounds = array<i64: 1, 128>}, {pipeline_mode = #tpu.pipeline_mode<synchronous>, transform_indices = @transform_3, window_bounds = array<i64: 128, 256>}, {pipeline_mode = #tpu.pipeline_mode<synchronous>, transform_indices = @transform_4, window_bounds = array<i64: 1, 256>}, {pipeline_mode = #tpu.pipeline_mode<synchronous>, transform_indices = @transform_5, window_bounds = array<i64: 128, 128>}, {pipeline_mode = #tpu.pipeline_mode<synchronous>, transform_indices = @transform_6, window_bounds = array<i64: 1, 128>}, {pipeline_mode = #tpu.pipeline_mode<synchronous>, transform_indices = @transform_7, window_bounds = array<i64: 1, 128>}, {pipeline_mode = #tpu.pipeline_mode<synchronous>, transform_indices = @transform_8, window_bounds = array<i64: 1, 128>}, {pipeline_mode = #tpu.pipeline_mode<synchronous>, transform_indices = @transform_9, window_bounds = array<i64: 128, 256>}, {pipeline_mode = #tpu.pipeline_mode<synchronous>, transform_indices = @transform_10, window_bounds = array<i64: 1, 256>}, {pipeline_mode = #tpu.pipeline_mode<synchronous>, transform_indices = @transform_11, window_bounds = array<i64: 256, 128>}, {pipeline_mode = #tpu.pipeline_mode<synchronous>, transform_indices = @transform_12, window_bounds = array<i64: 1, 128>}, {pipeline_mode = #tpu.pipeline_mode<synchronous>, transform_indices = @transform_13, window_bounds = array<i64: 1, 128>}, {pipeline_mode = #tpu.pipeline_mode<synchronous>, transform_indices = @transform_14, window_bounds = array<i64: 1, 128>}, {transform_indices = @transform_15, window_bounds = array<i64: 1, 128, 128>}]} {
    %c0_i32 = arith.constant 0 : i32
    %0 = arith.cmpi eq, %arg1, %c0_i32 : i32
    %1 = arith.extui %0 : i1 to i32
    %c0_i32_0 = arith.constant 0 : i32
    %2 = arith.cmpi ne, %1, %c0_i32_0 : i32
    scf.if %2 {
      %c0_72 = arith.constant 0 : index
      %c0_73 = arith.constant 0 : index
      %c0_74 = arith.constant 0 : index
      %135 = vector.load %arg2[%c0_72, %c0_73, %c0_74] : memref<1x128x128xf32, #tpu.memory_space<vmem>>, vector<1x128x128xf32>
      %136 = vector.shape_cast %135 : vector<1x128x128xf32> to vector<128x128xf32>
      %137 = arith.truncf %136 : vector<128x128xf32> to vector<128x128xbf16>
      %c0_75 = arith.constant 0 : index
      %c0_76 = arith.constant 0 : index
      %138 = vector.load %arg5[%c0_75, %c0_76] : memref<128x256xbf16, #tpu.memory_space<vmem>>, vector<128x256xbf16>
      %cst_77 = arith.constant dense<0.000000e+00> : vector<128x256xf32>
      %139 = tpu.matmul %137, %138, %cst_77 {dimension_numbers = #tpu.dot_dimension_numbers<[1], [0], [0], [1], [0, 0, 1, 1], [], []>} : vector<128x128xbf16>, vector<128x256xbf16>, vector<128x256xf32> -> vector<128x256xf32>
      %c0_78 = arith.constant 0 : index
      %c0_79 = arith.constant 0 : index
      %140 = vector.load %arg6[%c0_78, %c0_79] : memref<1x256xf32, #tpu.memory_space<vmem>>, vector<1x256xf32>
      %141 = vector.broadcast %140 : vector<1x256xf32> to vector<128x256xf32>
      %142 = arith.addf %139, %141 : vector<128x256xf32>
      %143 = vector.extract_strided_slice %142 {offsets = [0, 0], sizes = [128, 128], strides = [1, 1]} : vector<128x256xf32> to vector<128x128xf32>
      %144 = vector.extract_strided_slice %142 {offsets = [0, 128], sizes = [128, 128], strides = [1, 1]} : vector<128x256xf32> to vector<128x128xf32>
      %145 = vector.extract_strided_slice %143 {offsets = [0, 0], sizes = [128, 32], strides = [1, 1]} : vector<128x128xf32> to vector<128x32xf32>
      %146 = arith.truncf %145 : vector<128x32xf32> to vector<128x32xbf16>
      %c0_80 = arith.constant 0 : index
      %c0_81 = arith.constant 0 : index
      %c0_82 = arith.constant 0 : index
      %147 = vector.load %arg18[%c0_80, %c0_81, %c0_82] : memref<4x128x32xbf16, #tpu.memory_space<vmem>>, vector<1x128x32xbf16>
      %148 = vector.shape_cast %147 : vector<1x128x32xbf16> to vector<128x32xbf16>
      %149 = vector.shape_cast %146 : vector<128x32xbf16> to vector<1x128x32xbf16>
      tpu.vector_store %arg18[%c0_80, %c0_81, %c0_82], %149 {strides = array<i32>} : memref<4x128x32xbf16, #tpu.memory_space<vmem>>, vector<1x128x32xbf16>,
      %150 = vector.extract_strided_slice %144 {offsets = [0, 0], sizes = [128, 32], strides = [1, 1]} : vector<128x128xf32> to vector<128x32xf32>
      %151 = arith.truncf %150 : vector<128x32xf32> to vector<128x32xbf16>
      %c0_83 = arith.constant 0 : index
      %c0_84 = arith.constant 0 : index
      %c0_85 = arith.constant 0 : index
      %152 = vector.load %arg19[%c0_83, %c0_84, %c0_85] : memref<4x128x32xbf16, #tpu.memory_space<vmem>>, vector<1x128x32xbf16>
      %153 = vector.shape_cast %152 : vector<1x128x32xbf16> to vector<128x32xbf16>
      %154 = vector.shape_cast %151 : vector<128x32xbf16> to vector<1x128x32xbf16>
      tpu.vector_store %arg19[%c0_83, %c0_84, %c0_85], %154 {strides = array<i32>} : memref<4x128x32xbf16, #tpu.memory_space<vmem>>, vector<1x128x32xbf16>,
      %155 = vector.extract_strided_slice %143 {offsets = [0, 32], sizes = [128, 32], strides = [1, 1]} : vector<128x128xf32> to vector<128x32xf32>
      %156 = arith.truncf %155 : vector<128x32xf32> to vector<128x32xbf16>
      %c1_86 = arith.constant 1 : index
      %c0_87 = arith.constant 0 : index
      %c0_88 = arith.constant 0 : index
      %157 = vector.load %arg18[%c1_86, %c0_87, %c0_88] : memref<4x128x32xbf16, #tpu.memory_space<vmem>>, vector<1x128x32xbf16>
      %158 = vector.shape_cast %157 : vector<1x128x32xbf16> to vector<128x32xbf16>
      %159 = vector.shape_cast %156 : vector<128x32xbf16> to vector<1x128x32xbf16>
      tpu.vector_store %arg18[%c1_86, %c0_87, %c0_88], %159 {strides = array<i32>} : memref<4x128x32xbf16, #tpu.memory_space<vmem>>, vector<1x128x32xbf16>,
      %160 = vector.extract_strided_slice %144 {offsets = [0, 32], sizes = [128, 32], strides = [1, 1]} : vector<128x128xf32> to vector<128x32xf32>
      %161 = arith.truncf %160 : vector<128x32xf32> to vector<128x32xbf16>
      %c1_89 = arith.constant 1 : index
      %c0_90 = arith.constant 0 : index
      %c0_91 = arith.constant 0 : index
      %162 = vector.load %arg19[%c1_89, %c0_90, %c0_91] : memref<4x128x32xbf16, #tpu.memory_space<vmem>>, vector<1x128x32xbf16>
      %163 = vector.shape_cast %162 : vector<1x128x32xbf16> to vector<128x32xbf16>
      %164 = vector.shape_cast %161 : vector<128x32xbf16> to vector<1x128x32xbf16>
      tpu.vector_store %arg19[%c1_89, %c0_90, %c0_91], %164 {strides = array<i32>} : memref<4x128x32xbf16, #tpu.memory_space<vmem>>, vector<1x128x32xbf16>,
      %165 = vector.extract_strided_slice %143 {offsets = [0, 64], sizes = [128, 32], strides = [1, 1]} : vector<128x128xf32> to vector<128x32xf32>
      %166 = arith.truncf %165 : vector<128x32xf32> to vector<128x32xbf16>
      %c2_92 = arith.constant 2 : index
      %c0_93 = arith.constant 0 : index
      %c0_94 = arith.constant 0 : index
      %167 = vector.load %arg18[%c2_92, %c0_93, %c0_94] : memref<4x128x32xbf16, #tpu.memory_space<vmem>>, vector<1x128x32xbf16>
      %168 = vector.shape_cast %167 : vector<1x128x32xbf16> to vector<128x32xbf16>
      %169 = vector.shape_cast %166 : vector<128x32xbf16> to vector<1x128x32xbf16>
      tpu.vector_store %arg18[%c2_92, %c0_93, %c0_94], %169 {strides = array<i32>} : memref<4x128x32xbf16, #tpu.memory_space<vmem>>, vector<1x128x32xbf16>,
      %170 = vector.extract_strided_slice %144 {offsets = [0, 64], sizes = [128, 32], strides = [1, 1]} : vector<128x128xf32> to vector<128x32xf32>
      %171 = arith.truncf %170 : vector<128x32xf32> to vector<128x32xbf16>
      %c2_95 = arith.constant 2 : index
      %c0_96 = arith.constant 0 : index
      %c0_97 = arith.constant 0 : index
      %172 = vector.load %arg19[%c2_95, %c0_96, %c0_97] : memref<4x128x32xbf16, #tpu.memory_space<vmem>>, vector<1x128x32xbf16>
      %173 = vector.shape_cast %172 : vector<1x128x32xbf16> to vector<128x32xbf16>
      %174 = vector.shape_cast %171 : vector<128x32xbf16> to vector<1x128x32xbf16>
      tpu.vector_store %arg19[%c2_95, %c0_96, %c0_97], %174 {strides = array<i32>} : memref<4x128x32xbf16, #tpu.memory_space<vmem>>, vector<1x128x32xbf16>,
      %175 = vector.extract_strided_slice %143 {offsets = [0, 96], sizes = [128, 32], strides = [1, 1]} : vector<128x128xf32> to vector<128x32xf32>
      %176 = arith.truncf %175 : vector<128x32xf32> to vector<128x32xbf16>
      %c3_98 = arith.constant 3 : index
      %c0_99 = arith.constant 0 : index
      %c0_100 = arith.constant 0 : index
      %177 = vector.load %arg18[%c3_98, %c0_99, %c0_100] : memref<4x128x32xbf16, #tpu.memory_space<vmem>>, vector<1x128x32xbf16>
      %178 = vector.shape_cast %177 : vector<1x128x32xbf16> to vector<128x32xbf16>
      %179 = vector.shape_cast %176 : vector<128x32xbf16> to vector<1x128x32xbf16>
      tpu.vector_store %arg18[%c3_98, %c0_99, %c0_100], %179 {strides = array<i32>} : memref<4x128x32xbf16, #tpu.memory_space<vmem>>, vector<1x128x32xbf16>,
      %180 = vector.extract_strided_slice %144 {offsets = [0, 96], sizes = [128, 32], strides = [1, 1]} : vector<128x128xf32> to vector<128x32xf32>
      %181 = arith.truncf %180 : vector<128x32xf32> to vector<128x32xbf16>
      %c3_101 = arith.constant 3 : index
      %c0_102 = arith.constant 0 : index
      %c0_103 = arith.constant 0 : index
      %182 = vector.load %arg19[%c3_101, %c0_102, %c0_103] : memref<4x128x32xbf16, #tpu.memory_space<vmem>>, vector<1x128x32xbf16>
      %183 = vector.shape_cast %182 : vector<1x128x32xbf16> to vector<128x32xbf16>
      %184 = vector.shape_cast %181 : vector<128x32xbf16> to vector<1x128x32xbf16>
      tpu.vector_store %arg19[%c3_101, %c0_102, %c0_103], %184 {strides = array<i32>} : memref<4x128x32xbf16, #tpu.memory_space<vmem>>, vector<1x128x32xbf16>,
    } else {
    }
    %c128_i32 = arith.constant 128 : i32
    %3 = arith.muli %arg1, %c128_i32 : i32
    %4 = tpu.assume_multiple %3, 128 : i32
    %c0 = arith.constant 0 : index
    %5 = arith.index_cast %4 : i32 to index
    %c0_1 = arith.constant 0 : index
    %6 = vector.load %arg2[%c0, %5, %c0_1] : memref<1x128x128xf32, #tpu.memory_space<vmem>>, vector<1x128x128xf32>
    %7 = vector.shape_cast %6 : vector<1x128x128xf32> to vector<128x128xf32>
    %8 = arith.truncf %7 : vector<128x128xf32> to vector<128x128xbf16>
    %c0_2 = arith.constant 0 : index
    %c0_3 = arith.constant 0 : index
    %9 = vector.load %arg3[%c0_2, %c0_3] : memref<128x128xbf16, #tpu.memory_space<vmem>>, vector<128x128xbf16>
    %cst = arith.constant dense<0.000000e+00> : vector<128x128xf32>
    %10 = tpu.matmul %8, %9, %cst {dimension_numbers = #tpu.dot_dimension_numbers<[1], [0], [0], [1], [0, 0, 1, 1], [], []>} : vector<128x128xbf16>, vector<128x128xbf16>, vector<128x128xf32> -> vector<128x128xf32>
    %c0_4 = arith.constant 0 : index
    %c0_5 = arith.constant 0 : index
    %11 = vector.load %arg4[%c0_4, %c0_5] : memref<1x128xf32, #tpu.memory_space<vmem>>, vector<1x128xf32>
    %12 = vector.broadcast %11 : vector<1x128xf32> to vector<128x128xf32>
    %13 = arith.addf %10, %12 : vector<128x128xf32>
    %14 = vector.extract_strided_slice %13 {offsets = [0, 0], sizes = [128, 32], strides = [1, 1]} : vector<128x128xf32> to vector<128x32xf32>
    %15 = arith.truncf %14 : vector<128x32xf32> to vector<128x32xbf16>
    %c0_6 = arith.constant 0 : index
    %c0_7 = arith.constant 0 : index
    %c0_8 = arith.constant 0 : index
    %16 = vector.load %arg20[%c0_6, %c0_7, %c0_8] : memref<4x128x32xbf16, #tpu.memory_space<vmem>>, vector<1x128x32xbf16>
    %17 = vector.shape_cast %16 : vector<1x128x32xbf16> to vector<128x32xbf16>
    %18 = vector.shape_cast %15 : vector<128x32xbf16> to vector<1x128x32xbf16>
    tpu.vector_store %arg20[%c0_6, %c0_7, %c0_8], %18 {strides = array<i32>} : memref<4x128x32xbf16, #tpu.memory_space<vmem>>, vector<1x128x32xbf16>,
    %19 = vector.extract_strided_slice %13 {offsets = [0, 32], sizes = [128, 32], strides = [1, 1]} : vector<128x128xf32> to vector<128x32xf32>
    %20 = arith.truncf %19 : vector<128x32xf32> to vector<128x32xbf16>
    %c1 = arith.constant 1 : index
    %c0_9 = arith.constant 0 : index
    %c0_10 = arith.constant 0 : index
    %21 = vector.load %arg20[%c1, %c0_9, %c0_10] : memref<4x128x32xbf16, #tpu.memory_space<vmem>>, vector<1x128x32xbf16>
    %22 = vector.shape_cast %21 : vector<1x128x32xbf16> to vector<128x32xbf16>
    %23 = vector.shape_cast %20 : vector<128x32xbf16> to vector<1x128x32xbf16>
    tpu.vector_store %arg20[%c1, %c0_9, %c0_10], %23 {strides = array<i32>} : memref<4x128x32xbf16, #tpu.memory_space<vmem>>, vector<1x128x32xbf16>,
    %24 = vector.extract_strided_slice %13 {offsets = [0, 64], sizes = [128, 32], strides = [1, 1]} : vector<128x128xf32> to vector<128x32xf32>
    %25 = arith.truncf %24 : vector<128x32xf32> to vector<128x32xbf16>
    %c2 = arith.constant 2 : index
    %c0_11 = arith.constant 0 : index
    %c0_12 = arith.constant 0 : index
    %26 = vector.load %arg20[%c2, %c0_11, %c0_12] : memref<4x128x32xbf16, #tpu.memory_space<vmem>>, vector<1x128x32xbf16>
    %27 = vector.shape_cast %26 : vector<1x128x32xbf16> to vector<128x32xbf16>
    %28 = vector.shape_cast %25 : vector<128x32xbf16> to vector<1x128x32xbf16>
    tpu.vector_store %arg20[%c2, %c0_11, %c0_12], %28 {strides = array<i32>} : memref<4x128x32xbf16, #tpu.memory_space<vmem>>, vector<1x128x32xbf16>,
    %29 = vector.extract_strided_slice %13 {offsets = [0, 96], sizes = [128, 32], strides = [1, 1]} : vector<128x128xf32> to vector<128x32xf32>
    %30 = arith.truncf %29 : vector<128x32xf32> to vector<128x32xbf16>
    %c3 = arith.constant 3 : index
    %c0_13 = arith.constant 0 : index
    %c0_14 = arith.constant 0 : index
    %31 = vector.load %arg20[%c3, %c0_13, %c0_14] : memref<4x128x32xbf16, #tpu.memory_space<vmem>>, vector<1x128x32xbf16>
    %32 = vector.shape_cast %31 : vector<1x128x32xbf16> to vector<128x32xbf16>
    %33 = vector.shape_cast %30 : vector<128x32xbf16> to vector<1x128x32xbf16>
    tpu.vector_store %arg20[%c3, %c0_13, %c0_14], %33 {strides = array<i32>} : memref<4x128x32xbf16, #tpu.memory_space<vmem>>, vector<1x128x32xbf16>,
    %c0_15 = arith.constant 0 : index
    %c0_16 = arith.constant 0 : index
    %c0_17 = arith.constant 0 : index
    %34 = vector.load %arg20[%c0_15, %c0_16, %c0_17] : memref<4x128x32xbf16, #tpu.memory_space<vmem>>, vector<4x128x32xbf16>
    %c0_18 = arith.constant 0 : index
    %c0_19 = arith.constant 0 : index
    %c0_20 = arith.constant 0 : index
    %35 = vector.load %arg18[%c0_18, %c0_19, %c0_20] : memref<4x128x32xbf16, #tpu.memory_space<vmem>>, vector<4x128x32xbf16>
    "tpu.trace_start"() <{level = 10 : i32, message = "hqe,hke->hqk"}> : () -> ()
    %cst_21 = arith.constant dense<0.000000e+00> : vector<4x128x128xf32>
    %36 = tpu.matmul %34, %35, %cst_21 {dimension_numbers = #tpu.dot_dimension_numbers<[2], [2], [1], [1], [0, 0, 0, 1, 1, 1], [0], [0]>} : vector<4x128x32xbf16>, vector<4x128x32xbf16>, vector<4x128x128xf32> -> vector<4x128x128xf32>
    "tpu.trace_stop"() : () -> ()
    %cst_22 = arith.constant dense<0xFF800000> : vector<4x128xf32>
    %37 = vector.multi_reduction <maximumf>, %36, %cst_22 [2] : vector<4x128x128xf32> to vector<4x128xf32>
    %38 = vector.shape_cast %37 : vector<4x128xf32> to vector<4x128x1xf32>
    %39 = vector.broadcast %38 : vector<4x128x1xf32> to vector<4x128x128xf32>
    %40 = arith.subf %36, %39 : vector<4x128x128xf32>
    %41 = math.exp %40 : vector<4x128x128xf32>
    %cst_23 = arith.constant dense<0.000000e+00> : vector<4x128xf32>
    %42 = vector.multi_reduction <add>, %41, %cst_23 [2] : vector<4x128x128xf32> to vector<4x128xf32>
    %43 = vector.shape_cast %42 : vector<4x128xf32> to vector<4x128x1xf32>
    %44 = tpu.reciprocal %43 {approx = true} : vector<4x128x1xf32> -> vector<4x128x1xf32>
    %45 = vector.broadcast %44 : vector<4x128x1xf32> to vector<4x128x128xf32>
    %46 = arith.mulf %41, %45 : vector<4x128x128xf32>
    %47 = arith.truncf %46 : vector<4x128x128xf32> to vector<4x128x128xbf16>
    %c0_24 = arith.constant 0 : index
    %c0_25 = arith.constant 0 : index
    %c0_26 = arith.constant 0 : index
    %48 = vector.load %arg19[%c0_24, %c0_25, %c0_26] : memref<4x128x32xbf16, #tpu.memory_space<vmem>>, vector<4x128x32xbf16>
    "tpu.trace_start"() <{level = 10 : i32, message = "hqk,hke->hqe"}> : () -> ()
    %cst_27 = arith.constant dense<0.000000e+00> : vector<4x128x32xf32>
    %49 = tpu.matmul %47, %48, %cst_27 {dimension_numbers = #tpu.dot_dimension_numbers<[2], [1], [1], [2], [0, 0, 0, 1, 1, 2], [0], [0]>} : vector<4x128x128xbf16>, vector<4x128x32xbf16>, vector<4x128x32xf32> -> vector<4x128x32xf32>
    "tpu.trace_stop"() : () -> ()
    %50 = vector.extract_strided_slice %49 {offsets = [0, 0, 0], sizes = [1, 128, 32], strides = [1, 1, 1]} : vector<4x128x32xf32> to vector<1x128x32xf32>
    %51 = vector.shape_cast %50 : vector<1x128x32xf32> to vector<128x32xf32>
    %52 = arith.truncf %51 : vector<128x32xf32> to vector<128x32xbf16>
    %c0_28 = arith.constant 0 : index
    %c0_29 = arith.constant 0 : index
    %53 = vector.load %arg21[%c0_28, %c0_29] : memref<128x128xbf16, #tpu.memory_space<vmem>>, vector<128x32xbf16>
    tpu.vector_store %arg21[%c0_28, %c0_29], %52 {strides = array<i32>} : memref<128x128xbf16, #tpu.memory_space<vmem>>, vector<128x32xbf16>,
    %54 = vector.extract_strided_slice %49 {offsets = [1, 0, 0], sizes = [1, 128, 32], strides = [1, 1, 1]} : vector<4x128x32xf32> to vector<1x128x32xf32>
    %55 = vector.shape_cast %54 : vector<1x128x32xf32> to vector<128x32xf32>
    %56 = arith.truncf %55 : vector<128x32xf32> to vector<128x32xbf16>
    %c0_30 = arith.constant 0 : index
    %c32 = arith.constant 32 : index
    %57 = vector.load %arg21[%c0_30, %c32] : memref<128x128xbf16, #tpu.memory_space<vmem>>, vector<128x32xbf16>
    tpu.vector_store %arg21[%c0_30, %c32], %56 {strides = array<i32>} : memref<128x128xbf16, #tpu.memory_space<vmem>>, vector<128x32xbf16>,
    %58 = vector.extract_strided_slice %49 {offsets = [2, 0, 0], sizes = [1, 128, 32], strides = [1, 1, 1]} : vector<4x128x32xf32> to vector<1x128x32xf32>
    %59 = vector.shape_cast %58 : vector<1x128x32xf32> to vector<128x32xf32>
    %60 = arith.truncf %59 : vector<128x32xf32> to vector<128x32xbf16>
    %c0_31 = arith.constant 0 : index
    %c64 = arith.constant 64 : index
    %61 = vector.load %arg21[%c0_31, %c64] : memref<128x128xbf16, #tpu.memory_space<vmem>>, vector<128x32xbf16>
    tpu.vector_store %arg21[%c0_31, %c64], %60 {strides = array<i32>} : memref<128x128xbf16, #tpu.memory_space<vmem>>, vector<128x32xbf16>,
    %62 = vector.extract_strided_slice %49 {offsets = [3, 0, 0], sizes = [1, 128, 32], strides = [1, 1, 1]} : vector<4x128x32xf32> to vector<1x128x32xf32>
    %63 = vector.shape_cast %62 : vector<1x128x32xf32> to vector<128x32xf32>
    %64 = arith.truncf %63 : vector<128x32xf32> to vector<128x32xbf16>
    %c0_32 = arith.constant 0 : index
    %c96 = arith.constant 96 : index
    %65 = vector.load %arg21[%c0_32, %c96] : memref<128x128xbf16, #tpu.memory_space<vmem>>, vector<128x32xbf16>
    tpu.vector_store %arg21[%c0_32, %c96], %64 {strides = array<i32>} : memref<128x128xbf16, #tpu.memory_space<vmem>>, vector<128x32xbf16>,
    %c0_33 = arith.constant 0 : index
    %c0_34 = arith.constant 0 : index
    %66 = vector.load %arg21[%c0_33, %c0_34] : memref<128x128xbf16, #tpu.memory_space<vmem>>, vector<128x128xbf16>
    %c0_35 = arith.constant 0 : index
    %c0_36 = arith.constant 0 : index
    %67 = vector.load %arg7[%c0_35, %c0_36] : memref<128x128xbf16, #tpu.memory_space<vmem>>, vector<128x128xbf16>
    %cst_37 = arith.constant dense<0.000000e+00> : vector<128x128xf32>
    %68 = tpu.matmul %66, %67, %cst_37 {dimension_numbers = #tpu.dot_dimension_numbers<[1], [0], [0], [1], [0, 0, 1, 1], [], []>} : vector<128x128xbf16>, vector<128x128xbf16>, vector<128x128xf32> -> vector<128x128xf32>
    %c0_38 = arith.constant 0 : index
    %c0_39 = arith.constant 0 : index
    %69 = vector.load %arg8[%c0_38, %c0_39] : memref<1x128xf32, #tpu.memory_space<vmem>>, vector<1x128xf32>
    %70 = vector.broadcast %69 : vector<1x128xf32> to vector<128x128xf32>
    %71 = arith.addf %68, %70 : vector<128x128xf32>
    %72 = arith.addf %7, %71 : vector<128x128xf32>
    %cst_40 = arith.constant dense<0.000000e+00> : vector<128xf32>
    %73 = vector.multi_reduction <add>, %72, %cst_40 [1] : vector<128x128xf32> to vector<128xf32>
    %74 = vector.shape_cast %73 : vector<128xf32> to vector<128x1xf32>
    %cst_41 = arith.constant 1.280000e+02 : f32
    %75 = vector.broadcast %cst_41 : f32 to vector<128x1xf32>
    %76 = arith.divf %74, %75 : vector<128x1xf32>
    %77 = vector.broadcast %76 : vector<128x1xf32> to vector<128x128xf32>
    %78 = arith.subf %72, %77 : vector<128x128xf32>
    %79 = arith.mulf %78, %78 : vector<128x128xf32>
    %cst_42 = arith.constant dense<0.000000e+00> : vector<128xf32>
    %80 = vector.multi_reduction <add>, %79, %cst_42 [1] : vector<128x128xf32> to vector<128xf32>
    %81 = vector.shape_cast %80 : vector<128xf32> to vector<128x1xf32>
    %cst_43 = arith.constant 1.280000e+02 : f32
    %82 = vector.broadcast %cst_43 : f32 to vector<128x1xf32>
    %83 = arith.divf %81, %82 : vector<128x1xf32>
    %cst_44 = arith.constant 9.99999974E-6 : f32
    %84 = vector.broadcast %cst_44 : f32 to vector<128x1xf32>
    %85 = arith.addf %83, %84 : vector<128x1xf32>
    %86 = math.rsqrt %85 : vector<128x1xf32>
    %87 = vector.broadcast %86 : vector<128x1xf32> to vector<128x128xf32>
    %88 = arith.mulf %78, %87 : vector<128x128xf32>
    %c0_45 = arith.constant 0 : index
    %c0_46 = arith.constant 0 : index
    %89 = vector.load %arg9[%c0_45, %c0_46] : memref<1x128xf32, #tpu.memory_space<vmem>>, vector<1x128xf32>
    %90 = vector.broadcast %89 : vector<1x128xf32> to vector<128x128xf32>
    %91 = arith.mulf %88, %90 : vector<128x128xf32>
    %c0_47 = arith.constant 0 : index
    %c0_48 = arith.constant 0 : index
    %92 = vector.load %arg10[%c0_47, %c0_48] : memref<1x128xf32, #tpu.memory_space<vmem>>, vector<1x128xf32>
    %93 = vector.broadcast %92 : vector<1x128xf32> to vector<128x128xf32>
    %94 = arith.addf %91, %93 : vector<128x128xf32>
    %95 = arith.truncf %94 : vector<128x128xf32> to vector<128x128xbf16>
    %c0_49 = arith.constant 0 : index
    %c0_50 = arith.constant 0 : index
    %96 = vector.load %arg11[%c0_49, %c0_50] : memref<128x256xbf16, #tpu.memory_space<vmem>>, vector<128x256xbf16>
    %cst_51 = arith.constant dense<0.000000e+00> : vector<128x256xf32>
    %97 = tpu.matmul %95, %96, %cst_51 {dimension_numbers = #tpu.dot_dimension_numbers<[1], [0], [0], [1], [0, 0, 1, 1], [], []>} : vector<128x128xbf16>, vector<128x256xbf16>, vector<128x256xf32> -> vector<128x256xf32>
    %c0_52 = arith.constant 0 : index
    %c0_53 = arith.constant 0 : index
    %98 = vector.load %arg12[%c0_52, %c0_53] : memref<1x256xf32, #tpu.memory_space<vmem>>, vector<1x256xf32>
    %99 = vector.broadcast %98 : vector<1x256xf32> to vector<128x256xf32>
    %100 = arith.addf %97, %99 : vector<128x256xf32>
    %cst_54 = arith.constant 0.000000e+00 : f32
    %101 = vector.broadcast %cst_54 : f32 to vector<128x256xf32>
    %102 = arith.maximumf %100, %101 : vector<128x256xf32>
    %103 = arith.truncf %102 : vector<128x256xf32> to vector<128x256xbf16>
    %c0_55 = arith.constant 0 : index
    %c0_56 = arith.constant 0 : index
    %104 = vector.load %arg13[%c0_55, %c0_56] : memref<256x128xbf16, #tpu.memory_space<vmem>>, vector<256x128xbf16>
    %cst_57 = arith.constant dense<0.000000e+00> : vector<128x128xf32>
    %105 = tpu.matmul %103, %104, %cst_57 {dimension_numbers = #tpu.dot_dimension_numbers<[1], [0], [0], [1], [0, 0, 1, 1], [], []>} : vector<128x256xbf16>, vector<256x128xbf16>, vector<128x128xf32> -> vector<128x128xf32>
    %c0_58 = arith.constant 0 : index
    %c0_59 = arith.constant 0 : index
    %106 = vector.load %arg14[%c0_58, %c0_59] : memref<1x128xf32, #tpu.memory_space<vmem>>, vector<1x128xf32>
    %107 = vector.broadcast %106 : vector<1x128xf32> to vector<128x128xf32>
    %108 = arith.addf %105, %107 : vector<128x128xf32>
    %109 = arith.addf %94, %108 : vector<128x128xf32>
    %cst_60 = arith.constant dense<0.000000e+00> : vector<128xf32>
    %110 = vector.multi_reduction <add>, %109, %cst_60 [1] : vector<128x128xf32> to vector<128xf32>
    %111 = vector.shape_cast %110 : vector<128xf32> to vector<128x1xf32>
    %cst_61 = arith.constant 1.280000e+02 : f32
    %112 = vector.broadcast %cst_61 : f32 to vector<128x1xf32>
    %113 = arith.divf %111, %112 : vector<128x1xf32>
    %114 = vector.broadcast %113 : vector<128x1xf32> to vector<128x128xf32>
    %115 = arith.subf %109, %114 : vector<128x128xf32>
    %116 = arith.mulf %115, %115 : vector<128x128xf32>
    %cst_62 = arith.constant dense<0.000000e+00> : vector<128xf32>
    %117 = vector.multi_reduction <add>, %116, %cst_62 [1] : vector<128x128xf32> to vector<128xf32>
    %118 = vector.shape_cast %117 : vector<128xf32> to vector<128x1xf32>
    %cst_63 = arith.constant 1.280000e+02 : f32
    %119 = vector.broadcast %cst_63 : f32 to vector<128x1xf32>
    %120 = arith.divf %118, %119 : vector<128x1xf32>
    %cst_64 = arith.constant 9.99999974E-6 : f32
    %121 = vector.broadcast %cst_64 : f32 to vector<128x1xf32>
    %122 = arith.addf %120, %121 : vector<128x1xf32>
    %123 = math.rsqrt %122 : vector<128x1xf32>
    %124 = vector.broadcast %123 : vector<128x1xf32> to vector<128x128xf32>
    %125 = arith.mulf %115, %124 : vector<128x128xf32>
    %c0_65 = arith.constant 0 : index
    %c0_66 = arith.constant 0 : index
    %126 = vector.load %arg15[%c0_65, %c0_66] : memref<1x128xf32, #tpu.memory_space<vmem>>, vector<1x128xf32>
    %127 = vector.broadcast %126 : vector<1x128xf32> to vector<128x128xf32>
    %128 = arith.mulf %125, %127 : vector<128x128xf32>
    %c0_67 = arith.constant 0 : index
    %c0_68 = arith.constant 0 : index
    %129 = vector.load %arg16[%c0_67, %c0_68] : memref<1x128xf32, #tpu.memory_space<vmem>>, vector<1x128xf32>
    %130 = vector.broadcast %129 : vector<1x128xf32> to vector<128x128xf32>
    %131 = arith.addf %128, %130 : vector<128x128xf32>
    %c0_69 = arith.constant 0 : index
    %c0_70 = arith.constant 0 : index
    %c0_71 = arith.constant 0 : index
    %132 = vector.load %arg17[%c0_69, %c0_70, %c0_71] : memref<1x128x128xf32, #tpu.memory_space<vmem>>, vector<1x128x128xf32>
    %133 = vector.shape_cast %132 : vector<1x128x128xf32> to vector<128x128xf32>
    %134 = vector.shape_cast %131 : vector<128x128xf32> to vector<1x128x128xf32>
    tpu.vector_store %arg17[%c0_69, %c0_70, %c0_71], %134 {strides = array<i32>} : memref<1x128x128xf32, #tpu.memory_space<vmem>>, vector<1x128x128xf32>,
    return
  }
  func.func @transform_0(%arg0: i32, %arg1: i32) -> (i32, i32, i32) {
    %c0_i32 = arith.constant 0 : i32
    %c0_i32_0 = arith.constant 0 : i32
    %c0_i32_1 = arith.constant 0 : i32
    return %arg0, %c0_i32, %c0_i32_0 : i32, i32, i32
  }
  func.func @transform_1(%arg0: i32, %arg1: i32) -> (i32, i32) {
    %c0_i32 = arith.constant 0 : i32
    %c0_i32_0 = arith.constant 0 : i32
    %c0_i32_1 = arith.constant 0 : i32
    return %c0_i32, %c0_i32_0 : i32, i32
  }
  func.func @transform_2(%arg0: i32, %arg1: i32) -> (i32, i32) {
    %c0_i32 = arith.constant 0 : i32
    %c0_i32_0 = arith.constant 0 : i32
    %c0_i32_1 = arith.constant 0 : i32
    return %c0_i32, %c0_i32_0 : i32, i32
  }
  func.func @transform_3(%arg0: i32, %arg1: i32) -> (i32, i32) {
    %c0_i32 = arith.constant 0 : i32
    %c0_i32_0 = arith.constant 0 : i32
    %c0_i32_1 = arith.constant 0 : i32
    return %c0_i32, %c0_i32_0 : i32, i32
  }
  func.func @transform_4(%arg0: i32, %arg1: i32) -> (i32, i32) {
    %c0_i32 = arith.constant 0 : i32
    %c0_i32_0 = arith.constant 0 : i32
    %c0_i32_1 = arith.constant 0 : i32
    return %c0_i32, %c0_i32_0 : i32, i32
  }
  func.func @transform_5(%arg0: i32, %arg1: i32) -> (i32, i32) {
    %c0_i32 = arith.constant 0 : i32
    %c0_i32_0 = arith.constant 0 : i32
    %c0_i32_1 = arith.constant 0 : i32
    return %c0_i32, %c0_i32_0 : i32, i32
  }
  func.func @transform_6(%arg0: i32, %arg1: i32) -> (i32, i32) {
    %c0_i32 = arith.constant 0 : i32
    %c0_i32_0 = arith.constant 0 : i32
    %c0_i32_1 = arith.constant 0 : i32
    return %c0_i32, %c0_i32_0 : i32, i32
  }
  func.func @transform_7(%arg0: i32, %arg1: i32) -> (i32, i32) {
    %c0_i32 = arith.constant 0 : i32
    %c0_i32_0 = arith.constant 0 : i32
    %c0_i32_1 = arith.constant 0 : i32
    return %c0_i32, %c0_i32_0 : i32, i32
  }
  func.func @transform_8(%arg0: i32, %arg1: i32) -> (i32, i32) {
    %c0_i32 = arith.constant 0 : i32
    %c0_i32_0 = arith.constant 0 : i32
    %c0_i32_1 = arith.constant 0 : i32
    return %c0_i32, %c0_i32_0 : i32, i32
  }
  func.func @transform_9(%arg0: i32, %arg1: i32) -> (i32, i32) {
    %c0_i32 = arith.constant 0 : i32
    %c0_i32_0 = arith.constant 0 : i32
    %c0_i32_1 = arith.constant 0 : i32
    return %c0_i32, %c0_i32_0 : i32, i32
  }
  func.func @transform_10(%arg0: i32, %arg1: i32) -> (i32, i32) {
    %c0_i32 = arith.constant 0 : i32
    %c0_i32_0 = arith.constant 0 : i32
    %c0_i32_1 = arith.constant 0 : i32
    return %c0_i32, %c0_i32_0 : i32, i32
  }
  func.func @transform_11(%arg0: i32, %arg1: i32) -> (i32, i32) {
    %c0_i32 = arith.constant 0 : i32
    %c0_i32_0 = arith.constant 0 : i32
    %c0_i32_1 = arith.constant 0 : i32
    return %c0_i32, %c0_i32_0 : i32, i32
  }
  func.func @transform_12(%arg0: i32, %arg1: i32) -> (i32, i32) {
    %c0_i32 = arith.constant 0 : i32
    %c0_i32_0 = arith.constant 0 : i32
    %c0_i32_1 = arith.constant 0 : i32
    return %c0_i32, %c0_i32_0 : i32, i32
  }
  func.func @transform_13(%arg0: i32, %arg1: i32) -> (i32, i32) {
    %c0_i32 = arith.constant 0 : i32
    %c0_i32_0 = arith.constant 0 : i32
    %c0_i32_1 = arith.constant 0 : i32
    return %c0_i32, %c0_i32_0 : i32, i32
  }
  func.func @transform_14(%arg0: i32, %arg1: i32) -> (i32, i32) {
    %c0_i32 = arith.constant 0 : i32
    %c0_i32_0 = arith.constant 0 : i32
    %c0_i32_1 = arith.constant 0 : i32
    return %c0_i32, %c0_i32_0 : i32, i32
  }
  func.func @transform_15(%arg0: i32, %arg1: i32) -> (i32, i32, i32) {
    %c0_i32 = arith.constant 0 : i32
    %c0_i32_0 = arith.constant 0 : i32
    return %arg0, %arg1, %c0_i32 : i32, i32, i32
  }
}

</mosaic_0001>

<llo_original>
// kernel: encoder_layer_pallas.1
$region0: #{encoder_layer_pallas.1}
  #allocation0 [shape = 'u32[]', space=smem, size = 0x4, offset = 0x4, fixed_abs, tag = 'smem constant byte address 0x4 - core index']
  #allocation1 [shape = 'u32[72,128]{1,0:T(1,128)}', space=vmem, size = 0x9000, scoped, tag = 'internal scratch']
  #allocation2 [shape = 'bf16[4,128,32]{2,1,0:T(8,128)(2,1)}', space=vmem, size = 0x20000, scoped, tag = 'scratch operand']
  #allocation3 [shape = 'bf16[4,128,32]{2,1,0:T(8,128)(2,1)}', space=vmem, size = 0x20000, scoped, tag = 'scratch operand']
  #allocation4 [shape = 'bf16[4,128,32]{2,1,0:T(8,128)(2,1)}', space=vmem, size = 0x20000, scoped, tag = 'scratch operand']
  #allocation5 [shape = 'bf16[128,128]{1,0:T(8,128)(2,1)}', space=vmem, size = 0x8000, scoped, tag = 'scratch operand']
  %s0 = inlined_call_operand.vmem [shape: f32[2,128,128], index: 0, kind: input, shape index: {}]
  %s1 = inlined_call_operand.vmem [shape: bf16[128,128], index: 1, kind: input, shape index: {}]
  %s2 = inlined_call_operand.vmem [shape: f32[1,128], index: 2, kind: input, shape index: {}]
  %s3 = inlined_call_operand.vmem [shape: bf16[128,256], index: 3, kind: input, shape index: {}]
  %s4 = inlined_call_operand.hbm [shape: f32[1,256], index: 4, kind: input, shape index: {}]
  %s5 = inlined_call_operand.vmem [shape: bf16[128,128], index: 5, kind: input, shape index: {}]
  %s6 = inlined_call_operand.vmem [shape: f32[1,128], index: 6, kind: input, shape index: {}]
  %s7 = inlined_call_operand.vmem [shape: f32[1,128], index: 7, kind: input, shape index: {}]
  %s8 = inlined_call_operand.hbm [shape: f32[1,128], index: 8, kind: input, shape index: {}]
  %s9 = inlined_call_operand.vmem [shape: bf16[128,256], index: 9, kind: input, shape index: {}]
  %s10 = inlined_call_operand.hbm [shape: f32[1,256], index: 10, kind: input, shape index: {}]
  %s11 = inlined_call_operand.vmem [shape: bf16[256,128], index: 11, kind: input, shape index: {}]
  %s12 = inlined_call_operand.hbm [shape: f32[1,128], index: 12, kind: input, shape index: {}]
  %s13 = inlined_call_operand.vmem [shape: f32[1,128], index: 13, kind: input, shape index: {}]
  %s14 = inlined_call_operand.hbm [shape: f32[1,128], index: 14, kind: input, shape index: {}]
  %s15 = inlined_call_operand.vmem [shape: f32[2,128,128], index: 15, kind: output, shape index: {}]
  %s16 = sld [smem:[#allocation0]]
  $region117: #{encoder_layer_pallas.1} parent=0
    _
  %s18 = ssub.s32 1, %s16
  %s19 = scalar_select 0, %s18, %s16
  $region1: #{encoder_layer_pallas.1} parent=0
    #allocation6 [shape = 'u8[1024]{0}', space=vmem, size = 0x400, scoped, tag = 'input window, operand 4, single buffered']
    #allocation7 [shape = 's32[2]{0}', space=sflag, size = 0x8, scoped, tag = 'scoped memory for encoder_layer_pallas.1']
    #allocation8 [shape = 'u8[512]{0}', space=vmem, size = 0x400, scoped, tag = 'input window, operand 8, single buffered']
    #allocation9 [shape = 's32[1]{0}', space=sflag, size = 0x4, scoped, tag = 'scoped memory for encoder_layer_pallas.1']
    #allocation10 [shape = 'u8[1024]{0}', space=vmem, size = 0x400, scoped, tag = 'input window, operand 10, single buffered']
    #allocation11 [shape = 'u8[512]{0}', space=vmem, size = 0x400, scoped, tag = 'input window, operand 12, single buffered']
    #allocation12 [shape = 's32[1]{0}', space=sflag, size = 0x4, scoped, tag = 'scoped memory for encoder_layer_pallas.1']
    #allocation13 [shape = 'u8[512]{0}', space=vmem, size = 0x400, scoped, tag = 'input window, operand 14, single buffered']
    %20 = vsyncpa [#allocation7], 0
    %21 = vsyncpa [#allocation9], 0
    %22 = vsyncpa [#allocation12], 0
    loop: start=0, step=1, limit=4
    $region2: #{encoder_layer_pallas.1} parent=1 // loop_pre_header
      _
    $region3: #{encoder_layer_pallas.1} parent=1 // loop_header
      %s24 = sphi 0, %s28
      %p25 = scmp.ge.s32.totalorder %s24, 4
      %s31 = sphi 0, %s43
      %s32 = sphi 0, %s39
      %s33 = sphi 0, %s31
      %s34 = sphi 0, %s32
      %s35 = sphi 0, %s33
      %s36 = sphi 0, %s34
      %s46 = sphi 0, %s48
      %s49 = sphi 0, %s46
      %s50 = sphi 0, %s49
      %s66 = sphi 0, %s50
      %s70 = sphi 0, %s70
      %s72 = sphi 0, %s70
      %s73 = sphi 0, %s72
      %s87 = sphi 0, %s73
      %s91 = sphi 0, %s91
      %s93 = sphi 0, %s91
      %s94 = sphi 0, %s93
      %s108 = sphi 0, %s94
      %s112 = sphi 0, %s112
      %s114 = sphi 0, %s112
      %s115 = sphi 0, %s114
      %s129 = sphi 0, %s115
      %s133 = sphi 0, %s133
      %s135 = sphi 0, %s133
      %s136 = sphi 0, %s135
      %s150 = sphi 0, %s136
      %s154 = sphi 0, %s154
      %s156 = sphi 0, %s154
      %s157 = sphi 0, %s156
      %s171 = sphi 0, %s157
      %s175 = sphi 0, %s175
      %s177 = sphi 0, %s175
      %s178 = sphi 0, %s177
      %s192 = sphi 0, %s178
      %s196 = sphi 0, %s196
      %s198 = sphi 0, %s196
      %s199 = sphi 0, %s198
      %s213 = sphi 0, %s199
      %s217 = sphi 0, %s217
      %s219 = sphi 0, %s217
      %s220 = sphi 0, %s219
      %s234 = sphi 0, %s220
      %s238 = sphi 0, %s238
      %s240 = sphi 0, %s238
      %s241 = sphi 0, %s240
      %s255 = sphi 0, %s241
      %s259 = sphi 0, %s259
      %s261 = sphi 0, %s259
      %s262 = sphi 0, %s261
      %s276 = sphi 0, %s262
      %s280 = sphi 0, %s280
      %s282 = sphi 0, %s280
      %s283 = sphi 0, %s282
      %s297 = sphi 0, %s283
      %s301 = sphi 0, %s301
      %s303 = sphi 0, %s301
      %s304 = sphi 0, %s303
      %s318 = sphi 0, %s304
      %s322 = sphi 0, %s322
      %s324 = sphi 0, %s322
      %s325 = sphi 0, %s324
      %s339 = sphi 0, %s325
      %s343 = sphi 0, %s343
      %s345 = sphi 0, %s343
      %s346 = sphi 0, %s345
      %s360 = sphi 0, %s346
      %s368 = sphi 0, %s370
      %s371 = sphi 0, %s368
      %s372 = sphi 0, %s371
      %s388 = sphi 0, %s372
    $region4: #{encoder_layer_pallas.1} parent=1 // loop_header_branch
      %27 = sbr.rel (%p25) target = $region8
    $region5: #{encoder_layer_pallas.1} parent=1 // loop_body
      %s29 = ssub.s32 %s24, 1
      %s30 = ssub.s32 %s24, 2
      %s37 = sadd.s32 1, %s32
      %p38 = scmp.ge.s32.totalorder %s37, 1
      %s39 = scalar_select %p38, 0, %s37
      %s40 = sadd.s32 1, %s31
      %s41 = scalar_select %p38, %s40, %s31
      %p42 = scmp.ge.s32.totalorder %s41, 2
      %s43 = scalar_select %p42, 0, %s41
      %s44 = ssub.s32 %s31, %s43
      %p45 = scmp.eq.s32.totalorder %s44, 0
      %s47 = sadd.s32 %s46, 1
      %s48 = scalar_select %p45, %s46, %s47
      %p51 = pneg %p45
      %p52 = scmp.eq.s32.totalorder %s24, 1
      %p53 = por %p51, %p52
      %p54 = scmp.ne.s32.totalorder %s46, %s49
      %p55 = scmp.eq.s32.totalorder %s24, 0
      %p56 = por %p54, %p55
      %p57 = scmp.ne.s32.totalorder %s46, %s49
      %p58 = scmp.eq.s32.totalorder %s29, 1
      %p59 = por %p57, %p58
      %p60 = scmp.ne.s32.totalorder %s49, %s50
      %p61 = scmp.eq.s32.totalorder %s29, 0
      %p62 = por %p60, %p61
      %p63 = scmp.ne.s32.totalorder %s49, %s50
      %p64 = scmp.eq.s32.totalorder %s30, 1
      %p65 = por %p63, %p64
      %p67 = scmp.ne.s32.totalorder %s50, %s66
      %p68 = scmp.eq.s32.totalorder %s30, 0
      %p69 = por %p67, %p68
      %s71 = sadd.s32 %s70, 1
      %p74 = scmp.eq.s32.totalorder %s24, 1
      %p75 = scmp.ne.s32.totalorder %s70, %s72
      %p76 = scmp.eq.s32.totalorder %s24, 0
      %p77 = por %p75, %p76
      %p78 = scmp.ne.s32.totalorder %s70, %s72
      %p79 = scmp.eq.s32.totalorder %s29, 1
      %p80 = por %p78, %p79
      %p81 = scmp.ne.s32.totalorder %s72, %s73
      %p82 = scmp.eq.s32.totalorder %s29, 0
      %p83 = por %p81, %p82
      %p84 = scmp.ne.s32.totalorder %s72, %s73
      %p85 = scmp.eq.s32.totalorder %s30, 1
      %p86 = por %p84, %p85
      %p88 = scmp.ne.s32.totalorder %s73, %s87
      %p89 = scmp.eq.s32.totalorder %s30, 0
      %p90 = por %p88, %p89
      %s92 = sadd.s32 %s91, 1
      %p95 = scmp.eq.s32.totalorder %s24, 1
      %p96 = scmp.ne.s32.totalorder %s91, %s93
      %p97 = scmp.eq.s32.totalorder %s24, 0
      %p98 = por %p96, %p97
      %p99 = scmp.ne.s32.totalorder %s91, %s93
      %p100 = scmp.eq.s32.totalorder %s29, 1
      %p101 = por %p99, %p100
      %p102 = scmp.ne.s32.totalorder %s93, %s94
      %p103 = scmp.eq.s32.totalorder %s29, 0
      %p104 = por %p102, %p103
      %p105 = scmp.ne.s32.totalorder %s93, %s94
      %p106 = scmp.eq.s32.totalorder %s30, 1
      %p107 = por %p105, %p106
      %p109 = scmp.ne.s32.totalorder %s94, %s108
      %p110 = scmp.eq.s32.totalorder %s30, 0
      %p111 = por %p109, %p110
      %s113 = sadd.s32 %s112, 1
      %p116 = scmp.eq.s32.totalorder %s24, 1
      %p117 = scmp.ne.s32.totalorder %s112, %s114
      %p118 = scmp.eq.s32.totalorder %s24, 0
      %p119 = por %p117, %p118
      %p120 = scmp.ne.s32.totalorder %s112, %s114
      %p121 = scmp.eq.s32.totalorder %s29, 1
      %p122 = por %p120, %p121
      %p123 = scmp.ne.s32.totalorder %s114, %s115
      %p124 = scmp.eq.s32.totalorder %s29, 0
      %p125 = por %p123, %p124
      %p126 = scmp.ne.s32.totalorder %s114, %s115
      %p127 = scmp.eq.s32.totalorder %s30, 1
      %p128 = por %p126, %p127
      %p130 = scmp.ne.s32.totalorder %s115, %s129
      %p131 = scmp.eq.s32.totalorder %s30, 0
      %p132 = por %p130, %p131
      %s134 = sadd.s32 %s133, 1
      %p137 = scmp.eq.s32.totalorder %s24, 1
      %p138 = scmp.ne.s32.totalorder %s133, %s135
      %p139 = scmp.eq.s32.totalorder %s24, 0
      %p140 = por %p138, %p139
      %p141 = scmp.ne.s32.totalorder %s133, %s135
      %p142 = scmp.eq.s32.totalorder %s29, 1
      %p143 = por %p141, %p142
      %p144 = scmp.ne.s32.totalorder %s135, %s136
      %p145 = scmp.eq.s32.totalorder %s29, 0
      %p146 = por %p144, %p145
      %p147 = scmp.ne.s32.totalorder %s135, %s136
      %p148 = scmp.eq.s32.totalorder %s30, 1
      %p149 = por %p147, %p148
      %p151 = scmp.ne.s32.totalorder %s136, %s150
      %p152 = scmp.eq.s32.totalorder %s30, 0
      %p153 = por %p151, %p152
      %s155 = sadd.s32 %s154, 1
      %p158 = scmp.eq.s32.totalorder %s24, 1
      %p159 = scmp.ne.s32.totalorder %s154, %s156
      %p160 = scmp.eq.s32.totalorder %s24, 0
      %p161 = por %p159, %p160
      %p162 = scmp.ne.s32.totalorder %s154, %s156
      %p163 = scmp.eq.s32.totalorder %s29, 1
      %p164 = por %p162, %p163
      %p165 = scmp.ne.s32.totalorder %s156, %s157
      %p166 = scmp.eq.s32.totalorder %s29, 0
      %p167 = por %p165, %p166
      %p168 = scmp.ne.s32.totalorder %s156, %s157
      %p169 = scmp.eq.s32.totalorder %s30, 1
      %p170 = por %p168, %p169
      %p172 = scmp.ne.s32.totalorder %s157, %s171
      %p173 = scmp.eq.s32.totalorder %s30, 0
      %p174 = por %p172, %p173
      %s176 = sadd.s32 %s175, 1
      %p179 = scmp.eq.s32.totalorder %s24, 1
      %p180 = scmp.ne.s32.totalorder %s175, %s177
      %p181 = scmp.eq.s32.totalorder %s24, 0
      %p182 = por %p180, %p181
      %p183 = scmp.ne.s32.totalorder %s175, %s177
      %p184 = scmp.eq.s32.totalorder %s29, 1
      %p185 = por %p183, %p184
      %p186 = scmp.ne.s32.totalorder %s177, %s178
      %p187 = scmp.eq.s32.totalorder %s29, 0
      %p188 = por %p186, %p187
      %p189 = scmp.ne.s32.totalorder %s177, %s178
      %p190 = scmp.eq.s32.totalorder %s30, 1
      %p191 = por %p189, %p190
      %p193 = scmp.ne.s32.totalorder %s178, %s192
      %p194 = scmp.eq.s32.totalorder %s30, 0
      %p195 = por %p193, %p194
      %s197 = sadd.s32 %s196, 1
      %p200 = scmp.eq.s32.totalorder %s24, 1
      %p201 = scmp.ne.s32.totalorder %s196, %s198
      %p202 = scmp.eq.s32.totalorder %s24, 0
      %p203 = por %p201, %p202
      %p204 = scmp.ne.s32.totalorder %s196, %s198
      %p205 = scmp.eq.s32.totalorder %s29, 1
      %p206 = por %p204, %p205
      %p207 = scmp.ne.s32.totalorder %s198, %s199
      %p208 = scmp.eq.s32.totalorder %s29, 0
      %p209 = por %p207, %p208
      %p210 = scmp.ne.s32.totalorder %s198, %s199
      %p211 = scmp.eq.s32.totalorder %s30, 1
      %p212 = por %p210, %p211
      %p214 = scmp.ne.s32.totalorder %s199, %s213
      %p215 = scmp.eq.s32.totalorder %s30, 0
      %p216 = por %p214, %p215
      %s218 = sadd.s32 %s217, 1
      %p221 = scmp.eq.s32.totalorder %s24, 1
      %p222 = scmp.ne.s32.totalorder %s217, %s219
      %p223 = scmp.eq.s32.totalorder %s24, 0
      %p224 = por %p222, %p223
      %p225 = scmp.ne.s32.totalorder %s217, %s219
      %p226 = scmp.eq.s32.totalorder %s29, 1
      %p227 = por %p225, %p226
      %p228 = scmp.ne.s32.totalorder %s219, %s220
      %p229 = scmp.eq.s32.totalorder %s29, 0
      %p230 = por %p228, %p229
      %p231 = scmp.ne.s32.totalorder %s219, %s220
      %p232 = scmp.eq.s32.totalorder %s30, 1
      %p233 = por %p231, %p232
      %p235 = scmp.ne.s32.totalorder %s220, %s234
      %p236 = scmp.eq.s32.totalorder %s30, 0
      %p237 = por %p235, %p236
      %s239 = sadd.s32 %s238, 1
      %p242 = scmp.eq.s32.totalorder %s24, 1
      %p243 = scmp.ne.s32.totalorder %s238, %s240
      %p244 = scmp.eq.s32.totalorder %s24, 0
      %p245 = por %p243, %p244
      %p246 = scmp.ne.s32.totalorder %s238, %s240
      %p247 = scmp.eq.s32.totalorder %s29, 1
      %p248 = por %p246, %p247
      %p249 = scmp.ne.s32.totalorder %s240, %s241
      %p250 = scmp.eq.s32.totalorder %s29, 0
      %p251 = por %p249, %p250
      %p252 = scmp.ne.s32.totalorder %s240, %s241
      %p253 = scmp.eq.s32.totalorder %s30, 1
      %p254 = por %p252, %p253
      %p256 = scmp.ne.s32.totalorder %s241, %s255
      %p257 = scmp.eq.s32.totalorder %s30, 0
      %p258 = por %p256, %p257
      %s260 = sadd.s32 %s259, 1
      %p263 = scmp.eq.s32.totalorder %s24, 1
      %p264 = scmp.ne.s32.totalorder %s259, %s261
      %p265 = scmp.eq.s32.totalorder %s24, 0
      %p266 = por %p264, %p265
      %p267 = scmp.ne.s32.totalorder %s259, %s261
      %p268 = scmp.eq.s32.totalorder %s29, 1
      %p269 = por %p267, %p268
      %p270 = scmp.ne.s32.totalorder %s261, %s262
      %p271 = scmp.eq.s32.totalorder %s29, 0
      %p272 = por %p270, %p271
      %p273 = scmp.ne.s32.totalorder %s261, %s262
      %p274 = scmp.eq.s32.totalorder %s30, 1
      %p275 = por %p273, %p274
      %p277 = scmp.ne.s32.totalorder %s262, %s276
      %p278 = scmp.eq.s32.totalorder %s30, 0
      %p279 = por %p277, %p278
      %s281 = sadd.s32 %s280, 1
      %p284 = scmp.eq.s32.totalorder %s24, 1
      %p285 = scmp.ne.s32.totalorder %s280, %s282
      %p286 = scmp.eq.s32.totalorder %s24, 0
      %p287 = por %p285, %p286
      %p288 = scmp.ne.s32.totalorder %s280, %s282
      %p289 = scmp.eq.s32.totalorder %s29, 1
      %p290 = por %p288, %p289
      %p291 = scmp.ne.s32.totalorder %s282, %s283
      %p292 = scmp.eq.s32.totalorder %s29, 0
      %p293 = por %p291, %p292
      %p294 = scmp.ne.s32.totalorder %s282, %s283
      %p295 = scmp.eq.s32.totalorder %s30, 1
      %p296 = por %p294, %p295
      %p298 = scmp.ne.s32.totalorder %s283, %s297
      %p299 = scmp.eq.s32.totalorder %s30, 0
      %p300 = por %p298, %p299
      %s302 = sadd.s32 %s301, 1
      %p305 = scmp.eq.s32.totalorder %s24, 1
      %p306 = scmp.ne.s32.totalorder %s301, %s303
      %p307 = scmp.eq.s32.totalorder %s24, 0
      %p308 = por %p306, %p307
      %p309 = scmp.ne.s32.totalorder %s301, %s303
      %p310 = scmp.eq.s32.totalorder %s29, 1
      %p311 = por %p309, %p310
      %p312 = scmp.ne.s32.totalorder %s303, %s304
      %p313 = scmp.eq.s32.totalorder %s29, 0
      %p314 = por %p312, %p313
      %p315 = scmp.ne.s32.totalorder %s303, %s304
      %p316 = scmp.eq.s32.totalorder %s30, 1
      %p317 = por %p315, %p316
      %p319 = scmp.ne.s32.totalorder %s304, %s318
      %p320 = scmp.eq.s32.totalorder %s30, 0
      %p321 = por %p319, %p320
      %s323 = sadd.s32 %s322, 1
      %p326 = scmp.eq.s32.totalorder %s24, 1
      %p327 = scmp.ne.s32.totalorder %s322, %s324
      %p328 = scmp.eq.s32.totalorder %s24, 0
      %p329 = por %p327, %p328
      %p330 = scmp.ne.s32.totalorder %s322, %s324
      %p331 = scmp.eq.s32.totalorder %s29, 1
      %p332 = por %p330, %p331
      %p333 = scmp.ne.s32.totalorder %s324, %s325
      %p334 = scmp.eq.s32.totalorder %s29, 0
      %p335 = por %p333, %p334
      %p336 = scmp.ne.s32.totalorder %s324, %s325
      %p337 = scmp.eq.s32.totalorder %s30, 1
      %p338 = por %p336, %p337
      %p340 = scmp.ne.s32.totalorder %s325, %s339
      %p341 = scmp.eq.s32.totalorder %s30, 0
      %p342 = por %p340, %p341
      %s344 = sadd.s32 %s343, 1
      %p347 = scmp.eq.s32.totalorder %s24, 1
      %p348 = scmp.ne.s32.totalorder %s343, %s345
      %p349 = scmp.eq.s32.totalorder %s24, 0
      %p350 = por %p348, %p349
      %p351 = scmp.ne.s32.totalorder %s343, %s345
      %p352 = scmp.eq.s32.totalorder %s29, 1
      %p353 = por %p351, %p352
      %p354 = scmp.ne.s32.totalorder %s345, %s346
      %p355 = scmp.eq.s32.totalorder %s29, 0
      %p356 = por %p354, %p355
      %p357 = scmp.ne.s32.totalorder %s345, %s346
      %p358 = scmp.eq.s32.totalorder %s30, 1
      %p359 = por %p357, %p358
      %p361 = scmp.ne.s32.totalorder %s346, %s360
      %p362 = scmp.eq.s32.totalorder %s30, 0
      %p363 = por %p361, %p362
      %s364 = ssub.s32 %s31, %s43
      %s365 = ssub.s32 %s32, %s39
      %s366 = sor.u32 %s364, %s365
      %p367 = scmp.eq.s32.totalorder %s366, 0
      %s369 = sadd.s32 %s368, 1
      %s370 = scalar_select %p367, %s368, %s369
      %p373 = pneg %p367
      %p374 = scmp.eq.s32.totalorder %s24, 1
      %p375 = por %p373, %p374
      %p376 = scmp.ne.s32.totalorder %s368, %s371
      %p377 = scmp.eq.s32.totalorder %s24, 0
      %p378 = por %p376, %p377
      %p379 = scmp.ne.s32.totalorder %s368, %s371
      %p380 = scmp.eq.s32.totalorder %s29, 1
      %p381 = por %p379, %p380
      %p382 = scmp.ne.s32.totalorder %s371, %s372
      %p383 = scmp.eq.s32.totalorder %s29, 0
      %p384 = por %p382, %p383
      %p385 = scmp.ne.s32.totalorder %s371, %s372
      %p386 = scmp.eq.s32.totalorder %s30, 1
      %p387 = por %p385, %p386
      %p389 = scmp.ne.s32.totalorder %s372, %s388
      %p390 = scmp.eq.s32.totalorder %s30, 0
      %p391 = por %p389, %p390
      %p392 = scmp.le.s32.totalorder 1, %s24
      %p393 = scmp.lt.s32.totalorder %s24, 3
      %p394 = pnand %p392, %p393
      %p395 = pneg %p394
      // Predicated region
      $region9: #{encoder_layer_pallas.1} parent=5 // pred_check
        _
      $region10: #{encoder_layer_pallas.1} parent=5 // pred_check_branch
        %397 = sbr.rel (%p394) target = $region12
      $region11: #{encoder_layer_pallas.1} parent=5 // pred_region
        %s398 = ssub.s32 %s24, 1
        // Predicated region
        $region13: #{encoder_layer_pallas.1} parent=11 // pred_check
          %p399 = pneg %p83
        $region14: #{encoder_layer_pallas.1} parent=11 // pred_check_branch
          %401 = sbr.rel (%p399) target = $region16
        $region15: #{encoder_layer_pallas.1} parent=11 // pred_region
          _
        $region16: #{encoder_layer_pallas.1} parent=11 // pred_fallthru
          _
        // Predicated region
        $region17: #{encoder_layer_pallas.1} parent=11 // pred_check
          %p402 = pneg %p104
        $region18: #{encoder_layer_pallas.1} parent=11 // pred_check_branch
          %404 = sbr.rel (%p402) target = $region20
        $region19: #{encoder_layer_pallas.1} parent=11 // pred_region
          _
        $region20: #{encoder_layer_pallas.1} parent=11 // pred_fallthru
          _
        // Predicated region
        $region21: #{encoder_layer_pallas.1} parent=11 // pred_check
          %p405 = pneg %p125
        $region22: #{encoder_layer_pallas.1} parent=11 // pred_check_branch
          %407 = sbr.rel (%p405) target = $region24
        $region23: #{encoder_layer_pallas.1} parent=11 // pred_region
          _
        $region24: #{encoder_layer_pallas.1} parent=11 // pred_fallthru
          _
        // Predicated region
        $region25: #{encoder_layer_pallas.1} parent=11 // pred_check
          %p408 = pneg %p146
        $region26: #{encoder_layer_pallas.1} parent=11 // pred_check_branch
          %410 = sbr.rel (%p408) target = $region28
        $region27: #{encoder_layer_pallas.1} parent=11 // pred_region
          %412 = vsyncadd [#allocation7], 0
          %s414 = sshll.u32 %s4, 4
          %s415 = int_to_ptr.hbm [resolvable:$true] %s414
          %s416 = sshll.u32 [#allocation6], 4
          %s417 = int_to_ptr.vmem [resolvable:$true] %s416
          %419 = dma.hbm_to_vmem [thread:$0]  %s415, 32, %s417, [#allocation7]
        $region28: #{encoder_layer_pallas.1} parent=11 // pred_fallthru
          _
        // Predicated region
        $region29: #{encoder_layer_pallas.1} parent=11 // pred_check
          %p420 = pneg %p167
        $region30: #{encoder_layer_pallas.1} parent=11 // pred_check_branch
          %422 = sbr.rel (%p420) target = $region32
        $region31: #{encoder_layer_pallas.1} parent=11 // pred_region
          _
        $region32: #{encoder_layer_pallas.1} parent=11 // pred_fallthru
          _
        // Predicated region
        $region33: #{encoder_layer_pallas.1} parent=11 // pred_check
          %p423 = pneg %p188
        $region34: #{encoder_layer_pallas.1} parent=11 // pred_check_branch
          %425 = sbr.rel (%p423) target = $region36
        $region35: #{encoder_layer_pallas.1} parent=11 // pred_region
          _
        $region36: #{encoder_layer_pallas.1} parent=11 // pred_fallthru
          _
        // Predicated region
        $region37: #{encoder_layer_pallas.1} parent=11 // pred_check
          %p426 = pneg %p209
        $region38: #{encoder_layer_pallas.1} parent=11 // pred_check_branch
          %428 = sbr.rel (%p426) target = $region40
        $region39: #{encoder_layer_pallas.1} parent=11 // pred_region
          _
        $region40: #{encoder_layer_pallas.1} parent=11 // pred_fallthru
          _
        // Predicated region
        $region41: #{encoder_layer_pallas.1} parent=11 // pred_check
          %p429 = pneg %p230
        $region42: #{encoder_layer_pallas.1} parent=11 // pred_check_branch
          %431 = sbr.rel (%p429) target = $region44
        $region43: #{encoder_layer_pallas.1} parent=11 // pred_region
          %433 = vsyncadd [#allocation9], 0
          %s435 = sshll.u32 %s8, 4
          %s436 = int_to_ptr.hbm [resolvable:$true] %s435
          %s437 = sshll.u32 [#allocation8], 4
          %s438 = int_to_ptr.vmem [resolvable:$true] %s437
          %440 = dma.hbm_to_vmem [thread:$0]  %s436, 16, %s438, [#allocation9]
        $region44: #{encoder_layer_pallas.1} parent=11 // pred_fallthru
          _
        // Predicated region
        $region45: #{encoder_layer_pallas.1} parent=11 // pred_check
          %p441 = pneg %p251
        $region46: #{encoder_layer_pallas.1} parent=11 // pred_check_branch
          %443 = sbr.rel (%p441) target = $region48
        $region47: #{encoder_layer_pallas.1} parent=11 // pred_region
          _
        $region48: #{encoder_layer_pallas.1} parent=11 // pred_fallthru
          _
        // Predicated region
        $region49: #{encoder_layer_pallas.1} parent=11 // pred_check
          %p444 = pneg %p272
        $region50: #{encoder_layer_pallas.1} parent=11 // pred_check_branch
          %446 = sbr.rel (%p444) target = $region52
        $region51: #{encoder_layer_pallas.1} parent=11 // pred_region
          %448 = vsyncadd [#allocation9], 0
          %s450 = sshll.u32 %s10, 4
          %s451 = int_to_ptr.hbm [resolvable:$true] %s450
          %s452 = sshll.u32 [#allocation10], 4
          %s453 = int_to_ptr.vmem [resolvable:$true] %s452
          %455 = dma.hbm_to_vmem [thread:$0]  %s451, 32, %s453, [#allocation9]
        $region52: #{encoder_layer_pallas.1} parent=11 // pred_fallthru
          _
        // Predicated region
        $region53: #{encoder_layer_pallas.1} parent=11 // pred_check
          %p456 = pneg %p293
        $region54: #{encoder_layer_pallas.1} parent=11 // pred_check_branch
          %458 = sbr.rel (%p456) target = $region56
        $region55: #{encoder_layer_pallas.1} parent=11 // pred_region
          _
        $region56: #{encoder_layer_pallas.1} parent=11 // pred_fallthru
          _
        // Predicated region
        $region57: #{encoder_layer_pallas.1} parent=11 // pred_check
          %p459 = pneg %p314
        $region58: #{encoder_layer_pallas.1} parent=11 // pred_check_branch
          %461 = sbr.rel (%p459) target = $region60
        $region59: #{encoder_layer_pallas.1} parent=11 // pred_region
          %463 = vsyncadd [#allocation12], 0
          %s465 = sshll.u32 %s12, 4
          %s466 = int_to_ptr.hbm [resolvable:$true] %s465
          %s467 = sshll.u32 [#allocation11], 4
          %s468 = int_to_ptr.vmem [resolvable:$true] %s467
          %470 = dma.hbm_to_vmem [thread:$0]  %s466, 16, %s468, [#allocation12]
        $region60: #{encoder_layer_pallas.1} parent=11 // pred_fallthru
          _
        // Predicated region
        $region61: #{encoder_layer_pallas.1} parent=11 // pred_check
          %p471 = pneg %p335
        $region62: #{encoder_layer_pallas.1} parent=11 // pred_check_branch
          %473 = sbr.rel (%p471) target = $region64
        $region63: #{encoder_layer_pallas.1} parent=11 // pred_region
          _
        $region64: #{encoder_layer_pallas.1} parent=11 // pred_fallthru
          _
        // Predicated region
        $region65: #{encoder_layer_pallas.1} parent=11 // pred_check
          %p474 = pneg %p356
        $region66: #{encoder_layer_pallas.1} parent=11 // pred_check_branch
          %476 = sbr.rel (%p474) target = $region68
        $region67: #{encoder_layer_pallas.1} parent=11 // pred_region
          %478 = vsyncadd [#allocation12], 0
          %s480 = sshll.u32 %s14, 4
          %s481 = int_to_ptr.hbm [resolvable:$true] %s480
          %s482 = sshll.u32 [#allocation13], 4
          %s483 = int_to_ptr.vmem [resolvable:$true] %s482
          %485 = dma.hbm_to_vmem [thread:$0]  %s481, 16, %s483, [#allocation12]
        $region68: #{encoder_layer_pallas.1} parent=11 // pred_fallthru
          _
      $region12: #{encoder_layer_pallas.1} parent=5 // pred_fallthru
        _
      %p486 = scmp.lt.s32.totalorder %s24, 2
      // Predicated region
      $region69: #{encoder_layer_pallas.1} parent=5 // pred_check
        %p487 = pneg %p486
      $region70: #{encoder_layer_pallas.1} parent=5 // pred_check_branch
        %489 = sbr.rel (%p487) target = $region72
      $region71: #{encoder_layer_pallas.1} parent=5 // pred_region
        // Predicated region
        $region73: #{encoder_layer_pallas.1} parent=71 // pred_check
          %p490 = pneg %p56
        $region74: #{encoder_layer_pallas.1} parent=71 // pred_check_branch
          %492 = sbr.rel (%p490) target = $region76
        $region75: #{encoder_layer_pallas.1} parent=71 // pred_region
          %p493 = scmp.lt.s32.totalorder %s31, 1
          %s494 = scalar_select %p493, %s31, 1
          %s495 = smul.addr %s494, 16
          %s496 = smul.addr %s495, 8
          %s497 = scalar_lea.vmem %s0, %s496
        $region76: #{encoder_layer_pallas.1} parent=71 // pred_fallthru
          _
      $region72: #{encoder_layer_pallas.1} parent=5 // pred_fallthru
        _
      %p498 = scmp.le.s32.totalorder 1, %s24
      %p499 = scmp.lt.s32.totalorder %s24, 3
      %p500 = pnand %p498, %p499
      %p501 = pneg %p500
      // Predicated region
      $region77: #{encoder_layer_pallas.1} parent=5 // pred_check
        _
      $region78: #{encoder_layer_pallas.1} parent=5 // pred_check_branch
        %503 = sbr.rel (%p500) target = $region80
      $region79: #{encoder_layer_pallas.1} parent=5 // pred_region
        %s504 = ssub.s32 %s24, 1
        // Predicated region
        $region81: #{encoder_layer_pallas.1} parent=79 // pred_check
          %p505 = pneg %p146
        $region82: #{encoder_layer_pallas.1} parent=79 // pred_check_branch
          %507 = sbr.rel (%p505) target = $region84
        $region83: #{encoder_layer_pallas.1} parent=79 // pred_region
          %509 = dma.done [#allocation7], 32
        $region84: #{encoder_layer_pallas.1} parent=79 // pred_fallthru
          _
        // Predicated region
        $region85: #{encoder_layer_pallas.1} parent=79 // pred_check
          %p510 = pneg %p230
        $region86: #{encoder_layer_pallas.1} parent=79 // pred_check_branch
          %512 = sbr.rel (%p510) target = $region88
        $region87: #{encoder_layer_pallas.1} parent=79 // pred_region
          %514 = dma.done [#allocation9], 16
        $region88: #{encoder_layer_pallas.1} parent=79 // pred_fallthru
          _
        // Predicated region
        $region89: #{encoder_layer_pallas.1} parent=79 // pred_check
          %p515 = pneg %p272
        $region90: #{encoder_layer_pallas.1} parent=79 // pred_check_branch
          %517 = sbr.rel (%p515) target = $region92
        $region91: #{encoder_layer_pallas.1} parent=79 // pred_region
          %519 = dma.done [#allocation9], 32
        $region92: #{encoder_layer_pallas.1} parent=79 // pred_fallthru
          _
        // Predicated region
        $region93: #{encoder_layer_pallas.1} parent=79 // pred_check
          %p520 = pneg %p314
        $region94: #{encoder_layer_pallas.1} parent=79 // pred_check_branch
          %522 = sbr.rel (%p520) target = $region96
        $region95: #{encoder_layer_pallas.1} parent=79 // pred_region
          %524 = dma.done [#allocation12], 16
        $region96: #{encoder_layer_pallas.1} parent=79 // pred_fallthru
          _
        // Predicated region
        $region97: #{encoder_layer_pallas.1} parent=79 // pred_check
          %p525 = pneg %p356
        $region98: #{encoder_layer_pallas.1} parent=79 // pred_check_branch
          %527 = sbr.rel (%p525) target = $region100
        $region99: #{encoder_layer_pallas.1} parent=79 // pred_region
          %529 = dma.done [#allocation12], 16
        $region100: #{encoder_layer_pallas.1} parent=79 // pred_fallthru
          _
        %p530 = scmp.lt.s32.totalorder %s33, 1
        %s531 = scalar_select %p530, %s33, 1
        %s532 = smul.addr %s531, 16
        %s533 = smul.addr %s532, 8
        %s534 = scalar_lea.vmem %s0, %s533
        %p535 = pneg %p62
        %p536 = pneg %p59
        %p537 = pneg %p83
        %p538 = pneg %p80
        %p539 = pneg %p104
        %p540 = pneg %p101
        %p541 = pneg %p125
        %p542 = pneg %p122
        %p543 = pneg %p146
        %p544 = pneg %p143
        %p545 = pneg %p167
        %p546 = pneg %p164
        %p547 = pneg %p188
        %p548 = pneg %p185
        %p549 = pneg %p209
        %p550 = pneg %p206
        %p551 = pneg %p230
        %p552 = pneg %p227
        %p553 = pneg %p251
        %p554 = pneg %p248
        %p555 = pneg %p272
        %p556 = pneg %p269
        %p557 = pneg %p293
        %p558 = pneg %p290
        %p559 = pneg %p314
        %p560 = pneg %p311
        %p561 = pneg %p335
        %p562 = pneg %p332
        %p563 = pneg %p356
        %p564 = pneg %p353
        %p565 = pneg %p384
        %p566 = pneg %p381
        %s567 = smul.u32 16, %s34
        %p568 = scmp.lt.s32.totalorder %s33, 1
        %s569 = scalar_select %p568, %s33, 1
        %p570 = scmp.lt.s32.totalorder %s567, 15
        %s571 = scalar_select %p570, %s567, 15
        %s572 = smul.addr %s569, 16
        %s573 = sadd.s32 %s571, %s572
        %s574 = smul.addr %s573, 8
        %s575 = scalar_lea.vmem %s15, %s574
        %p576 = scmp.lt.s32.totalorder %s33, 1
        %s577 = scalar_select %p576, %s33, 1
        %s578 = smul.addr %s577, 16
        %s579 = smul.addr %s578, 8
        %s580 = scalar_lea.vmem %s0, %s579
        %s581 = smul.u32 16, %s34
        %p582 = scmp.lt.s32.totalorder %s33, 1
        %s583 = scalar_select %p582, %s33, 1
        %p584 = scmp.lt.s32.totalorder %s581, 15
        %s585 = scalar_select %p584, %s581, 15
        %s586 = smul.addr %s583, 16
        %s587 = sadd.s32 %s585, %s586
        %s588 = smul.addr %s587, 8
        %s589 = scalar_lea.vmem %s15, %s588
        %s590 = smul.u32 16, %s34
        %p591 = scmp.eq.s32.totalorder %s34, 0
        // Predicated region
        $region101: #{encoder_layer_pallas.1} parent=79 // pred_check
          %p592 = pneg %p591
        $region102: #{encoder_layer_pallas.1} parent=79 // pred_check_branch
          %594 = sbr.rel (%p592) target = $region104
        $region103: #{encoder_layer_pallas.1} parent=79 // pred_region
          %v595 = vld [vmem:[%s580] sm:$0xff]
          %v596 = vld [vmem:[%s580 + $0x8] sm:$0xff]
          %v597 = vld [vmem:[%s580 + $0x10] sm:$0xff]
          %v598 = vld [vmem:[%s580 + $0x18] sm:$0xff]
          %v599 = vld [vmem:[%s580 + $0x20] sm:$0xff]
          %v600 = vld [vmem:[%s580 + $0x28] sm:$0xff]
          %v601 = vld [vmem:[%s580 + $0x30] sm:$0xff]
          %v602 = vld [vmem:[%s580 + $0x38] sm:$0xff]
          %v603 = vld [vmem:[%s580 + $0x40] sm:$0xff]
          %v604 = vld [vmem:[%s580 + $0x48] sm:$0xff]
          %v605 = vld [vmem:[%s580 + $0x50] sm:$0xff]
          %v606 = vld [vmem:[%s580 + $0x58] sm:$0xff]
          %v607 = vld [vmem:[%s580 + $0x60] sm:$0xff]
          %v608 = vld [vmem:[%s580 + $0x68] sm:$0xff]
          %v609 = vld [vmem:[%s580 + $0x70] sm:$0xff]
          %v610 = vld [vmem:[%s580 + $0x78] sm:$0xff]
          %v611 = vpack.c.bf16 %v596, %v595
          %v612 = vpack.c.bf16 %v598, %v597
          %v613 = vpack.c.bf16 %v600, %v599
          %v614 = vpack.c.bf16 %v602, %v601
          %v615 = vpack.c.bf16 %v604, %v603
          %v616 = vpack.c.bf16 %v606, %v605
          %v617 = vpack.c.bf16 %v608, %v607
          %v618 = vpack.c.bf16 %v610, %v609
          %v619 = vld [vmem:[%s3] sm:$0xff]
          %v620 = vld [vmem:[%s3 + $0x8] sm:$0xff]
          %v621 = vld [vmem:[%s3 + $0x10] sm:$0xff]
          %v622 = vld [vmem:[%s3 + $0x18] sm:$0xff]
          %v623 = vld [vmem:[%s3 + $0x20] sm:$0xff]
          %v624 = vld [vmem:[%s3 + $0x28] sm:$0xff]
          %v625 = vld [vmem:[%s3 + $0x30] sm:$0xff]
          %v626 = vld [vmem:[%s3 + $0x38] sm:$0xff]
          %v627 = vld [vmem:[%s3 + $0x40] sm:$0xff]
          %v628 = vld [vmem:[%s3 + $0x48] sm:$0xff]
          %v629 = vld [vmem:[%s3 + $0x50] sm:$0xff]
          %v630 = vld [vmem:[%s3 + $0x58] sm:$0xff]
          %v631 = vld [vmem:[%s3 + $0x60] sm:$0xff]
          %v632 = vld [vmem:[%s3 + $0x68] sm:$0xff]
          %v633 = vld [vmem:[%s3 + $0x70] sm:$0xff]
          %v634 = vld [vmem:[%s3 + $0x78] sm:$0xff]
          %v635 = vld [vmem:[#allocation6] sm:$0x3]
          %v637 = vperm.slane %v635, 0
          %v638 = vperm.slane %v635, 1
          %v657 = vunpack.c.l.b16 %v619
          %v658 = vunpack.c.h.b16 %v619
          %v659 = vunpack.c.l.b16 %v620
          %v660 = vunpack.c.h.b16 %v620
          %v661 = vunpack.c.l.b16 %v621
          %v662 = vunpack.c.h.b16 %v621
          %v663 = vunpack.c.l.b16 %v622
          %v664 = vunpack.c.h.b16 %v622
          %v665 = vunpack.c.l.b16 %v623
          %v666 = vunpack.c.h.b16 %v623
          %v667 = vunpack.c.l.b16 %v624
          %v668 = vunpack.c.h.b16 %v624
          %v669 = vunpack.c.l.b16 %v625
          %v670 = vunpack.c.h.b16 %v625
          %v671 = vunpack.c.l.b16 %v626
          %v672 = vunpack.c.h.b16 %v626
          %v673 = vunpack.c.l.b16 %v627
          %v674 = vunpack.c.h.b16 %v627
          %v675 = vunpack.c.l.b16 %v628
          %v676 = vunpack.c.h.b16 %v628
          %v677 = vunpack.c.l.b16 %v629
          %v678 = vunpack.c.h.b16 %v629
          %v679 = vunpack.c.l.b16 %v630
          %v680 = vunpack.c.h.b16 %v630
          %v681 = vunpack.c.l.b16 %v631
          %v682 = vunpack.c.h.b16 %v631
          %v683 = vunpack.c.l.b16 %v632
          %v684 = vunpack.c.h.b16 %v632
          %v685 = vunpack.c.l.b16 %v633
          %v686 = vunpack.c.h.b16 %v633
          %v687 = vunpack.c.l.b16 %v634
          %v688 = vunpack.c.h.b16 %v634
          %v689 = vpack.c.b16 %v659, %v657
          %v690 = vpack.c.b16 %v660, %v658
          %v691 = vpack.c.b16 %v663, %v661
          %v692 = vpack.c.b16 %v664, %v662
          %v693 = vpack.c.b16 %v667, %v665
          %v694 = vpack.c.b16 %v668, %v666
          %v695 = vpack.c.b16 %v671, %v669
          %v696 = vpack.c.b16 %v672, %v670
          %v697 = vpack.c.b16 %v675, %v673
          %v698 = vpack.c.b16 %v676, %v674
          %v699 = vpack.c.b16 %v679, %v677
          %v700 = vpack.c.b16 %v680, %v678
          %v701 = vpack.c.b16 %v683, %v681
          %v702 = vpack.c.b16 %v684, %v682
          %v703 = vpack.c.b16 %v687, %v685
          %v704 = vpack.c.b16 %v688, %v686
          %721 = vmatpush.bf16.msra.mxu0 %v703
          %722 = vmatpush.bf16.msra.mxu0 %v701
          %723 = vmatpush.bf16.msra.mxu0 %v699
          %724 = vmatpush.bf16.msra.mxu0 %v697
          %725 = vmatpush.bf16.msra.mxu0 %v695
          %726 = vmatpush.bf16.msra.mxu0 %v693
          %727 = vmatpush.bf16.msra.mxu0 %v691
          %728 = vmatpush.bf16.msra.mxu0 %v689
          %729 = vmatmul.bf16.gmra.mxu0 %v611
          %v730 = vpop.f32.mrf.mxu0
          %v731 = vadd.f32 %v637, %v730
          %v732 = vpop.f32.mrf.mxu0
          %v733 = vadd.f32 %v637, %v732
          %734 = vmatmul.bf16.gmra.mxu0 %v612
          %v735 = vpop.f32.mrf.mxu0
          %v736 = vadd.f32 %v637, %v735
          %v737 = vpop.f32.mrf.mxu0
          %v738 = vadd.f32 %v637, %v737
          %739 = vmatmul.bf16.gmra.mxu0 %v613
          %v740 = vpop.f32.mrf.mxu0
          %v741 = vadd.f32 %v637, %v740
          %v742 = vpop.f32.mrf.mxu0
          %v743 = vadd.f32 %v637, %v742
          %744 = vmatmul.bf16.gmra.mxu0 %v614
          %v745 = vpop.f32.mrf.mxu0
          %v746 = vadd.f32 %v637, %v745
          %v747 = vpop.f32.mrf.mxu0
          %v748 = vadd.f32 %v637, %v747
          %749 = vmatmul.bf16.gmra.mxu0 %v615
          %v750 = vpop.f32.mrf.mxu0
          %v751 = vadd.f32 %v637, %v750
          %v752 = vpop.f32.mrf.mxu0
          %v753 = vadd.f32 %v637, %v752
          %754 = vmatmul.bf16.gmra.mxu0 %v616
          %v755 = vpop.f32.mrf.mxu0
          %v756 = vadd.f32 %v637, %v755
          %v757 = vpop.f32.mrf.mxu0
          %v758 = vadd.f32 %v637, %v757
          %759 = vmatmul.bf16.gmra.mxu0 %v617
          %v760 = vpop.f32.mrf.mxu0
          %v761 = vadd.f32 %v637, %v760
          %v762 = vpop.f32.mrf.mxu0
          %v763 = vadd.f32 %v637, %v762
          %764 = vmatmul.bf16.gmra.mxu0 %v618
          %v765 = vpop.f32.mrf.mxu0
          %v766 = vadd.f32 %v637, %v765
          %v767 = vpop.f32.mrf.mxu0
          %v768 = vadd.f32 %v637, %v767
          %769 = vdwg.mxu0
          %770 = vmatpush.bf16.msra.mxu0 %v704
          %771 = vmatpush.bf16.msra.mxu0 %v702
          %772 = vmatpush.bf16.msra.mxu0 %v700
          %773 = vmatpush.bf16.msra.mxu0 %v698
          %774 = vmatpush.bf16.msra.mxu0 %v696
          %775 = vmatpush.bf16.msra.mxu0 %v694
          %776 = vmatpush.bf16.msra.mxu0 %v692
          %777 = vmatpush.bf16.msra.mxu0 %v690
          %778 = vmatmul.bf16.gmra.mxu0 %v611
          %v779 = vpop.f32.mrf.mxu0
          %v780 = vadd.f32 %v638, %v779
          %v781 = vpop.f32.mrf.mxu0
          %v782 = vadd.f32 %v638, %v781
          %783 = vmatmul.bf16.gmra.mxu0 %v612
          %v784 = vpop.f32.mrf.mxu0
          %v785 = vadd.f32 %v638, %v784
          %v786 = vpop.f32.mrf.mxu0
          %v787 = vadd.f32 %v638, %v786
          %788 = vmatmul.bf16.gmra.mxu0 %v613
          %v789 = vpop.f32.mrf.mxu0
          %v790 = vadd.f32 %v638, %v789
          %v791 = vpop.f32.mrf.mxu0
          %v792 = vadd.f32 %v638, %v791
          %793 = vmatmul.bf16.gmra.mxu0 %v614
          %v794 = vpop.f32.mrf.mxu0
          %v795 = vadd.f32 %v638, %v794
          %v796 = vpop.f32.mrf.mxu0
          %v797 = vadd.f32 %v638, %v796
          %798 = vmatmul.bf16.gmra.mxu0 %v615
          %v799 = vpop.f32.mrf.mxu0
          %v800 = vadd.f32 %v638, %v799
          %v801 = vpop.f32.mrf.mxu0
          %v802 = vadd.f32 %v638, %v801
          %803 = vmatmul.bf16.gmra.mxu0 %v616
          %v804 = vpop.f32.mrf.mxu0
          %v805 = vadd.f32 %v638, %v804
          %v806 = vpop.f32.mrf.mxu0
          %v807 = vadd.f32 %v638, %v806
          %808 = vmatmul.bf16.gmra.mxu0 %v617
          %v809 = vpop.f32.mrf.mxu0
          %v810 = vadd.f32 %v638, %v809
          %v811 = vpop.f32.mrf.mxu0
          %v812 = vadd.f32 %v638, %v811
          %813 = vmatmul.bf16.gmra.mxu0 %v618
          %v814 = vpop.f32.mrf.mxu0
          %v815 = vadd.f32 %v638, %v814
          %v816 = vpop.f32.mrf.mxu0
          %v817 = vadd.f32 %v638, %v816
          %818 = vdwg.mxu0
          %v819 = vpack.c.bf16 %v731, %v731
          %v820 = vpack.c.bf16 %v733, %v733
          %v821 = vpack.c.bf16 %v736, %v736
          %v822 = vpack.c.bf16 %v738, %v738
          %v823 = vpack.c.bf16 %v741, %v741
          %v824 = vpack.c.bf16 %v743, %v743
          %v825 = vpack.c.bf16 %v746, %v746
          %v826 = vpack.c.bf16 %v748, %v748
          %v827 = vpack.c.bf16 %v751, %v751
          %v828 = vpack.c.bf16 %v753, %v753
          %v829 = vpack.c.bf16 %v756, %v756
          %v830 = vpack.c.bf16 %v758, %v758
          %v831 = vpack.c.bf16 %v761, %v761
          %v832 = vpack.c.bf16 %v763, %v763
          %v833 = vpack.c.bf16 %v766, %v766
          %v834 = vpack.c.bf16 %v768, %v768
          %vm835 = vcmask 257024
          %836 = vst.msk [vmem:[#allocation2] sm:$0xf] %vm835, %v819
          %837 = vst.msk [vmem:[#allocation2 + $0x4] sm:$0xf] %vm835, %v820
          %838 = vst.msk [vmem:[#allocation2 + $0x8] sm:$0xf] %vm835, %v821
          %839 = vst.msk [vmem:[#allocation2 + $0xc] sm:$0xf] %vm835, %v822
          %840 = vst.msk [vmem:[#allocation2 + $0x10] sm:$0xf] %vm835, %v823
          %841 = vst.msk [vmem:[#allocation2 + $0x14] sm:$0xf] %vm835, %v824
          %842 = vst.msk [vmem:[#allocation2 + $0x18] sm:$0xf] %vm835, %v825
          %843 = vst.msk [vmem:[#allocation2 + $0x1c] sm:$0xf] %vm835, %v826
          %844 = vst.msk [vmem:[#allocation2 + $0x20] sm:$0xf] %vm835, %v827
          %845 = vst.msk [vmem:[#allocation2 + $0x24] sm:$0xf] %vm835, %v828
          %846 = vst.msk [vmem:[#allocation2 + $0x28] sm:$0xf] %vm835, %v829
          %847 = vst.msk [vmem:[#allocation2 + $0x2c] sm:$0xf] %vm835, %v830
          %848 = vst.msk [vmem:[#allocation2 + $0x30] sm:$0xf] %vm835, %v831
          %849 = vst.msk [vmem:[#allocation2 + $0x34] sm:$0xf] %vm835, %v832
          %850 = vst.msk [vmem:[#allocation2 + $0x38] sm:$0xf] %vm835, %v833
          %851 = vst.msk [vmem:[#allocation2 + $0x3c] sm:$0xf] %vm835, %v834
          %v852 = vpack.c.bf16 %v780, %v780
          %v853 = vpack.c.bf16 %v782, %v782
          %v854 = vpack.c.bf16 %v785, %v785
          %v855 = vpack.c.bf16 %v787, %v787
          %v856 = vpack.c.bf16 %v790, %v790
          %v857 = vpack.c.bf16 %v792, %v792
          %v858 = vpack.c.bf16 %v795, %v795
          %v859 = vpack.c.bf16 %v797, %v797
          %v860 = vpack.c.bf16 %v800, %v800
          %v861 = vpack.c.bf16 %v802, %v802
          %v862 = vpack.c.bf16 %v805, %v805
          %v863 = vpack.c.bf16 %v807, %v807
          %v864 = vpack.c.bf16 %v810, %v810
          %v865 = vpack.c.bf16 %v812, %v812
          %v866 = vpack.c.bf16 %v815, %v815
          %v867 = vpack.c.bf16 %v817, %v817
          %868 = vst.msk [vmem:[#allocation3] sm:$0xf] %vm835, %v852
          %869 = vst.msk [vmem:[#allocation3 + $0x4] sm:$0xf] %vm835, %v853
          %870 = vst.msk [vmem:[#allocation3 + $0x8] sm:$0xf] %vm835, %v854
          %871 = vst.msk [vmem:[#allocation3 + $0xc] sm:$0xf] %vm835, %v855
          %872 = vst.msk [vmem:[#allocation3 + $0x10] sm:$0xf] %vm835, %v856
          %873 = vst.msk [vmem:[#allocation3 + $0x14] sm:$0xf] %vm835, %v857
          %874 = vst.msk [vmem:[#allocation3 + $0x18] sm:$0xf] %vm835, %v858
          %875 = vst.msk [vmem:[#allocation3 + $0x1c] sm:$0xf] %vm835, %v859
          %876 = vst.msk [vmem:[#allocation3 + $0x20] sm:$0xf] %vm835, %v860
          %877 = vst.msk [vmem:[#allocation3 + $0x24] sm:$0xf] %vm835, %v861
          %878 = vst.msk [vmem:[#allocation3 + $0x28] sm:$0xf] %vm835, %v862
          %879 = vst.msk [vmem:[#allocation3 + $0x2c] sm:$0xf] %vm835, %v863
          %880 = vst.msk [vmem:[#allocation3 + $0x30] sm:$0xf] %vm835, %v864
          %881 = vst.msk [vmem:[#allocation3 + $0x34] sm:$0xf] %vm835, %v865
          %882 = vst.msk [vmem:[#allocation3 + $0x38] sm:$0xf] %vm835, %v866
          %883 = vst.msk [vmem:[#allocation3 + $0x3c] sm:$0xf] %vm835, %v867
          %900 = vrot.lane.b32.xlu0 %v819, 96
          %v901 = vpop.permute.xlu0 %900
          %902 = vrot.lane.b32.xlu0 %v820, 96
          %v903 = vpop.permute.xlu0 %902
          %904 = vrot.lane.b32.xlu0 %v821, 96
          %v905 = vpop.permute.xlu0 %904
          %906 = vrot.lane.b32.xlu0 %v822, 96
          %v907 = vpop.permute.xlu0 %906
          %908 = vrot.lane.b32.xlu0 %v823, 96
          %v909 = vpop.permute.xlu0 %908
          %910 = vrot.lane.b32.xlu0 %v824, 96
          %v911 = vpop.permute.xlu0 %910
          %912 = vrot.lane.b32.xlu0 %v825, 96
          %v913 = vpop.permute.xlu0 %912
          %914 = vrot.lane.b32.xlu0 %v826, 96
          %v915 = vpop.permute.xlu0 %914
          %916 = vrot.lane.b32.xlu0 %v827, 96
          %v917 = vpop.permute.xlu0 %916
          %918 = vrot.lane.b32.xlu0 %v828, 96
          %v919 = vpop.permute.xlu0 %918
          %920 = vrot.lane.b32.xlu0 %v829, 96
          %v921 = vpop.permute.xlu0 %920
          %922 = vrot.lane.b32.xlu0 %v830, 96
          %v923 = vpop.permute.xlu0 %922
          %924 = vrot.lane.b32.xlu0 %v831, 96
          %v925 = vpop.permute.xlu0 %924
          %926 = vrot.lane.b32.xlu0 %v832, 96
          %v927 = vpop.permute.xlu0 %926
          %928 = vrot.lane.b32.xlu0 %v833, 96
          %v929 = vpop.permute.xlu0 %928
          %930 = vrot.lane.b32.xlu0 %v834, 96
          %v931 = vpop.permute.xlu0 %930
          %s948 = scalar_lea.vmem [#allocation2], 64
          %949 = vst.msk [vmem:[%s948] sm:$0xf] %vm835, %v901
          %950 = vst.msk [vmem:[%s948 + $0x4] sm:$0xf] %vm835, %v903
          %951 = vst.msk [vmem:[%s948 + $0x8] sm:$0xf] %vm835, %v905
          %952 = vst.msk [vmem:[%s948 + $0xc] sm:$0xf] %vm835, %v907
          %953 = vst.msk [vmem:[%s948 + $0x10] sm:$0xf] %vm835, %v909
          %954 = vst.msk [vmem:[%s948 + $0x14] sm:$0xf] %vm835, %v911
          %955 = vst.msk [vmem:[%s948 + $0x18] sm:$0xf] %vm835, %v913
          %956 = vst.msk [vmem:[%s948 + $0x1c] sm:$0xf] %vm835, %v915
          %957 = vst.msk [vmem:[%s948 + $0x20] sm:$0xf] %vm835, %v917
          %958 = vst.msk [vmem:[%s948 + $0x24] sm:$0xf] %vm835, %v919
          %959 = vst.msk [vmem:[%s948 + $0x28] sm:$0xf] %vm835, %v921
          %960 = vst.msk [vmem:[%s948 + $0x2c] sm:$0xf] %vm835, %v923
          %961 = vst.msk [vmem:[%s948 + $0x30] sm:$0xf] %vm835, %v925
          %962 = vst.msk [vmem:[%s948 + $0x34] sm:$0xf] %vm835, %v927
          %963 = vst.msk [vmem:[%s948 + $0x38] sm:$0xf] %vm835, %v929
          %964 = vst.msk [vmem:[%s948 + $0x3c] sm:$0xf] %vm835, %v931
          %981 = vrot.lane.b32.xlu0 %v852, 96
          %v982 = vpop.permute.xlu0 %981
          %983 = vrot.lane.b32.xlu0 %v853, 96
          %v984 = vpop.permute.xlu0 %983
          %985 = vrot.lane.b32.xlu0 %v854, 96
          %v986 = vpop.permute.xlu0 %985
          %987 = vrot.lane.b32.xlu0 %v855, 96
          %v988 = vpop.permute.xlu0 %987
          %989 = vrot.lane.b32.xlu0 %v856, 96
          %v990 = vpop.permute.xlu0 %989
          %991 = vrot.lane.b32.xlu0 %v857, 96
          %v992 = vpop.permute.xlu0 %991
          %993 = vrot.lane.b32.xlu0 %v858, 96
          %v994 = vpop.permute.xlu0 %993
          %995 = vrot.lane.b32.xlu0 %v859, 96
          %v996 = vpop.permute.xlu0 %995
          %997 = vrot.lane.b32.xlu0 %v860, 96
          %v998 = vpop.permute.xlu0 %997
          %999 = vrot.lane.b32.xlu0 %v861, 96
          %v1000 = vpop.permute.xlu0 %999
          %1001 = vrot.lane.b32.xlu0 %v862, 96
          %v1002 = vpop.permute.xlu0 %1001
          %1003 = vrot.lane.b32.xlu0 %v863, 96
          %v1004 = vpop.permute.xlu0 %1003
          %1005 = vrot.lane.b32.xlu0 %v864, 96
          %v1006 = vpop.permute.xlu0 %1005
          %1007 = vrot.lane.b32.xlu0 %v865, 96
          %v1008 = vpop.permute.xlu0 %1007
          %1009 = vrot.lane.b32.xlu0 %v866, 96
          %v1010 = vpop.permute.xlu0 %1009
          %1011 = vrot.lane.b32.xlu0 %v867, 96
          %v1012 = vpop.permute.xlu0 %1011
          %s1029 = scalar_lea.vmem [#allocation3], 64
          %1030 = vst.msk [vmem:[%s1029] sm:$0xf] %vm835, %v982
          %1031 = vst.msk [vmem:[%s1029 + $0x4] sm:$0xf] %vm835, %v984
          %1032 = vst.msk [vmem:[%s1029 + $0x8] sm:$0xf] %vm835, %v986
          %1033 = vst.msk [vmem:[%s1029 + $0xc] sm:$0xf] %vm835, %v988
          %1034 = vst.msk [vmem:[%s1029 + $0x10] sm:$0xf] %vm835, %v990
          %1035 = vst.msk [vmem:[%s1029 + $0x14] sm:$0xf] %vm835, %v992
          %1036 = vst.msk [vmem:[%s1029 + $0x18] sm:$0xf] %vm835, %v994
          %1037 = vst.msk [vmem:[%s1029 + $0x1c] sm:$0xf] %vm835, %v996
          %1038 = vst.msk [vmem:[%s1029 + $0x20] sm:$0xf] %vm835, %v998
          %1039 = vst.msk [vmem:[%s1029 + $0x24] sm:$0xf] %vm835, %v1000
          %1040 = vst.msk [vmem:[%s1029 + $0x28] sm:$0xf] %vm835, %v1002
          %1041 = vst.msk [vmem:[%s1029 + $0x2c] sm:$0xf] %vm835, %v1004
          %1042 = vst.msk [vmem:[%s1029 + $0x30] sm:$0xf] %vm835, %v1006
          %1043 = vst.msk [vmem:[%s1029 + $0x34] sm:$0xf] %vm835, %v1008
          %1044 = vst.msk [vmem:[%s1029 + $0x38] sm:$0xf] %vm835, %v1010
          %1045 = vst.msk [vmem:[%s1029 + $0x3c] sm:$0xf] %vm835, %v1012
          %1046 = vrot.lane.b32.xlu0 %v819, 64
          %v1047 = vpop.permute.xlu0 %1046
          %1048 = vrot.lane.b32.xlu0 %v820, 64
          %v1049 = vpop.permute.xlu0 %1048
          %1050 = vrot.lane.b32.xlu0 %v821, 64
          %v1051 = vpop.permute.xlu0 %1050
          %1052 = vrot.lane.b32.xlu0 %v822, 64
          %v1053 = vpop.permute.xlu0 %1052
          %1054 = vrot.lane.b32.xlu0 %v823, 64
          %v1055 = vpop.permute.xlu0 %1054
          %1056 = vrot.lane.b32.xlu0 %v824, 64
          %v1057 = vpop.permute.xlu0 %1056
          %1058 = vrot.lane.b32.xlu0 %v825, 64
          %v1059 = vpop.permute.xlu0 %1058
          %1060 = vrot.lane.b32.xlu0 %v826, 64
          %v1061 = vpop.permute.xlu0 %1060
          %1062 = vrot.lane.b32.xlu0 %v827, 64
          %v1063 = vpop.permute.xlu0 %1062
          %1064 = vrot.lane.b32.xlu0 %v828, 64
          %v1065 = vpop.permute.xlu0 %1064
          %1066 = vrot.lane.b32.xlu0 %v829, 64
          %v1067 = vpop.permute.xlu0 %1066
          %1068 = vrot.lane.b32.xlu0 %v830, 64
          %v1069 = vpop.permute.xlu0 %1068
          %1070 = vrot.lane.b32.xlu0 %v831, 64
          %v1071 = vpop.permute.xlu0 %1070
          %1072 = vrot.lane.b32.xlu0 %v832, 64
          %v1073 = vpop.permute.xlu0 %1072
          %1074 = vrot.lane.b32.xlu0 %v833, 64
          %v1075 = vpop.permute.xlu0 %1074
          %1076 = vrot.lane.b32.xlu0 %v834, 64
          %v1077 = vpop.permute.xlu0 %1076
          %s1094 = scalar_lea.vmem [#allocation2], 128
          %1095 = vst.msk [vmem:[%s1094] sm:$0xf] %vm835, %v1047
          %1096 = vst.msk [vmem:[%s1094 + $0x4] sm:$0xf] %vm835, %v1049
          %1097 = vst.msk [vmem:[%s1094 + $0x8] sm:$0xf] %vm835, %v1051
          %1098 = vst.msk [vmem:[%s1094 + $0xc] sm:$0xf] %vm835, %v1053
          %1099 = vst.msk [vmem:[%s1094 + $0x10] sm:$0xf] %vm835, %v1055
          %1100 = vst.msk [vmem:[%s1094 + $0x14] sm:$0xf] %vm835, %v1057
          %1101 = vst.msk [vmem:[%s1094 + $0x18] sm:$0xf] %vm835, %v1059
          %1102 = vst.msk [vmem:[%s1094 + $0x1c] sm:$0xf] %vm835, %v1061
          %1103 = vst.msk [vmem:[%s1094 + $0x20] sm:$0xf] %vm835, %v1063
          %1104 = vst.msk [vmem:[%s1094 + $0x24] sm:$0xf] %vm835, %v1065
          %1105 = vst.msk [vmem:[%s1094 + $0x28] sm:$0xf] %vm835, %v1067
          %1106 = vst.msk [vmem:[%s1094 + $0x2c] sm:$0xf] %vm835, %v1069
          %1107 = vst.msk [vmem:[%s1094 + $0x30] sm:$0xf] %vm835, %v1071
          %1108 = vst.msk [vmem:[%s1094 + $0x34] sm:$0xf] %vm835, %v1073
          %1109 = vst.msk [vmem:[%s1094 + $0x38] sm:$0xf] %vm835, %v1075
          %1110 = vst.msk [vmem:[%s1094 + $0x3c] sm:$0xf] %vm835, %v1077
          %1111 = vrot.lane.b32.xlu0 %v852, 64
          %v1112 = vpop.permute.xlu0 %1111
          %1113 = vrot.lane.b32.xlu0 %v853, 64
          %v1114 = vpop.permute.xlu0 %1113
          %1115 = vrot.lane.b32.xlu0 %v854, 64
          %v1116 = vpop.permute.xlu0 %1115
          %1117 = vrot.lane.b32.xlu0 %v855, 64
          %v1118 = vpop.permute.xlu0 %1117
          %1119 = vrot.lane.b32.xlu0 %v856, 64
          %v1120 = vpop.permute.xlu0 %1119
          %1121 = vrot.lane.b32.xlu0 %v857, 64
          %v1122 = vpop.permute.xlu0 %1121
          %1123 = vrot.lane.b32.xlu0 %v858, 64
          %v1124 = vpop.permute.xlu0 %1123
          %1125 = vrot.lane.b32.xlu0 %v859, 64
          %v1126 = vpop.permute.xlu0 %1125
          %1127 = vrot.lane.b32.xlu0 %v860, 64
          %v1128 = vpop.permute.xlu0 %1127
          %1129 = vrot.lane.b32.xlu0 %v861, 64
          %v1130 = vpop.permute.xlu0 %1129
          %1131 = vrot.lane.b32.xlu0 %v862, 64
          %v1132 = vpop.permute.xlu0 %1131
          %1133 = vrot.lane.b32.xlu0 %v863, 64
          %v1134 = vpop.permute.xlu0 %1133
          %1135 = vrot.lane.b32.xlu0 %v864, 64
          %v1136 = vpop.permute.xlu0 %1135
          %1137 = vrot.lane.b32.xlu0 %v865, 64
          %v1138 = vpop.permute.xlu0 %1137
          %1139 = vrot.lane.b32.xlu0 %v866, 64
          %v1140 = vpop.permute.xlu0 %1139
          %1141 = vrot.lane.b32.xlu0 %v867, 64
          %v1142 = vpop.permute.xlu0 %1141
          %s1159 = scalar_lea.vmem [#allocation3], 128
          %1160 = vst.msk [vmem:[%s1159] sm:$0xf] %vm835, %v1112
          %1161 = vst.msk [vmem:[%s1159 + $0x4] sm:$0xf] %vm835, %v1114
          %1162 = vst.msk [vmem:[%s1159 + $0x8] sm:$0xf] %vm835, %v1116
          %1163 = vst.msk [vmem:[%s1159 + $0xc] sm:$0xf] %vm835, %v1118
          %1164 = vst.msk [vmem:[%s1159 + $0x10] sm:$0xf] %vm835, %v1120
          %1165 = vst.msk [vmem:[%s1159 + $0x14] sm:$0xf] %vm835, %v1122
          %1166 = vst.msk [vmem:[%s1159 + $0x18] sm:$0xf] %vm835, %v1124
          %1167 = vst.msk [vmem:[%s1159 + $0x1c] sm:$0xf] %vm835, %v1126
          %1168 = vst.msk [vmem:[%s1159 + $0x20] sm:$0xf] %vm835, %v1128
          %1169 = vst.msk [vmem:[%s1159 + $0x24] sm:$0xf] %vm835, %v1130
          %1170 = vst.msk [vmem:[%s1159 + $0x28] sm:$0xf] %vm835, %v1132
          %1171 = vst.msk [vmem:[%s1159 + $0x2c] sm:$0xf] %vm835, %v1134
          %1172 = vst.msk [vmem:[%s1159 + $0x30] sm:$0xf] %vm835, %v1136
          %1173 = vst.msk [vmem:[%s1159 + $0x34] sm:$0xf] %vm835, %v1138
          %1174 = vst.msk [vmem:[%s1159 + $0x38] sm:$0xf] %vm835, %v1140
          %1175 = vst.msk [vmem:[%s1159 + $0x3c] sm:$0xf] %vm835, %v1142
          %1176 = vrot.lane.b32.xlu0 %v819, 32
          %v1177 = vpop.permute.xlu0 %1176
          %1178 = vrot.lane.b32.xlu0 %v820, 32
          %v1179 = vpop.permute.xlu0 %1178
          %1180 = vrot.lane.b32.xlu0 %v821, 32
          %v1181 = vpop.permute.xlu0 %1180
          %1182 = vrot.lane.b32.xlu0 %v822, 32
          %v1183 = vpop.permute.xlu0 %1182
          %1184 = vrot.lane.b32.xlu0 %v823, 32
          %v1185 = vpop.permute.xlu0 %1184
          %1186 = vrot.lane.b32.xlu0 %v824, 32
          %v1187 = vpop.permute.xlu0 %1186
          %1188 = vrot.lane.b32.xlu0 %v825, 32
          %v1189 = vpop.permute.xlu0 %1188
          %1190 = vrot.lane.b32.xlu0 %v826, 32
          %v1191 = vpop.permute.xlu0 %1190
          %1192 = vrot.lane.b32.xlu0 %v827, 32
          %v1193 = vpop.permute.xlu0 %1192
          %1194 = vrot.lane.b32.xlu0 %v828, 32
          %v1195 = vpop.permute.xlu0 %1194
          %1196 = vrot.lane.b32.xlu0 %v829, 32
          %v1197 = vpop.permute.xlu0 %1196
          %1198 = vrot.lane.b32.xlu0 %v830, 32
          %v1199 = vpop.permute.xlu0 %1198
          %1200 = vrot.lane.b32.xlu0 %v831, 32
          %v1201 = vpop.permute.xlu0 %1200
          %1202 = vrot.lane.b32.xlu0 %v832, 32
          %v1203 = vpop.permute.xlu0 %1202
          %1204 = vrot.lane.b32.xlu0 %v833, 32
          %v1205 = vpop.permute.xlu0 %1204
          %1206 = vrot.lane.b32.xlu0 %v834, 32
          %v1207 = vpop.permute.xlu0 %1206
          %s1224 = scalar_lea.vmem [#allocation2], 192
          %1225 = vst.msk [vmem:[%s1224] sm:$0xf] %vm835, %v1177
          %1226 = vst.msk [vmem:[%s1224 + $0x4] sm:$0xf] %vm835, %v1179
          %1227 = vst.msk [vmem:[%s1224 + $0x8] sm:$0xf] %vm835, %v1181
          %1228 = vst.msk [vmem:[%s1224 + $0xc] sm:$0xf] %vm835, %v1183
          %1229 = vst.msk [vmem:[%s1224 + $0x10] sm:$0xf] %vm835, %v1185
          %1230 = vst.msk [vmem:[%s1224 + $0x14] sm:$0xf] %vm835, %v1187
          %1231 = vst.msk [vmem:[%s1224 + $0x18] sm:$0xf] %vm835, %v1189
          %1232 = vst.msk [vmem:[%s1224 + $0x1c] sm:$0xf] %vm835, %v1191
          %1233 = vst.msk [vmem:[%s1224 + $0x20] sm:$0xf] %vm835, %v1193
          %1234 = vst.msk [vmem:[%s1224 + $0x24] sm:$0xf] %vm835, %v1195
          %1235 = vst.msk [vmem:[%s1224 + $0x28] sm:$0xf] %vm835, %v1197
          %1236 = vst.msk [vmem:[%s1224 + $0x2c] sm:$0xf] %vm835, %v1199
          %1237 = vst.msk [vmem:[%s1224 + $0x30] sm:$0xf] %vm835, %v1201
          %1238 = vst.msk [vmem:[%s1224 + $0x34] sm:$0xf] %vm835, %v1203
          %1239 = vst.msk [vmem:[%s1224 + $0x38] sm:$0xf] %vm835, %v1205
          %1240 = vst.msk [vmem:[%s1224 + $0x3c] sm:$0xf] %vm835, %v1207
          %1241 = vrot.lane.b32.xlu0 %v852, 32
          %v1242 = vpop.permute.xlu0 %1241
          %1243 = vrot.lane.b32.xlu0 %v853, 32
          %v1244 = vpop.permute.xlu0 %1243
          %1245 = vrot.lane.b32.xlu0 %v854, 32
          %v1246 = vpop.permute.xlu0 %1245
          %1247 = vrot.lane.b32.xlu0 %v855, 32
          %v1248 = vpop.permute.xlu0 %1247
          %1249 = vrot.lane.b32.xlu0 %v856, 32
          %v1250 = vpop.permute.xlu0 %1249
          %1251 = vrot.lane.b32.xlu0 %v857, 32
          %v1252 = vpop.permute.xlu0 %1251
          %1253 = vrot.lane.b32.xlu0 %v858, 32
          %v1254 = vpop.permute.xlu0 %1253
          %1255 = vrot.lane.b32.xlu0 %v859, 32
          %v1256 = vpop.permute.xlu0 %1255
          %1257 = vrot.lane.b32.xlu0 %v860, 32
          %v1258 = vpop.permute.xlu0 %1257
          %1259 = vrot.lane.b32.xlu0 %v861, 32
          %v1260 = vpop.permute.xlu0 %1259
          %1261 = vrot.lane.b32.xlu0 %v862, 32
          %v1262 = vpop.permute.xlu0 %1261
          %1263 = vrot.lane.b32.xlu0 %v863, 32
          %v1264 = vpop.permute.xlu0 %1263
          %1265 = vrot.lane.b32.xlu0 %v864, 32
          %v1266 = vpop.permute.xlu0 %1265
          %1267 = vrot.lane.b32.xlu0 %v865, 32
          %v1268 = vpop.permute.xlu0 %1267
          %1269 = vrot.lane.b32.xlu0 %v866, 32
          %v1270 = vpop.permute.xlu0 %1269
          %1271 = vrot.lane.b32.xlu0 %v867, 32
          %v1272 = vpop.permute.xlu0 %1271
          %s1289 = scalar_lea.vmem [#allocation3], 192
          %1290 = vst.msk [vmem:[%s1289] sm:$0xf] %vm835, %v1242
          %1291 = vst.msk [vmem:[%s1289 + $0x4] sm:$0xf] %vm835, %v1244
          %1292 = vst.msk [vmem:[%s1289 + $0x8] sm:$0xf] %vm835, %v1246
          %1293 = vst.msk [vmem:[%s1289 + $0xc] sm:$0xf] %vm835, %v1248
          %1294 = vst.msk [vmem:[%s1289 + $0x10] sm:$0xf] %vm835, %v1250
          %1295 = vst.msk [vmem:[%s1289 + $0x14] sm:$0xf] %vm835, %v1252
          %1296 = vst.msk [vmem:[%s1289 + $0x18] sm:$0xf] %vm835, %v1254
          %1297 = vst.msk [vmem:[%s1289 + $0x1c] sm:$0xf] %vm835, %v1256
          %1298 = vst.msk [vmem:[%s1289 + $0x20] sm:$0xf] %vm835, %v1258
          %1299 = vst.msk [vmem:[%s1289 + $0x24] sm:$0xf] %vm835, %v1260
          %1300 = vst.msk [vmem:[%s1289 + $0x28] sm:$0xf] %vm835, %v1262
          %1301 = vst.msk [vmem:[%s1289 + $0x2c] sm:$0xf] %vm835, %v1264
          %1302 = vst.msk [vmem:[%s1289 + $0x30] sm:$0xf] %vm835, %v1266
          %1303 = vst.msk [vmem:[%s1289 + $0x34] sm:$0xf] %vm835, %v1268
          %1304 = vst.msk [vmem:[%s1289 + $0x38] sm:$0xf] %vm835, %v1270
          %1305 = vst.msk [vmem:[%s1289 + $0x3c] sm:$0xf] %vm835, %v1272
        $region104: #{encoder_layer_pallas.1} parent=79 // pred_fallthru
          _
        %s1306 = smul.u32 %s34, 128
        %s1307 = scalar_lea.vmem %s580, %s1306
        %v1308 = vld [vmem:[%s1307] sm:$0xff]
        %v1309 = vld [vmem:[%s1307 + $0x8] sm:$0xff]
        %v1310 = vld [vmem:[%s1307 + $0x10] sm:$0xff]
        %v1311 = vld [vmem:[%s1307 + $0x18] sm:$0xff]
        %v1312 = vld [vmem:[%s1307 + $0x20] sm:$0xff]
        %v1313 = vld [vmem:[%s1307 + $0x28] sm:$0xff]
        %v1314 = vld [vmem:[%s1307 + $0x30] sm:$0xff]
        %v1315 = vld [vmem:[%s1307 + $0x38] sm:$0xff]
        %v1316 = vld [vmem:[%s1307 + $0x40] sm:$0xff]
        %v1317 = vld [vmem:[%s1307 + $0x48] sm:$0xff]
        %v1318 = vld [vmem:[%s1307 + $0x50] sm:$0xff]
        %v1319 = vld [vmem:[%s1307 + $0x58] sm:$0xff]
        %v1320 = vld [vmem:[%s1307 + $0x60] sm:$0xff]
        %v1321 = vld [vmem:[%s1307 + $0x68] sm:$0xff]
        %v1322 = vld [vmem:[%s1307 + $0x70] sm:$0xff]
        %v1323 = vld [vmem:[%s1307 + $0x78] sm:$0xff]
        %v1324 = vpack.c.bf16 %v1309, %v1308
        %v1325 = vpack.c.bf16 %v1311, %v1310
        %v1326 = vpack.c.bf16 %v1313, %v1312
        %v1327 = vpack.c.bf16 %v1315, %v1314
        %v1328 = vpack.c.bf16 %v1317, %v1316
        %v1329 = vpack.c.bf16 %v1319, %v1318
        %v1330 = vpack.c.bf16 %v1321, %v1320
        %v1331 = vpack.c.bf16 %v1323, %v1322
        %v1332 = vld [vmem:[%s1] sm:$0xf]
        %v1333 = vld [vmem:[%s1 + $0x4] sm:$0xf]
        %v1334 = vld [vmem:[%s1 + $0x8] sm:$0xf]
        %v1335 = vld [vmem:[%s1 + $0xc] sm:$0xf]
        %v1336 = vld [vmem:[%s1 + $0x10] sm:$0xf]
        %v1337 = vld [vmem:[%s1 + $0x14] sm:$0xf]
        %v1338 = vld [vmem:[%s1 + $0x18] sm:$0xf]
        %v1339 = vld [vmem:[%s1 + $0x1c] sm:$0xf]
        %v1340 = vld [vmem:[%s1 + $0x20] sm:$0xf]
        %v1341 = vld [vmem:[%s1 + $0x24] sm:$0xf]
        %v1342 = vld [vmem:[%s1 + $0x28] sm:$0xf]
        %v1343 = vld [vmem:[%s1 + $0x2c] sm:$0xf]
        %v1344 = vld [vmem:[%s1 + $0x30] sm:$0xf]
        %v1345 = vld [vmem:[%s1 + $0x34] sm:$0xf]
        %v1346 = vld [vmem:[%s1 + $0x38] sm:$0xf]
        %v1347 = vld [vmem:[%s1 + $0x3c] sm:$0xf]
        %v1348 = vld [vmem:[%s2] sm:$0x1]
        %v1350 = vperm.slane %v1348, 0
        %v1368 = vunpack.c.l.b16 %v1332
        %v1369 = vunpack.c.l.b16 %v1333
        %v1370 = vunpack.c.l.b16 %v1334
        %v1371 = vunpack.c.l.b16 %v1335
        %v1372 = vunpack.c.l.b16 %v1336
        %v1373 = vunpack.c.l.b16 %v1337
        %v1374 = vunpack.c.l.b16 %v1338
        %v1375 = vunpack.c.l.b16 %v1339
        %v1376 = vunpack.c.l.b16 %v1340
        %v1377 = vunpack.c.l.b16 %v1341
        %v1378 = vunpack.c.l.b16 %v1342
        %v1379 = vunpack.c.l.b16 %v1343
        %v1380 = vunpack.c.l.b16 %v1344
        %v1381 = vunpack.c.l.b16 %v1345
        %v1382 = vunpack.c.l.b16 %v1346
        %v1383 = vunpack.c.l.b16 %v1347
        %v1384 = vpack.c.b16 %v1369, %v1368
        %v1385 = vpack.c.b16 %v1371, %v1370
        %v1386 = vpack.c.b16 %v1373, %v1372
        %v1387 = vpack.c.b16 %v1375, %v1374
        %v1388 = vpack.c.b16 %v1377, %v1376
        %v1389 = vpack.c.b16 %v1379, %v1378
        %v1390 = vpack.c.b16 %v1381, %v1380
        %v1391 = vpack.c.b16 %v1383, %v1382
        %1400 = vmatpush.bf16.msra.mxu0 %v1391
        %1401 = vmatpush.bf16.msra.mxu0 %v1390
        %1402 = vmatpush.bf16.msra.mxu0 %v1389
        %1403 = vmatpush.bf16.msra.mxu0 %v1388
        %1404 = vmatpush.bf16.msra.mxu0 %v1387
        %1405 = vmatpush.bf16.msra.mxu0 %v1386
        %1406 = vmatpush.bf16.msra.mxu0 %v1385
        %1407 = vmatpush.bf16.msra.mxu0 %v1384
        %1408 = vmatmul.bf16.gmra.mxu0 %v1324
        %v1409 = vpop.f32.mrf.mxu0
        %v1410 = vadd.f32 %v1350, %v1409
        %v1411 = vpop.f32.mrf.mxu0
        %v1412 = vadd.f32 %v1350, %v1411
        %1413 = vmatmul.bf16.gmra.mxu0 %v1325
        %v1414 = vpop.f32.mrf.mxu0
        %v1415 = vadd.f32 %v1350, %v1414
        %v1416 = vpop.f32.mrf.mxu0
        %v1417 = vadd.f32 %v1350, %v1416
        %1418 = vmatmul.bf16.gmra.mxu0 %v1326
        %v1419 = vpop.f32.mrf.mxu0
        %v1420 = vadd.f32 %v1350, %v1419
        %v1421 = vpop.f32.mrf.mxu0
        %v1422 = vadd.f32 %v1350, %v1421
        %1423 = vmatmul.bf16.gmra.mxu0 %v1327
        %v1424 = vpop.f32.mrf.mxu0
        %v1425 = vadd.f32 %v1350, %v1424
        %v1426 = vpop.f32.mrf.mxu0
        %v1427 = vadd.f32 %v1350, %v1426
        %1428 = vmatmul.bf16.gmra.mxu0 %v1328
        %v1429 = vpop.f32.mrf.mxu0
        %v1430 = vadd.f32 %v1350, %v1429
        %v1431 = vpop.f32.mrf.mxu0
        %v1432 = vadd.f32 %v1350, %v1431
        %1433 = vmatmul.bf16.gmra.mxu0 %v1329
        %v1434 = vpop.f32.mrf.mxu0
        %v1435 = vadd.f32 %v1350, %v1434
        %v1436 = vpop.f32.mrf.mxu0
        %v1437 = vadd.f32 %v1350, %v1436
        %1438 = vmatmul.bf16.gmra.mxu0 %v1330
        %v1439 = vpop.f32.mrf.mxu0
        %v1440 = vadd.f32 %v1350, %v1439
        %v1441 = vpop.f32.mrf.mxu0
        %v1442 = vadd.f32 %v1350, %v1441
        %1443 = vmatmul.bf16.gmra.mxu0 %v1331
        %v1444 = vpop.f32.mrf.mxu0
        %v1445 = vadd.f32 %v1350, %v1444
        %v1446 = vpop.f32.mrf.mxu0
        %v1447 = vadd.f32 %v1350, %v1446
        %1448 = vdwg.mxu0
        %v1449 = vpack.c.bf16 %v1410, %v1410
        %v1450 = vpack.c.bf16 %v1412, %v1412
        %v1451 = vpack.c.bf16 %v1415, %v1415
        %v1452 = vpack.c.bf16 %v1417, %v1417
        %v1453 = vpack.c.bf16 %v1420, %v1420
        %v1454 = vpack.c.bf16 %v1422, %v1422
        %v1455 = vpack.c.bf16 %v1425, %v1425
        %v1456 = vpack.c.bf16 %v1427, %v1427
        %v1457 = vpack.c.bf16 %v1430, %v1430
        %v1458 = vpack.c.bf16 %v1432, %v1432
        %v1459 = vpack.c.bf16 %v1435, %v1435
        %v1460 = vpack.c.bf16 %v1437, %v1437
        %v1461 = vpack.c.bf16 %v1440, %v1440
        %v1462 = vpack.c.bf16 %v1442, %v1442
        %v1463 = vpack.c.bf16 %v1445, %v1445
        %v1464 = vpack.c.bf16 %v1447, %v1447
        %vm1465 = vcmask 257024
        %1466 = vst.msk [vmem:[#allocation4] sm:$0xf] %vm1465, %v1449
        %1467 = vst.msk [vmem:[#allocation4 + $0x4] sm:$0xf] %vm1465, %v1450
        %1468 = vst.msk [vmem:[#allocation4 + $0x8] sm:$0xf] %vm1465, %v1451
        %1469 = vst.msk [vmem:[#allocation4 + $0xc] sm:$0xf] %vm1465, %v1452
        %1470 = vst.msk [vmem:[#allocation4 + $0x10] sm:$0xf] %vm1465, %v1453
        %1471 = vst.msk [vmem:[#allocation4 + $0x14] sm:$0xf] %vm1465, %v1454
        %1472 = vst.msk [vmem:[#allocation4 + $0x18] sm:$0xf] %vm1465, %v1455
        %1473 = vst.msk [vmem:[#allocation4 + $0x1c] sm:$0xf] %vm1465, %v1456
        %1474 = vst.msk [vmem:[#allocation4 + $0x20] sm:$0xf] %vm1465, %v1457
        %1475 = vst.msk [vmem:[#allocation4 + $0x24] sm:$0xf] %vm1465, %v1458
        %1476 = vst.msk [vmem:[#allocation4 + $0x28] sm:$0xf] %vm1465, %v1459
        %1477 = vst.msk [vmem:[#allocation4 + $0x2c] sm:$0xf] %vm1465, %v1460
        %1478 = vst.msk [vmem:[#allocation4 + $0x30] sm:$0xf] %vm1465, %v1461
        %1479 = vst.msk [vmem:[#allocation4 + $0x34] sm:$0xf] %vm1465, %v1462
        %1480 = vst.msk [vmem:[#allocation4 + $0x38] sm:$0xf] %vm1465, %v1463
        %1481 = vst.msk [vmem:[#allocation4 + $0x3c] sm:$0xf] %vm1465, %v1464
        %1498 = vrot.lane.b32.xlu0 %v1449, 96
        %v1499 = vpop.permute.xlu0 %1498
        %1500 = vrot.lane.b32.xlu0 %v1450, 96
        %v1501 = vpop.permute.xlu0 %1500
        %1502 = vrot.lane.b32.xlu0 %v1451, 96
        %v1503 = vpop.permute.xlu0 %1502
        %1504 = vrot.lane.b32.xlu0 %v1452, 96
        %v1505 = vpop.permute.xlu0 %1504
        %1506 = vrot.lane.b32.xlu0 %v1453, 96
        %v1507 = vpop.permute.xlu0 %1506
        %1508 = vrot.lane.b32.xlu0 %v1454, 96
        %v1509 = vpop.permute.xlu0 %1508
        %1510 = vrot.lane.b32.xlu0 %v1455, 96
        %v1511 = vpop.permute.xlu0 %1510
        %1512 = vrot.lane.b32.xlu0 %v1456, 96
        %v1513 = vpop.permute.xlu0 %1512
        %1514 = vrot.lane.b32.xlu0 %v1457, 96
        %v1515 = vpop.permute.xlu0 %1514
        %1516 = vrot.lane.b32.xlu0 %v1458, 96
        %v1517 = vpop.permute.xlu0 %1516
        %1518 = vrot.lane.b32.xlu0 %v1459, 96
        %v1519 = vpop.permute.xlu0 %1518
        %1520 = vrot.lane.b32.xlu0 %v1460, 96
        %v1521 = vpop.permute.xlu0 %1520
        %1522 = vrot.lane.b32.xlu0 %v1461, 96
        %v1523 = vpop.permute.xlu0 %1522
        %1524 = vrot.lane.b32.xlu0 %v1462, 96
        %v1525 = vpop.permute.xlu0 %1524
        %1526 = vrot.lane.b32.xlu0 %v1463, 96
        %v1527 = vpop.permute.xlu0 %1526
        %1528 = vrot.lane.b32.xlu0 %v1464, 96
        %v1529 = vpop.permute.xlu0 %1528
        %s1546 = scalar_lea.vmem [#allocation4], 64
        %1547 = vst.msk [vmem:[%s1546] sm:$0xf] %vm1465, %v1499
        %1548 = vst.msk [vmem:[%s1546 + $0x4] sm:$0xf] %vm1465, %v1501
        %1549 = vst.msk [vmem:[%s1546 + $0x8] sm:$0xf] %vm1465, %v1503
        %1550 = vst.msk [vmem:[%s1546 + $0xc] sm:$0xf] %vm1465, %v1505
        %1551 = vst.msk [vmem:[%s1546 + $0x10] sm:$0xf] %vm1465, %v1507
        %1552 = vst.msk [vmem:[%s1546 + $0x14] sm:$0xf] %vm1465, %v1509
        %1553 = vst.msk [vmem:[%s1546 + $0x18] sm:$0xf] %vm1465, %v1511
        %1554 = vst.msk [vmem:[%s1546 + $0x1c] sm:$0xf] %vm1465, %v1513
        %1555 = vst.msk [vmem:[%s1546 + $0x20] sm:$0xf] %vm1465, %v1515
        %1556 = vst.msk [vmem:[%s1546 + $0x24] sm:$0xf] %vm1465, %v1517
        %1557 = vst.msk [vmem:[%s1546 + $0x28] sm:$0xf] %vm1465, %v1519
        %1558 = vst.msk [vmem:[%s1546 + $0x2c] sm:$0xf] %vm1465, %v1521
        %1559 = vst.msk [vmem:[%s1546 + $0x30] sm:$0xf] %vm1465, %v1523
        %1560 = vst.msk [vmem:[%s1546 + $0x34] sm:$0xf] %vm1465, %v1525
        %1561 = vst.msk [vmem:[%s1546 + $0x38] sm:$0xf] %vm1465, %v1527
        %1562 = vst.msk [vmem:[%s1546 + $0x3c] sm:$0xf] %vm1465, %v1529
        %1563 = vrot.lane.b32.xlu0 %v1449, 64
        %v1564 = vpop.permute.xlu0 %1563
        %1565 = vrot.lane.b32.xlu0 %v1450, 64
        %v1566 = vpop.permute.xlu0 %1565
        %1567 = vrot.lane.b32.xlu0 %v1451, 64
        %v1568 = vpop.permute.xlu0 %1567
        %1569 = vrot.lane.b32.xlu0 %v1452, 64
        %v1570 = vpop.permute.xlu0 %1569
        %1571 = vrot.lane.b32.xlu0 %v1453, 64
        %v1572 = vpop.permute.xlu0 %1571
        %1573 = vrot.lane.b32.xlu0 %v1454, 64
        %v1574 = vpop.permute.xlu0 %1573
        %1575 = vrot.lane.b32.xlu0 %v1455, 64
        %v1576 = vpop.permute.xlu0 %1575
        %1577 = vrot.lane.b32.xlu0 %v1456, 64
        %v1578 = vpop.permute.xlu0 %1577
        %1579 = vrot.lane.b32.xlu0 %v1457, 64
        %v1580 = vpop.permute.xlu0 %1579
        %1581 = vrot.lane.b32.xlu0 %v1458, 64
        %v1582 = vpop.permute.xlu0 %1581
        %1583 = vrot.lane.b32.xlu0 %v1459, 64
        %v1584 = vpop.permute.xlu0 %1583
        %1585 = vrot.lane.b32.xlu0 %v1460, 64
        %v1586 = vpop.permute.xlu0 %1585
        %1587 = vrot.lane.b32.xlu0 %v1461, 64
        %v1588 = vpop.permute.xlu0 %1587
        %1589 = vrot.lane.b32.xlu0 %v1462, 64
        %v1590 = vpop.permute.xlu0 %1589
        %1591 = vrot.lane.b32.xlu0 %v1463, 64
        %v1592 = vpop.permute.xlu0 %1591
        %1593 = vrot.lane.b32.xlu0 %v1464, 64
        %v1594 = vpop.permute.xlu0 %1593
        %s1611 = scalar_lea.vmem [#allocation4], 128
        %1612 = vst.msk [vmem:[%s1611] sm:$0xf] %vm1465, %v1564
        %1613 = vst.msk [vmem:[%s1611 + $0x4] sm:$0xf] %vm1465, %v1566
        %1614 = vst.msk [vmem:[%s1611 + $0x8] sm:$0xf] %vm1465, %v1568
        %1615 = vst.msk [vmem:[%s1611 + $0xc] sm:$0xf] %vm1465, %v1570
        %1616 = vst.msk [vmem:[%s1611 + $0x10] sm:$0xf] %vm1465, %v1572
        %1617 = vst.msk [vmem:[%s1611 + $0x14] sm:$0xf] %vm1465, %v1574
        %1618 = vst.msk [vmem:[%s1611 + $0x18] sm:$0xf] %vm1465, %v1576
        %1619 = vst.msk [vmem:[%s1611 + $0x1c] sm:$0xf] %vm1465, %v1578
        %1620 = vst.msk [vmem:[%s1611 + $0x20] sm:$0xf] %vm1465, %v1580
        %1621 = vst.msk [vmem:[%s1611 + $0x24] sm:$0xf] %vm1465, %v1582
        %1622 = vst.msk [vmem:[%s1611 + $0x28] sm:$0xf] %vm1465, %v1584
        %1623 = vst.msk [vmem:[%s1611 + $0x2c] sm:$0xf] %vm1465, %v1586
        %1624 = vst.msk [vmem:[%s1611 + $0x30] sm:$0xf] %vm1465, %v1588
        %1625 = vst.msk [vmem:[%s1611 + $0x34] sm:$0xf] %vm1465, %v1590
        %1626 = vst.msk [vmem:[%s1611 + $0x38] sm:$0xf] %vm1465, %v1592
        %1627 = vst.msk [vmem:[%s1611 + $0x3c] sm:$0xf] %vm1465, %v1594
        %1628 = vrot.lane.b32.xlu0 %v1449, 32
        %v1629 = vpop.permute.xlu0 %1628
        %1630 = vrot.lane.b32.xlu0 %v1450, 32
        %v1631 = vpop.permute.xlu0 %1630
        %1632 = vrot.lane.b32.xlu0 %v1451, 32
        %v1633 = vpop.permute.xlu0 %1632
        %1634 = vrot.lane.b32.xlu0 %v1452, 32
        %v1635 = vpop.permute.xlu0 %1634
        %1636 = vrot.lane.b32.xlu0 %v1453, 32
        %v1637 = vpop.permute.xlu0 %1636
        %1638 = vrot.lane.b32.xlu0 %v1454, 32
        %v1639 = vpop.permute.xlu0 %1638
        %1640 = vrot.lane.b32.xlu0 %v1455, 32
        %v1641 = vpop.permute.xlu0 %1640
        %1642 = vrot.lane.b32.xlu0 %v1456, 32
        %v1643 = vpop.permute.xlu0 %1642
        %1644 = vrot.lane.b32.xlu0 %v1457, 32
        %v1645 = vpop.permute.xlu0 %1644
        %1646 = vrot.lane.b32.xlu0 %v1458, 32
        %v1647 = vpop.permute.xlu0 %1646
        %1648 = vrot.lane.b32.xlu0 %v1459, 32
        %v1649 = vpop.permute.xlu0 %1648
        %1650 = vrot.lane.b32.xlu0 %v1460, 32
        %v1651 = vpop.permute.xlu0 %1650
        %1652 = vrot.lane.b32.xlu0 %v1461, 32
        %v1653 = vpop.permute.xlu0 %1652
        %1654 = vrot.lane.b32.xlu0 %v1462, 32
        %v1655 = vpop.permute.xlu0 %1654
        %1656 = vrot.lane.b32.xlu0 %v1463, 32
        %v1657 = vpop.permute.xlu0 %1656
        %1658 = vrot.lane.b32.xlu0 %v1464, 32
        %v1659 = vpop.permute.xlu0 %1658
        %s1676 = scalar_lea.vmem [#allocation4], 192
        %1677 = vst.msk [vmem:[%s1676] sm:$0xf] %vm1465, %v1629
        %1678 = vst.msk [vmem:[%s1676 + $0x4] sm:$0xf] %vm1465, %v1631
        %1679 = vst.msk [vmem:[%s1676 + $0x8] sm:$0xf] %vm1465, %v1633
        %1680 = vst.msk [vmem:[%s1676 + $0xc] sm:$0xf] %vm1465, %v1635
        %1681 = vst.msk [vmem:[%s1676 + $0x10] sm:$0xf] %vm1465, %v1637
        %1682 = vst.msk [vmem:[%s1676 + $0x14] sm:$0xf] %vm1465, %v1639
        %1683 = vst.msk [vmem:[%s1676 + $0x18] sm:$0xf] %vm1465, %v1641
        %1684 = vst.msk [vmem:[%s1676 + $0x1c] sm:$0xf] %vm1465, %v1643
        %1685 = vst.msk [vmem:[%s1676 + $0x20] sm:$0xf] %vm1465, %v1645
        %1686 = vst.msk [vmem:[%s1676 + $0x24] sm:$0xf] %vm1465, %v1647
        %1687 = vst.msk [vmem:[%s1676 + $0x28] sm:$0xf] %vm1465, %v1649
        %1688 = vst.msk [vmem:[%s1676 + $0x2c] sm:$0xf] %vm1465, %v1651
        %1689 = vst.msk [vmem:[%s1676 + $0x30] sm:$0xf] %vm1465, %v1653
        %1690 = vst.msk [vmem:[%s1676 + $0x34] sm:$0xf] %vm1465, %v1655
        %1691 = vst.msk [vmem:[%s1676 + $0x38] sm:$0xf] %vm1465, %v1657
        %1692 = vst.msk [vmem:[%s1676 + $0x3c] sm:$0xf] %vm1465, %v1659
        %v1693 = vld [vmem:[#allocation4] sm:$0xf]
        %v1694 = vld [vmem:[#allocation4 + $0x4] sm:$0xf]
        %v1695 = vld [vmem:[#allocation4 + $0x8] sm:$0xf]
        %v1696 = vld [vmem:[#allocation4 + $0xc] sm:$0xf]
        %v1697 = vld [vmem:[#allocation4 + $0x10] sm:$0xf]
        %v1698 = vld [vmem:[#allocation4 + $0x14] sm:$0xf]
        %v1699 = vld [vmem:[#allocation4 + $0x18] sm:$0xf]
        %v1700 = vld [vmem:[#allocation4 + $0x1c] sm:$0xf]
        %v1701 = vld [vmem:[#allocation4 + $0x20] sm:$0xf]
        %v1702 = vld [vmem:[#allocation4 + $0x24] sm:$0xf]
        %v1703 = vld [vmem:[#allocation4 + $0x28] sm:$0xf]
        %v1704 = vld [vmem:[#allocation4 + $0x2c] sm:$0xf]
        %v1705 = vld [vmem:[#allocation4 + $0x30] sm:$0xf]
        %v1706 = vld [vmem:[#allocation4 + $0x34] sm:$0xf]
        %v1707 = vld [vmem:[#allocation4 + $0x38] sm:$0xf]
        %v1708 = vld [vmem:[#allocation4 + $0x3c] sm:$0xf]
        %v1709 = vld [vmem:[#allocation4 + $0x40] sm:$0xf]
        %v1710 = vld [vmem:[#allocation4 + $0x44] sm:$0xf]
        %v1711 = vld [vmem:[#allocation4 + $0x48] sm:$0xf]
        %v1712 = vld [vmem:[#allocation4 + $0x4c] sm:$0xf]
        %v1713 = vld [vmem:[#allocation4 + $0x50] sm:$0xf]
        %v1714 = vld [vmem:[#allocation4 + $0x54] sm:$0xf]
        %v1715 = vld [vmem:[#allocation4 + $0x58] sm:$0xf]
        %v1716 = vld [vmem:[#allocation4 + $0x5c] sm:$0xf]
        %v1717 = vld [vmem:[#allocation4 + $0x60] sm:$0xf]
        %v1718 = vld [vmem:[#allocation4 + $0x64] sm:$0xf]
        %v1719 = vld [vmem:[#allocation4 + $0x68] sm:$0xf]
        %v1720 = vld [vmem:[#allocation4 + $0x6c] sm:$0xf]
        %v1721 = vld [vmem:[#allocation4 + $0x70] sm:$0xf]
        %v1722 = vld [vmem:[#allocation4 + $0x74] sm:$0xf]
        %v1723 = vld [vmem:[#allocation4 + $0x78] sm:$0xf]
        %v1724 = vld [vmem:[#allocation4 + $0x7c] sm:$0xf]
        %v1725 = vld [vmem:[#allocation4 + $0x80] sm:$0xf]
        %v1726 = vld [vmem:[#allocation4 + $0x84] sm:$0xf]
        %v1727 = vld [vmem:[#allocation4 + $0x88] sm:$0xf]
        %v1728 = vld [vmem:[#allocation4 + $0x8c] sm:$0xf]
        %v1729 = vld [vmem:[#allocation4 + $0x90] sm:$0xf]
        %v1730 = vld [vmem:[#allocation4 + $0x94] sm:$0xf]
        %v1731 = vld [vmem:[#allocation4 + $0x98] sm:$0xf]
        %v1732 = vld [vmem:[#allocation4 + $0x9c] sm:$0xf]
        %v1733 = vld [vmem:[#allocation4 + $0xa0] sm:$0xf]
        %v1734 = vld [vmem:[#allocation4 + $0xa4] sm:$0xf]
        %v1735 = vld [vmem:[#allocation4 + $0xa8] sm:$0xf]
        %v1736 = vld [vmem:[#allocation4 + $0xac] sm:$0xf]
        %v1737 = vld [vmem:[#allocation4 + $0xb0] sm:$0xf]
        %v1738 = vld [vmem:[#allocation4 + $0xb4] sm:$0xf]
        %v1739 = vld [vmem:[#allocation4 + $0xb8] sm:$0xf]
        %v1740 = vld [vmem:[#allocation4 + $0xbc] sm:$0xf]
        %v1741 = vld [vmem:[#allocation4 + $0xc0] sm:$0xf]
        %v1742 = vld [vmem:[#allocation4 + $0xc4] sm:$0xf]
        %v1743 = vld [vmem:[#allocation4 + $0xc8] sm:$0xf]
        %v1744 = vld [vmem:[#allocation4 + $0xcc] sm:$0xf]
        %v1745 = vld [vmem:[#allocation4 + $0xd0] sm:$0xf]
        %v1746 = vld [vmem:[#allocation4 + $0xd4] sm:$0xf]
        %v1747 = vld [vmem:[#allocation4 + $0xd8] sm:$0xf]
        %v1748 = vld [vmem:[#allocation4 + $0xdc] sm:$0xf]
        %v1749 = vld [vmem:[#allocation4 + $0xe0] sm:$0xf]
        %v1750 = vld [vmem:[#allocation4 + $0xe4] sm:$0xf]
        %v1751 = vld [vmem:[#allocation4 + $0xe8] sm:$0xf]
        %v1752 = vld [vmem:[#allocation4 + $0xec] sm:$0xf]
        %v1753 = vld [vmem:[#allocation4 + $0xf0] sm:$0xf]
        %v1754 = vld [vmem:[#allocation4 + $0xf4] sm:$0xf]
        %v1755 = vld [vmem:[#allocation4 + $0xf8] sm:$0xf]
        %v1756 = vld [vmem:[#allocation4 + $0xfc] sm:$0xf]
        %v1757 = vld [vmem:[#allocation2] sm:$0xf]
        %v1758 = vld [vmem:[#allocation2 + $0x4] sm:$0xf]
        %v1759 = vld [vmem:[#allocation2 + $0x8] sm:$0xf]
        %v1760 = vld [vmem:[#allocation2 + $0xc] sm:$0xf]
        %v1761 = vld [vmem:[#allocation2 + $0x10] sm:$0xf]
        %v1762 = vld [vmem:[#allocation2 + $0x14] sm:$0xf]
        %v1763 = vld [vmem:[#allocation2 + $0x18] sm:$0xf]
        %v1764 = vld [vmem:[#allocation2 + $0x1c] sm:$0xf]
        %v1765 = vld [vmem:[#allocation2 + $0x20] sm:$0xf]
        %v1766 = vld [vmem:[#allocation2 + $0x24] sm:$0xf]
        %v1767 = vld [vmem:[#allocation2 + $0x28] sm:$0xf]
        %v1768 = vld [vmem:[#allocation2 + $0x2c] sm:$0xf]
        %v1769 = vld [vmem:[#allocation2 + $0x30] sm:$0xf]
        %v1770 = vld [vmem:[#allocation2 + $0x34] sm:$0xf]
        %v1771 = vld [vmem:[#allocation2 + $0x38] sm:$0xf]
        %v1772 = vld [vmem:[#allocation2 + $0x3c] sm:$0xf]
        %v1773 = vld [vmem:[#allocation2 + $0x40] sm:$0xf]
        %v1774 = vld [vmem:[#allocation2 + $0x44] sm:$0xf]
        %v1775 = vld [vmem:[#allocation2 + $0x48] sm:$0xf]
        %v1776 = vld [vmem:[#allocation2 + $0x4c] sm:$0xf]
        %v1777 = vld [vmem:[#allocation2 + $0x50] sm:$0xf]
        %v1778 = vld [vmem:[#allocation2 + $0x54] sm:$0xf]
        %v1779 = vld [vmem:[#allocation2 + $0x58] sm:$0xf]
        %v1780 = vld [vmem:[#allocation2 + $0x5c] sm:$0xf]
        %v1781 = vld [vmem:[#allocation2 + $0x60] sm:$0xf]
        %v1782 = vld [vmem:[#allocation2 + $0x64] sm:$0xf]
        %v1783 = vld [vmem:[#allocation2 + $0x68] sm:$0xf]
        %v1784 = vld [vmem:[#allocation2 + $0x6c] sm:$0xf]
        %v1785 = vld [vmem:[#allocation2 + $0x70] sm:$0xf]
        %v1786 = vld [vmem:[#allocation2 + $0x74] sm:$0xf]
        %v1787 = vld [vmem:[#allocation2 + $0x78] sm:$0xf]
        %v1788 = vld [vmem:[#allocation2 + $0x7c] sm:$0xf]
        %v1789 = vld [vmem:[#allocation2 + $0x80] sm:$0xf]
        %v1790 = vld [vmem:[#allocation2 + $0x84] sm:$0xf]
        %v1791 = vld [vmem:[#allocation2 + $0x88] sm:$0xf]
        %v1792 = vld [vmem:[#allocation2 + $0x8c] sm:$0xf]
        %v1793 = vld [vmem:[#allocation2 + $0x90] sm:$0xf]
        %v1794 = vld [vmem:[#allocation2 + $0x94] sm:$0xf]
        %v1795 = vld [vmem:[#allocation2 + $0x98] sm:$0xf]
        %v1796 = vld [vmem:[#allocation2 + $0x9c] sm:$0xf]
        %v1797 = vld [vmem:[#allocation2 + $0xa0] sm:$0xf]
        %v1798 = vld [vmem:[#allocation2 + $0xa4] sm:$0xf]
        %v1799 = vld [vmem:[#allocation2 + $0xa8] sm:$0xf]
        %v1800 = vld [vmem:[#allocation2 + $0xac] sm:$0xf]
        %v1801 = vld [vmem:[#allocation2 + $0xb0] sm:$0xf]
        %v1802 = vld [vmem:[#allocation2 + $0xb4] sm:$0xf]
        %v1803 = vld [vmem:[#allocation2 + $0xb8] sm:$0xf]
        %v1804 = vld [vmem:[#allocation2 + $0xbc] sm:$0xf]
        %v1805 = vld [vmem:[#allocation2 + $0xc0] sm:$0xf]
        %v1806 = vld [vmem:[#allocation2 + $0xc4] sm:$0xf]
        %v1807 = vld [vmem:[#allocation2 + $0xc8] sm:$0xf]
        %v1808 = vld [vmem:[#allocation2 + $0xcc] sm:$0xf]
        %v1809 = vld [vmem:[#allocation2 + $0xd0] sm:$0xf]
        %v1810 = vld [vmem:[#allocation2 + $0xd4] sm:$0xf]
        %v1811 = vld [vmem:[#allocation2 + $0xd8] sm:$0xf]
        %v1812 = vld [vmem:[#allocation2 + $0xdc] sm:$0xf]
        %v1813 = vld [vmem:[#allocation2 + $0xe0] sm:$0xf]
        %v1814 = vld [vmem:[#allocation2 + $0xe4] sm:$0xf]
        %v1815 = vld [vmem:[#allocation2 + $0xe8] sm:$0xf]
        %v1816 = vld [vmem:[#allocation2 + $0xec] sm:$0xf]
        %v1817 = vld [vmem:[#allocation2 + $0xf0] sm:$0xf]
        %v1818 = vld [vmem:[#allocation2 + $0xf4] sm:$0xf]
        %v1819 = vld [vmem:[#allocation2 + $0xf8] sm:$0xf]
        %v1820 = vld [vmem:[#allocation2 + $0xfc] sm:$0xf]
        %v1837 = vunpack.c.l.b16 %v1693
        %v1838 = vunpack.c.l.b16 %v1694
        %v1839 = vunpack.c.l.b16 %v1695
        %v1840 = vunpack.c.l.b16 %v1696
        %v1841 = vunpack.c.l.b16 %v1697
        %v1842 = vunpack.c.l.b16 %v1698
        %v1843 = vunpack.c.l.b16 %v1699
        %v1844 = vunpack.c.l.b16 %v1700
        %v1845 = vunpack.c.l.b16 %v1701
        %v1846 = vunpack.c.l.b16 %v1702
        %v1847 = vunpack.c.l.b16 %v1703
        %v1848 = vunpack.c.l.b16 %v1704
        %v1849 = vunpack.c.l.b16 %v1705
        %v1850 = vunpack.c.l.b16 %v1706
        %v1851 = vunpack.c.l.b16 %v1707
        %v1852 = vunpack.c.l.b16 %v1708
        %v1853 = vpack.c.b16 %v1838, %v1837
        %v1854 = vpack.c.b16 %v1840, %v1839
        %v1855 = vpack.c.b16 %v1842, %v1841
        %v1856 = vpack.c.b16 %v1844, %v1843
        %v1857 = vpack.c.b16 %v1846, %v1845
        %v1858 = vpack.c.b16 %v1848, %v1847
        %v1859 = vpack.c.b16 %v1850, %v1849
        %v1860 = vpack.c.b16 %v1852, %v1851
        %v1877 = vunpack.c.l.b16 %v1757
        %v1878 = vunpack.c.l.b16 %v1758
        %v1879 = vunpack.c.l.b16 %v1759
        %v1880 = vunpack.c.l.b16 %v1760
        %v1881 = vunpack.c.l.b16 %v1761
        %v1882 = vunpack.c.l.b16 %v1762
        %v1883 = vunpack.c.l.b16 %v1763
        %v1884 = vunpack.c.l.b16 %v1764
        %v1885 = vunpack.c.l.b16 %v1765
        %v1886 = vunpack.c.l.b16 %v1766
        %v1887 = vunpack.c.l.b16 %v1767
        %v1888 = vunpack.c.l.b16 %v1768
        %v1889 = vunpack.c.l.b16 %v1769
        %v1890 = vunpack.c.l.b16 %v1770
        %v1891 = vunpack.c.l.b16 %v1771
        %v1892 = vunpack.c.l.b16 %v1772
        %v1893 = vpack.c.b16 %v1878, %v1877
        %v1894 = vpack.c.b16 %v1880, %v1879
        %v1895 = vpack.c.b16 %v1882, %v1881
        %v1896 = vpack.c.b16 %v1884, %v1883
        %v1897 = vpack.c.b16 %v1886, %v1885
        %v1898 = vpack.c.b16 %v1888, %v1887
        %v1899 = vpack.c.b16 %v1890, %v1889
        %v1900 = vpack.c.b16 %v1892, %v1891
        %vm1901 = vcmask 261120
        %v1903 = vsel %vm1901, %v1853, 0
        %v1906 = vsel %vm1901, %v1854, 0
        %v1909 = vsel %vm1901, %v1855, 0
        %v1912 = vsel %vm1901, %v1856, 0
        %v1915 = vsel %vm1901, %v1857, 0
        %v1918 = vsel %vm1901, %v1858, 0
        %v1921 = vsel %vm1901, %v1859, 0
        %v1924 = vsel %vm1901, %v1860, 0
        %v1927 = vsel %vm1901, %v1893, 0
        %v1930 = vsel %vm1901, %v1894, 0
        %v1933 = vsel %vm1901, %v1895, 0
        %v1936 = vsel %vm1901, %v1896, 0
        %v1939 = vsel %vm1901, %v1897, 0
        %v1942 = vsel %vm1901, %v1898, 0
        %v1945 = vsel %vm1901, %v1899, 0
        %v1948 = vsel %vm1901, %v1900, 0
        %1950 = vmatpush.bf16.xpose.msra.mxu0 %v1948
        %1951 = vmatpush.bf16.xpose.msra.mxu0 %v1945
        %1952 = vmatpush.bf16.xpose.msra.mxu0 %v1942
        %1953 = vmatpush.bf16.xpose.msra.mxu0 %v1939
        %1954 = vmatpush.bf16.xpose.msra.mxu0 %v1936
        %1955 = vmatpush.bf16.xpose.msra.mxu0 %v1933
        %1956 = vmatpush.bf16.xpose.msra.mxu0 %v1930
        %1957 = vmatpush.bf16.xpose.msra.mxu0 %v1927
        %1958 = vmatmul.bf16.gmra.mxu0 %v1903
        %v1959 = vpop.f32.mrf.mxu0
        %v1960 = vadd.f32 0.0, %v1959
        %v1961 = vpop.f32.mrf.mxu0
        %v1962 = vadd.f32 0.0, %v1961
        %1963 = vmatmul.bf16.gmra.mxu0 %v1906
        %v1964 = vpop.f32.mrf.mxu0
        %v1965 = vadd.f32 0.0, %v1964
        %v1966 = vpop.f32.mrf.mxu0
        %v1967 = vadd.f32 0.0, %v1966
        %1968 = vmatmul.bf16.gmra.mxu0 %v1909
        %v1969 = vpop.f32.mrf.mxu0
        %v1970 = vadd.f32 0.0, %v1969
        %v1971 = vpop.f32.mrf.mxu0
        %v1972 = vadd.f32 0.0, %v1971
        %1973 = vmatmul.bf16.gmra.mxu0 %v1912
        %v1974 = vpop.f32.mrf.mxu0
        %v1975 = vadd.f32 0.0, %v1974
        %v1976 = vpop.f32.mrf.mxu0
        %v1977 = vadd.f32 0.0, %v1976
        %1978 = vmatmul.bf16.gmra.mxu0 %v1915
        %v1979 = vpop.f32.mrf.mxu0
        %v1980 = vadd.f32 0.0, %v1979
        %v1981 = vpop.f32.mrf.mxu0
        %v1982 = vadd.f32 0.0, %v1981
        %1983 = vmatmul.bf16.gmra.mxu0 %v1918
        %v1984 = vpop.f32.mrf.mxu0
        %v1985 = vadd.f32 0.0, %v1984
        %v1986 = vpop.f32.mrf.mxu0
        %v1987 = vadd.f32 0.0, %v1986
        %1988 = vmatmul.bf16.gmra.mxu0 %v1921
        %v1989 = vpop.f32.mrf.mxu0
        %v1990 = vadd.f32 0.0, %v1989
        %v1991 = vpop.f32.mrf.mxu0
        %v1992 = vadd.f32 0.0, %v1991
        %1993 = vmatmul.bf16.gmra.mxu0 %v1924
        %v1994 = vpop.f32.mrf.mxu0
        %v1995 = vadd.f32 0.0, %v1994
        %v1996 = vpop.f32.mrf.mxu0
        %v1997 = vadd.f32 0.0, %v1996
        %1998 = vdwg.mxu0
        %v2015 = vunpack.c.l.b16 %v1709
        %v2016 = vunpack.c.l.b16 %v1710
        %v2017 = vunpack.c.l.b16 %v1711
        %v2018 = vunpack.c.l.b16 %v1712
        %v2019 = vunpack.c.l.b16 %v1713
        %v2020 = vunpack.c.l.b16 %v1714
        %v2021 = vunpack.c.l.b16 %v1715
        %v2022 = vunpack.c.l.b16 %v1716
        %v2023 = vunpack.c.l.b16 %v1717
        %v2024 = vunpack.c.l.b16 %v1718
        %v2025 = vunpack.c.l.b16 %v1719
        %v2026 = vunpack.c.l.b16 %v1720
        %v2027 = vunpack.c.l.b16 %v1721
        %v2028 = vunpack.c.l.b16 %v1722
        %v2029 = vunpack.c.l.b16 %v1723
        %v2030 = vunpack.c.l.b16 %v1724
        %v2031 = vpack.c.b16 %v2016, %v2015
        %v2032 = vpack.c.b16 %v2018, %v2017
        %v2033 = vpack.c.b16 %v2020, %v2019
        %v2034 = vpack.c.b16 %v2022, %v2021
        %v2035 = vpack.c.b16 %v2024, %v2023
        %v2036 = vpack.c.b16 %v2026, %v2025
        %v2037 = vpack.c.b16 %v2028, %v2027
        %v2038 = vpack.c.b16 %v2030, %v2029
        %v2055 = vunpack.c.l.b16 %v1773
        %v2056 = vunpack.c.l.b16 %v1774
        %v2057 = vunpack.c.l.b16 %v1775
        %v2058 = vunpack.c.l.b16 %v1776
        %v2059 = vunpack.c.l.b16 %v1777
        %v2060 = vunpack.c.l.b16 %v1778
        %v2061 = vunpack.c.l.b16 %v1779
        %v2062 = vunpack.c.l.b16 %v1780
        %v2063 = vunpack.c.l.b16 %v1781
        %v2064 = vunpack.c.l.b16 %v1782
        %v2065 = vunpack.c.l.b16 %v1783
        %v2066 = vunpack.c.l.b16 %v1784
        %v2067 = vunpack.c.l.b16 %v1785
        %v2068 = vunpack.c.l.b16 %v1786
        %v2069 = vunpack.c.l.b16 %v1787
        %v2070 = vunpack.c.l.b16 %v1788
        %v2071 = vpack.c.b16 %v2056, %v2055
        %v2072 = vpack.c.b16 %v2058, %v2057
        %v2073 = vpack.c.b16 %v2060, %v2059
        %v2074 = vpack.c.b16 %v2062, %v2061
        %v2075 = vpack.c.b16 %v2064, %v2063
        %v2076 = vpack.c.b16 %v2066, %v2065
        %v2077 = vpack.c.b16 %v2068, %v2067
        %v2078 = vpack.c.b16 %v2070, %v2069
        %v2080 = vsel %vm1901, %v2031, 0
        %v2083 = vsel %vm1901, %v2032, 0
        %v2086 = vsel %vm1901, %v2033, 0
        %v2089 = vsel %vm1901, %v2034, 0
        %v2092 = vsel %vm1901, %v2035, 0
        %v2095 = vsel %vm1901, %v2036, 0
        %v2098 = vsel %vm1901, %v2037, 0
        %v2101 = vsel %vm1901, %v2038, 0
        %v2104 = vsel %vm1901, %v2071, 0
        %v2107 = vsel %vm1901, %v2072, 0
        %v2110 = vsel %vm1901, %v2073, 0
        %v2113 = vsel %vm1901, %v2074, 0
        %v2116 = vsel %vm1901, %v2075, 0
        %v2119 = vsel %vm1901, %v2076, 0
        %v2122 = vsel %vm1901, %v2077, 0
        %v2125 = vsel %vm1901, %v2078, 0
        %2127 = vmatpush.bf16.xpose.msra.mxu0 %v2125
        %2128 = vmatpush.bf16.xpose.msra.mxu0 %v2122
        %2129 = vmatpush.bf16.xpose.msra.mxu0 %v2119
        %2130 = vmatpush.bf16.xpose.msra.mxu0 %v2116
        %2131 = vmatpush.bf16.xpose.msra.mxu0 %v2113
        %2132 = vmatpush.bf16.xpose.msra.mxu0 %v2110
        %2133 = vmatpush.bf16.xpose.msra.mxu0 %v2107
        %2134 = vmatpush.bf16.xpose.msra.mxu0 %v2104
        %2135 = vmatmul.bf16.gmra.mxu0 %v2080
        %v2136 = vpop.f32.mrf.mxu0
        %v2137 = vadd.f32 0.0, %v2136
        %v2138 = vpop.f32.mrf.mxu0
        %v2139 = vadd.f32 0.0, %v2138
        %2140 = vmatmul.bf16.gmra.mxu0 %v2083
        %v2141 = vpop.f32.mrf.mxu0
        %v2142 = vadd.f32 0.0, %v2141
        %v2143 = vpop.f32.mrf.mxu0
        %v2144 = vadd.f32 0.0, %v2143
        %2145 = vmatmul.bf16.gmra.mxu0 %v2086
        %v2146 = vpop.f32.mrf.mxu0
        %v2147 = vadd.f32 0.0, %v2146
        %v2148 = vpop.f32.mrf.mxu0
        %v2149 = vadd.f32 0.0, %v2148
        %2150 = vmatmul.bf16.gmra.mxu0 %v2089
        %v2151 = vpop.f32.mrf.mxu0
        %v2152 = vadd.f32 0.0, %v2151
        %v2153 = vpop.f32.mrf.mxu0
        %v2154 = vadd.f32 0.0, %v2153
        %2155 = vmatmul.bf16.gmra.mxu0 %v2092
        %v2156 = vpop.f32.mrf.mxu0
        %v2157 = vadd.f32 0.0, %v2156
        %v2158 = vpop.f32.mrf.mxu0
        %v2159 = vadd.f32 0.0, %v2158
        %2160 = vmatmul.bf16.gmra.mxu0 %v2095
        %v2161 = vpop.f32.mrf.mxu0
        %v2162 = vadd.f32 0.0, %v2161
        %v2163 = vpop.f32.mrf.mxu0
        %v2164 = vadd.f32 0.0, %v2163
        %2165 = vmatmul.bf16.gmra.mxu0 %v2098
        %v2166 = vpop.f32.mrf.mxu0
        %v2167 = vadd.f32 0.0, %v2166
        %v2168 = vpop.f32.mrf.mxu0
        %v2169 = vadd.f32 0.0, %v2168
        %2170 = vmatmul.bf16.gmra.mxu0 %v2101
        %v2171 = vpop.f32.mrf.mxu0
        %v2172 = vadd.f32 0.0, %v2171
        %v2173 = vpop.f32.mrf.mxu0
        %v2174 = vadd.f32 0.0, %v2173
        %2175 = vdwg.mxu0
        %v2192 = vunpack.c.l.b16 %v1725
        %v2193 = vunpack.c.l.b16 %v1726
        %v2194 = vunpack.c.l.b16 %v1727
        %v2195 = vunpack.c.l.b16 %v1728
        %v2196 = vunpack.c.l.b16 %v1729
        %v2197 = vunpack.c.l.b16 %v1730
        %v2198 = vunpack.c.l.b16 %v1731
        %v2199 = vunpack.c.l.b16 %v1732
        %v2200 = vunpack.c.l.b16 %v1733
        %v2201 = vunpack.c.l.b16 %v1734
        %v2202 = vunpack.c.l.b16 %v1735
        %v2203 = vunpack.c.l.b16 %v1736
        %v2204 = vunpack.c.l.b16 %v1737
        %v2205 = vunpack.c.l.b16 %v1738
        %v2206 = vunpack.c.l.b16 %v1739
        %v2207 = vunpack.c.l.b16 %v1740
        %v2208 = vpack.c.b16 %v2193, %v2192
        %v2209 = vpack.c.b16 %v2195, %v2194
        %v2210 = vpack.c.b16 %v2197, %v2196
        %v2211 = vpack.c.b16 %v2199, %v2198
        %v2212 = vpack.c.b16 %v2201, %v2200
        %v2213 = vpack.c.b16 %v2203, %v2202
        %v2214 = vpack.c.b16 %v2205, %v2204
        %v2215 = vpack.c.b16 %v2207, %v2206
        %v2232 = vunpack.c.l.b16 %v1789
        %v2233 = vunpack.c.l.b16 %v1790
        %v2234 = vunpack.c.l.b16 %v1791
        %v2235 = vunpack.c.l.b16 %v1792
        %v2236 = vunpack.c.l.b16 %v1793
        %v2237 = vunpack.c.l.b16 %v1794
        %v2238 = vunpack.c.l.b16 %v1795
        %v2239 = vunpack.c.l.b16 %v1796
        %v2240 = vunpack.c.l.b16 %v1797
        %v2241 = vunpack.c.l.b16 %v1798
        %v2242 = vunpack.c.l.b16 %v1799
        %v2243 = vunpack.c.l.b16 %v1800
        %v2244 = vunpack.c.l.b16 %v1801
        %v2245 = vunpack.c.l.b16 %v1802
        %v2246 = vunpack.c.l.b16 %v1803
        %v2247 = vunpack.c.l.b16 %v1804
        %v2248 = vpack.c.b16 %v2233, %v2232
        %v2249 = vpack.c.b16 %v2235, %v2234
        %v2250 = vpack.c.b16 %v2237, %v2236
        %v2251 = vpack.c.b16 %v2239, %v2238
        %v2252 = vpack.c.b16 %v2241, %v2240
        %v2253 = vpack.c.b16 %v2243, %v2242
        %v2254 = vpack.c.b16 %v2245, %v2244
        %v2255 = vpack.c.b16 %v2247, %v2246
        %v2257 = vsel %vm1901, %v2208, 0
        %v2260 = vsel %vm1901, %v2209, 0
        %v2263 = vsel %vm1901, %v2210, 0
        %v2266 = vsel %vm1901, %v2211, 0
        %v2269 = vsel %vm1901, %v2212, 0
        %v2272 = vsel %vm1901, %v2213, 0
        %v2275 = vsel %vm1901, %v2214, 0
        %v2278 = vsel %vm1901, %v2215, 0
        %v2281 = vsel %vm1901, %v2248, 0
        %v2284 = vsel %vm1901, %v2249, 0
        %v2287 = vsel %vm1901, %v2250, 0
        %v2290 = vsel %vm1901, %v2251, 0
        %v2293 = vsel %vm1901, %v2252, 0
        %v2296 = vsel %vm1901, %v2253, 0
        %v2299 = vsel %vm1901, %v2254, 0
        %v2302 = vsel %vm1901, %v2255, 0
        %2304 = vmatpush.bf16.xpose.msra.mxu0 %v2302
        %2305 = vmatpush.bf16.xpose.msra.mxu0 %v2299
        %2306 = vmatpush.bf16.xpose.msra.mxu0 %v2296
        %2307 = vmatpush.bf16.xpose.msra.mxu0 %v2293
        %2308 = vmatpush.bf16.xpose.msra.mxu0 %v2290
        %2309 = vmatpush.bf16.xpose.msra.mxu0 %v2287
        %2310 = vmatpush.bf16.xpose.msra.mxu0 %v2284
        %2311 = vmatpush.bf16.xpose.msra.mxu0 %v2281
        %2312 = vmatmul.bf16.gmra.mxu0 %v2257
        %v2313 = vpop.f32.mrf.mxu0
        %v2314 = vadd.f32 0.0, %v2313
        %v2315 = vpop.f32.mrf.mxu0
        %v2316 = vadd.f32 0.0, %v2315
        %2317 = vmatmul.bf16.gmra.mxu0 %v2260
        %v2318 = vpop.f32.mrf.mxu0
        %v2319 = vadd.f32 0.0, %v2318
        %v2320 = vpop.f32.mrf.mxu0
        %v2321 = vadd.f32 0.0, %v2320
        %2322 = vmatmul.bf16.gmra.mxu0 %v2263
        %v2323 = vpop.f32.mrf.mxu0
        %v2324 = vadd.f32 0.0, %v2323
        %v2325 = vpop.f32.mrf.mxu0
        %v2326 = vadd.f32 0.0, %v2325
        %2327 = vmatmul.bf16.gmra.mxu0 %v2266
        %v2328 = vpop.f32.mrf.mxu0
        %v2329 = vadd.f32 0.0, %v2328
        %v2330 = vpop.f32.mrf.mxu0
        %v2331 = vadd.f32 0.0, %v2330
        %2332 = vmatmul.bf16.gmra.mxu0 %v2269
        %v2333 = vpop.f32.mrf.mxu0
        %v2334 = vadd.f32 0.0, %v2333
        %v2335 = vpop.f32.mrf.mxu0
        %v2336 = vadd.f32 0.0, %v2335
        %2337 = vmatmul.bf16.gmra.mxu0 %v2272
        %v2338 = vpop.f32.mrf.mxu0
        %v2339 = vadd.f32 0.0, %v2338
        %v2340 = vpop.f32.mrf.mxu0
        %v2341 = vadd.f32 0.0, %v2340
        %2342 = vmatmul.bf16.gmra.mxu0 %v2275
        %v2343 = vpop.f32.mrf.mxu0
        %v2344 = vadd.f32 0.0, %v2343
        %v2345 = vpop.f32.mrf.mxu0
        %v2346 = vadd.f32 0.0, %v2345
        %2347 = vmatmul.bf16.gmra.mxu0 %v2278
        %v2348 = vpop.f32.mrf.mxu0
        %v2349 = vadd.f32 0.0, %v2348
        %v2350 = vpop.f32.mrf.mxu0
        %v2351 = vadd.f32 0.0, %v2350
        %2352 = vdwg.mxu0
        %v2369 = vunpack.c.l.b16 %v1741
        %v2370 = vunpack.c.l.b16 %v1742
        %v2371 = vunpack.c.l.b16 %v1743
        %v2372 = vunpack.c.l.b16 %v1744
        %v2373 = vunpack.c.l.b16 %v1745
        %v2374 = vunpack.c.l.b16 %v1746
        %v2375 = vunpack.c.l.b16 %v1747
        %v2376 = vunpack.c.l.b16 %v1748
        %v2377 = vunpack.c.l.b16 %v1749
        %v2378 = vunpack.c.l.b16 %v1750
        %v2379 = vunpack.c.l.b16 %v1751
        %v2380 = vunpack.c.l.b16 %v1752
        %v2381 = vunpack.c.l.b16 %v1753
        %v2382 = vunpack.c.l.b16 %v1754
        %v2383 = vunpack.c.l.b16 %v1755
        %v2384 = vunpack.c.l.b16 %v1756
        %v2385 = vpack.c.b16 %v2370, %v2369
        %v2386 = vpack.c.b16 %v2372, %v2371
        %v2387 = vpack.c.b16 %v2374, %v2373
        %v2388 = vpack.c.b16 %v2376, %v2375
        %v2389 = vpack.c.b16 %v2378, %v2377
        %v2390 = vpack.c.b16 %v2380, %v2379
        %v2391 = vpack.c.b16 %v2382, %v2381
        %v2392 = vpack.c.b16 %v2384, %v2383
        %v2409 = vunpack.c.l.b16 %v1805
        %v2410 = vunpack.c.l.b16 %v1806
        %v2411 = vunpack.c.l.b16 %v1807
        %v2412 = vunpack.c.l.b16 %v1808
        %v2413 = vunpack.c.l.b16 %v1809
        %v2414 = vunpack.c.l.b16 %v1810
        %v2415 = vunpack.c.l.b16 %v1811
        %v2416 = vunpack.c.l.b16 %v1812
        %v2417 = vunpack.c.l.b16 %v1813
        %v2418 = vunpack.c.l.b16 %v1814
        %v2419 = vunpack.c.l.b16 %v1815
        %v2420 = vunpack.c.l.b16 %v1816
        %v2421 = vunpack.c.l.b16 %v1817
        %v2422 = vunpack.c.l.b16 %v1818
        %v2423 = vunpack.c.l.b16 %v1819
        %v2424 = vunpack.c.l.b16 %v1820
        %v2425 = vpack.c.b16 %v2410, %v2409
        %v2426 = vpack.c.b16 %v2412, %v2411
        %v2427 = vpack.c.b16 %v2414, %v2413
        %v2428 = vpack.c.b16 %v2416, %v2415
        %v2429 = vpack.c.b16 %v2418, %v2417
        %v2430 = vpack.c.b16 %v2420, %v2419
        %v2431 = vpack.c.b16 %v2422, %v2421
        %v2432 = vpack.c.b16 %v2424, %v2423
        %v2434 = vsel %vm1901, %v2385, 0
        %v2437 = vsel %vm1901, %v2386, 0
        %v2440 = vsel %vm1901, %v2387, 0
        %v2443 = vsel %vm1901, %v2388, 0
        %v2446 = vsel %vm1901, %v2389, 0
        %v2449 = vsel %vm1901, %v2390, 0
        %v2452 = vsel %vm1901, %v2391, 0
        %v2455 = vsel %vm1901, %v2392, 0
        %v2458 = vsel %vm1901, %v2425, 0
        %v2461 = vsel %vm1901, %v2426, 0
        %v2464 = vsel %vm1901, %v2427, 0
        %v2467 = vsel %vm1901, %v2428, 0
        %v2470 = vsel %vm1901, %v2429, 0
        %v2473 = vsel %vm1901, %v2430, 0
        %v2476 = vsel %vm1901, %v2431, 0
        %v2479 = vsel %vm1901, %v2432, 0
        %2481 = vmatpush.bf16.xpose.msra.mxu0 %v2479
        %2482 = vmatpush.bf16.xpose.msra.mxu0 %v2476
        %2483 = vmatpush.bf16.xpose.msra.mxu0 %v2473
        %2484 = vmatpush.bf16.xpose.msra.mxu0 %v2470
        %2485 = vmatpush.bf16.xpose.msra.mxu0 %v2467
        %2486 = vmatpush.bf16.xpose.msra.mxu0 %v2464
        %2487 = vmatpush.bf16.xpose.msra.mxu0 %v2461
        %2488 = vmatpush.bf16.xpose.msra.mxu0 %v2458
        %2489 = vmatmul.bf16.gmra.mxu0 %v2434
        %v2490 = vpop.f32.mrf.mxu0
        %v2491 = vadd.f32 0.0, %v2490
        %v2492 = vpop.f32.mrf.mxu0
        %v2493 = vadd.f32 0.0, %v2492
        %2494 = vmatmul.bf16.gmra.mxu0 %v2437
        %v2495 = vpop.f32.mrf.mxu0
        %v2496 = vadd.f32 0.0, %v2495
        %v2497 = vpop.f32.mrf.mxu0
        %v2498 = vadd.f32 0.0, %v2497
        %2499 = vmatmul.bf16.gmra.mxu0 %v2440
        %v2500 = vpop.f32.mrf.mxu0
        %v2501 = vadd.f32 0.0, %v2500
        %v2502 = vpop.f32.mrf.mxu0
        %v2503 = vadd.f32 0.0, %v2502
        %2504 = vmatmul.bf16.gmra.mxu0 %v2443
        %v2505 = vpop.f32.mrf.mxu0
        %v2506 = vadd.f32 0.0, %v2505
        %v2507 = vpop.f32.mrf.mxu0
        %v2508 = vadd.f32 0.0, %v2507
        %2509 = vmatmul.bf16.gmra.mxu0 %v2446
        %v2510 = vpop.f32.mrf.mxu0
        %v2511 = vadd.f32 0.0, %v2510
        %v2512 = vpop.f32.mrf.mxu0
        %v2513 = vadd.f32 0.0, %v2512
        %2514 = vmatmul.bf16.gmra.mxu0 %v2449
        %v2515 = vpop.f32.mrf.mxu0
        %v2516 = vadd.f32 0.0, %v2515
        %v2517 = vpop.f32.mrf.mxu0
        %v2518 = vadd.f32 0.0, %v2517
        %2519 = vmatmul.bf16.gmra.mxu0 %v2452
        %v2520 = vpop.f32.mrf.mxu0
        %v2521 = vadd.f32 0.0, %v2520
        %v2522 = vpop.f32.mrf.mxu0
        %v2523 = vadd.f32 0.0, %v2522
        %2524 = vmatmul.bf16.gmra.mxu0 %v2455
        %v2525 = vpop.f32.mrf.mxu0
        %v2526 = vadd.f32 0.0, %v2525
        %v2527 = vpop.f32.mrf.mxu0
        %v2528 = vadd.f32 0.0, %v2527
        %2529 = vdwg.mxu0
        %2530 = vmax.xlane.f32.xlu0 %v1960
        %v2531 = vpop.xlane.xlu0 %2530
        %2532 = vmax.xlane.f32.xlu0 %v1962
        %v2533 = vpop.xlane.xlu0 %2532
        %2534 = vmax.xlane.f32.xlu0 %v1965
        %v2535 = vpop.xlane.xlu0 %2534
        %2536 = vmax.xlane.f32.xlu0 %v1967
        %v2537 = vpop.xlane.xlu0 %2536
        %2538 = vmax.xlane.f32.xlu0 %v1970
        %v2539 = vpop.xlane.xlu0 %2538
        %2540 = vmax.xlane.f32.xlu0 %v1972
        %v2541 = vpop.xlane.xlu0 %2540
        %2542 = vmax.xlane.f32.xlu0 %v1975
        %v2543 = vpop.xlane.xlu0 %2542
        %2544 = vmax.xlane.f32.xlu0 %v1977
        %v2545 = vpop.xlane.xlu0 %2544
        %2546 = vmax.xlane.f32.xlu0 %v1980
        %v2547 = vpop.xlane.xlu0 %2546
        %2548 = vmax.xlane.f32.xlu0 %v1982
        %v2549 = vpop.xlane.xlu0 %2548
        %2550 = vmax.xlane.f32.xlu0 %v1985
        %v2551 = vpop.xlane.xlu0 %2550
        %2552 = vmax.xlane.f32.xlu0 %v1987
        %v2553 = vpop.xlane.xlu0 %2552
        %2554 = vmax.xlane.f32.xlu0 %v1990
        %v2555 = vpop.xlane.xlu0 %2554
        %2556 = vmax.xlane.f32.xlu0 %v1992
        %v2557 = vpop.xlane.xlu0 %2556
        %2558 = vmax.xlane.f32.xlu0 %v1995
        %v2559 = vpop.xlane.xlu0 %2558
        %2560 = vmax.xlane.f32.xlu0 %v1997
        %v2561 = vpop.xlane.xlu0 %2560
        %2562 = vmax.xlane.f32.xlu0 %v2137
        %v2563 = vpop.xlane.xlu0 %2562
        %2564 = vmax.xlane.f32.xlu0 %v2139
        %v2565 = vpop.xlane.xlu0 %2564
        %2566 = vmax.xlane.f32.xlu0 %v2142
        %v2567 = vpop.xlane.xlu0 %2566
        %2568 = vmax.xlane.f32.xlu0 %v2144
        %v2569 = vpop.xlane.xlu0 %2568
        %2570 = vmax.xlane.f32.xlu0 %v2147
        %v2571 = vpop.xlane.xlu0 %2570
        %2572 = vmax.xlane.f32.xlu0 %v2149
        %v2573 = vpop.xlane.xlu0 %2572
        %2574 = vmax.xlane.f32.xlu0 %v2152
        %v2575 = vpop.xlane.xlu0 %2574
        %2576 = vmax.xlane.f32.xlu0 %v2154
        %v2577 = vpop.xlane.xlu0 %2576
        %2578 = vmax.xlane.f32.xlu0 %v2157
        %v2579 = vpop.xlane.xlu0 %2578
        %2580 = vmax.xlane.f32.xlu0 %v2159
        %v2581 = vpop.xlane.xlu0 %2580
        %2582 = vmax.xlane.f32.xlu0 %v2162
        %v2583 = vpop.xlane.xlu0 %2582
        %2584 = vmax.xlane.f32.xlu0 %v2164
        %v2585 = vpop.xlane.xlu0 %2584
        %2586 = vmax.xlane.f32.xlu0 %v2167
        %v2587 = vpop.xlane.xlu0 %2586
        %2588 = vmax.xlane.f32.xlu0 %v2169
        %v2589 = vpop.xlane.xlu0 %2588
        %2590 = vmax.xlane.f32.xlu0 %v2172
        %v2591 = vpop.xlane.xlu0 %2590
        %2592 = vmax.xlane.f32.xlu0 %v2174
        %v2593 = vpop.xlane.xlu0 %2592
        %2594 = vmax.xlane.f32.xlu0 %v2314
        %v2595 = vpop.xlane.xlu0 %2594
        %2596 = vmax.xlane.f32.xlu0 %v2316
        %v2597 = vpop.xlane.xlu0 %2596
        %2598 = vmax.xlane.f32.xlu0 %v2319
        %v2599 = vpop.xlane.xlu0 %2598
        %2600 = vmax.xlane.f32.xlu0 %v2321
        %v2601 = vpop.xlane.xlu0 %2600
        %2602 = vmax.xlane.f32.xlu0 %v2324
        %v2603 = vpop.xlane.xlu0 %2602
        %2604 = vmax.xlane.f32.xlu0 %v2326
        %v2605 = vpop.xlane.xlu0 %2604
        %2606 = vmax.xlane.f32.xlu0 %v2329
        %v2607 = vpop.xlane.xlu0 %2606
        %2608 = vmax.xlane.f32.xlu0 %v2331
        %v2609 = vpop.xlane.xlu0 %2608
        %2610 = vmax.xlane.f32.xlu0 %v2334
        %v2611 = vpop.xlane.xlu0 %2610
        %2612 = vmax.xlane.f32.xlu0 %v2336
        %v2613 = vpop.xlane.xlu0 %2612
        %2614 = vmax.xlane.f32.xlu0 %v2339
        %v2615 = vpop.xlane.xlu0 %2614
        %2616 = vmax.xlane.f32.xlu0 %v2341
        %v2617 = vpop.xlane.xlu0 %2616
        %2618 = vmax.xlane.f32.xlu0 %v2344
        %v2619 = vpop.xlane.xlu0 %2618
        %2620 = vmax.xlane.f32.xlu0 %v2346
        %v2621 = vpop.xlane.xlu0 %2620
        %2622 = vmax.xlane.f32.xlu0 %v2349
        %v2623 = vpop.xlane.xlu0 %2622
        %2624 = vmax.xlane.f32.xlu0 %v2351
        %v2625 = vpop.xlane.xlu0 %2624
        %2626 = vmax.xlane.f32.xlu0 %v2491
        %v2627 = vpop.xlane.xlu0 %2626
        %2628 = vmax.xlane.f32.xlu0 %v2493
        %v2629 = vpop.xlane.xlu0 %2628
        %2630 = vmax.xlane.f32.xlu0 %v2496
        %v2631 = vpop.xlane.xlu0 %2630
        %2632 = vmax.xlane.f32.xlu0 %v2498
        %v2633 = vpop.xlane.xlu0 %2632
        %2634 = vmax.xlane.f32.xlu0 %v2501
        %v2635 = vpop.xlane.xlu0 %2634
        %2636 = vmax.xlane.f32.xlu0 %v2503
        %v2637 = vpop.xlane.xlu0 %2636
        %2638 = vmax.xlane.f32.xlu0 %v2506
        %v2639 = vpop.xlane.xlu0 %2638
        %2640 = vmax.xlane.f32.xlu0 %v2508
        %v2641 = vpop.xlane.xlu0 %2640
        %2642 = vmax.xlane.f32.xlu0 %v2511
        %v2643 = vpop.xlane.xlu0 %2642
        %2644 = vmax.xlane.f32.xlu0 %v2513
        %v2645 = vpop.xlane.xlu0 %2644
        %2646 = vmax.xlane.f32.xlu0 %v2516
        %v2647 = vpop.xlane.xlu0 %2646
        %2648 = vmax.xlane.f32.xlu0 %v2518
        %v2649 = vpop.xlane.xlu0 %2648
        %2650 = vmax.xlane.f32.xlu0 %v2521
        %v2651 = vpop.xlane.xlu0 %2650
        %2652 = vmax.xlane.f32.xlu0 %v2523
        %v2653 = vpop.xlane.xlu0 %2652
        %2654 = vmax.xlane.f32.xlu0 %v2526
        %v2655 = vpop.xlane.xlu0 %2654
        %2656 = vmax.xlane.f32.xlu0 %v2528
        %v2657 = vpop.xlane.xlu0 %2656
        %v2658 = vsub.f32 %v1960, %v2531
        %v2659 = vsub.f32 %v1962, %v2533
        %v2660 = vsub.f32 %v1965, %v2535
        %v2661 = vsub.f32 %v1967, %v2537
        %v2662 = vsub.f32 %v1970, %v2539
        %v2663 = vsub.f32 %v1972, %v2541
        %v2664 = vsub.f32 %v1975, %v2543
        %v2665 = vsub.f32 %v1977, %v2545
        %v2666 = vsub.f32 %v1980, %v2547
        %v2667 = vsub.f32 %v1982, %v2549
        %v2668 = vsub.f32 %v1985, %v2551
        %v2669 = vsub.f32 %v1987, %v2553
        %v2670 = vsub.f32 %v1990, %v2555
        %v2671 = vsub.f32 %v1992, %v2557
        %v2672 = vsub.f32 %v1995, %v2559
        %v2673 = vsub.f32 %v1997, %v2561
        %v2674 = vsub.f32 %v2137, %v2563
        %v2675 = vsub.f32 %v2139, %v2565
        %v2676 = vsub.f32 %v2142, %v2567
        %v2677 = vsub.f32 %v2144, %v2569
        %v2678 = vsub.f32 %v2147, %v2571
        %v2679 = vsub.f32 %v2149, %v2573
        %v2680 = vsub.f32 %v2152, %v2575
        %v2681 = vsub.f32 %v2154, %v2577
        %v2682 = vsub.f32 %v2157, %v2579
        %v2683 = vsub.f32 %v2159, %v2581
        %v2684 = vsub.f32 %v2162, %v2583
        %v2685 = vsub.f32 %v2164, %v2585
        %v2686 = vsub.f32 %v2167, %v2587
        %v2687 = vsub.f32 %v2169, %v2589
        %v2688 = vsub.f32 %v2172, %v2591
        %v2689 = vsub.f32 %v2174, %v2593
        %v2690 = vsub.f32 %v2314, %v2595
        %v2691 = vsub.f32 %v2316, %v2597
        %v2692 = vsub.f32 %v2319, %v2599
        %v2693 = vsub.f32 %v2321, %v2601
        %v2694 = vsub.f32 %v2324, %v2603
        %v2695 = vsub.f32 %v2326, %v2605
        %v2696 = vsub.f32 %v2329, %v2607
        %v2697 = vsub.f32 %v2331, %v2609
        %v2698 = vsub.f32 %v2334, %v2611
        %v2699 = vsub.f32 %v2336, %v2613
        %v2700 = vsub.f32 %v2339, %v2615
        %v2701 = vsub.f32 %v2341, %v2617
        %v2702 = vsub.f32 %v2344, %v2619
        %v2703 = vsub.f32 %v2346, %v2621
        %v2704 = vsub.f32 %v2349, %v2623
        %v2705 = vsub.f32 %v2351, %v2625
        %v2706 = vsub.f32 %v2491, %v2627
        %v2707 = vsub.f32 %v2493, %v2629
        %v2708 = vsub.f32 %v2496, %v2631
        %v2709 = vsub.f32 %v2498, %v2633
        %v2710 = vsub.f32 %v2501, %v2635
        %v2711 = vsub.f32 %v2503, %v2637
        %v2712 = vsub.f32 %v2506, %v2639
        %v2713 = vsub.f32 %v2508, %v2641
        %v2714 = vsub.f32 %v2511, %v2643
        %v2715 = vsub.f32 %v2513, %v2645
        %v2716 = vsub.f32 %v2516, %v2647
        %v2717 = vsub.f32 %v2518, %v2649
        %v2718 = vsub.f32 %v2521, %v2651
        %v2719 = vsub.f32 %v2523, %v2653
        %v2720 = vsub.f32 %v2526, %v2655
        %v2721 = vsub.f32 %v2528, %v2657
        %v2722 = vmul.f32 %v2658, 1.442695
        %v2723 = vpow.pop %v2722
        %v2724 = vmul.f32 %v2659, 1.442695
        %v2725 = vpow.pop %v2724
        %v2726 = vmul.f32 %v2660, 1.442695
        %v2727 = vpow.pop %v2726
        %v2728 = vmul.f32 %v2661, 1.442695
        %v2729 = vpow.pop %v2728
        %v2730 = vmul.f32 %v2662, 1.442695
        %v2731 = vpow.pop %v2730
        %v2732 = vmul.f32 %v2663, 1.442695
        %v2733 = vpow.pop %v2732
        %v2734 = vmul.f32 %v2664, 1.442695
        %v2735 = vpow.pop %v2734
        %v2736 = vmul.f32 %v2665, 1.442695
        %v2737 = vpow.pop %v2736
        %v2738 = vmul.f32 %v2666, 1.442695
        %v2739 = vpow.pop %v2738
        %v2740 = vmul.f32 %v2667, 1.442695
        %v2741 = vpow.pop %v2740
        %v2742 = vmul.f32 %v2668, 1.442695
        %v2743 = vpow.pop %v2742
        %v2744 = vmul.f32 %v2669, 1.442695
        %v2745 = vpow.pop %v2744
        %v2746 = vmul.f32 %v2670, 1.442695
        %v2747 = vpow.pop %v2746
        %v2748 = vmul.f32 %v2671, 1.442695
        %v2749 = vpow.pop %v2748
        %v2750 = vmul.f32 %v2672, 1.442695
        %v2751 = vpow.pop %v2750
        %v2752 = vmul.f32 %v2673, 1.442695
        %v2753 = vpow.pop %v2752
        %v2754 = vmul.f32 %v2674, 1.442695
        %v2755 = vpow.pop %v2754
        %v2756 = vmul.f32 %v2675, 1.442695
        %v2757 = vpow.pop %v2756
        %v2758 = vmul.f32 %v2676, 1.442695
        %v2759 = vpow.pop %v2758
        %v2760 = vmul.f32 %v2677, 1.442695
        %v2761 = vpow.pop %v2760
        %v2762 = vmul.f32 %v2678, 1.442695
        %v2763 = vpow.pop %v2762
        %v2764 = vmul.f32 %v2679, 1.442695
        %v2765 = vpow.pop %v2764
        %v2766 = vmul.f32 %v2680, 1.442695
        %v2767 = vpow.pop %v2766
        %v2768 = vmul.f32 %v2681, 1.442695
        %v2769 = vpow.pop %v2768
        %v2770 = vmul.f32 %v2682, 1.442695
        %v2771 = vpow.pop %v2770
        %v2772 = vmul.f32 %v2683, 1.442695
        %v2773 = vpow.pop %v2772
        %v2774 = vmul.f32 %v2684, 1.442695
        %v2775 = vpow.pop %v2774
        %v2776 = vmul.f32 %v2685, 1.442695
        %v2777 = vpow.pop %v2776
        %v2778 = vmul.f32 %v2686, 1.442695
        %v2779 = vpow.pop %v2778
        %v2780 = vmul.f32 %v2687, 1.442695
        %v2781 = vpow.pop %v2780
        %v2782 = vmul.f32 %v2688, 1.442695
        %v2783 = vpow.pop %v2782
        %v2784 = vmul.f32 %v2689, 1.442695
        %v2785 = vpow.pop %v2784
        %v2786 = vmul.f32 %v2690, 1.442695
        %v2787 = vpow.pop %v2786
        %v2788 = vmul.f32 %v2691, 1.442695
        %v2789 = vpow.pop %v2788
        %v2790 = vmul.f32 %v2692, 1.442695
        %v2791 = vpow.pop %v2790
        %v2792 = vmul.f32 %v2693, 1.442695
        %v2793 = vpow.pop %v2792
        %v2794 = vmul.f32 %v2694, 1.442695
        %v2795 = vpow.pop %v2794
        %v2796 = vmul.f32 %v2695, 1.442695
        %v2797 = vpow.pop %v2796
        %v2798 = vmul.f32 %v2696, 1.442695
        %v2799 = vpow.pop %v2798
        %v2800 = vmul.f32 %v2697, 1.442695
        %v2801 = vpow.pop %v2800
        %v2802 = vmul.f32 %v2698, 1.442695
        %v2803 = vpow.pop %v2802
        %v2804 = vmul.f32 %v2699, 1.442695
        %v2805 = vpow.pop %v2804
        %v2806 = vmul.f32 %v2700, 1.442695
        %v2807 = vpow.pop %v2806
        %v2808 = vmul.f32 %v2701, 1.442695
        %v2809 = vpow.pop %v2808
        %v2810 = vmul.f32 %v2702, 1.442695
        %v2811 = vpow.pop %v2810
        %v2812 = vmul.f32 %v2703, 1.442695
        %v2813 = vpow.pop %v2812
        %v2814 = vmul.f32 %v2704, 1.442695
        %v2815 = vpow.pop %v2814
        %v2816 = vmul.f32 %v2705, 1.442695
        %v2817 = vpow.pop %v2816
        %v2818 = vmul.f32 %v2706, 1.442695
        %v2819 = vpow.pop %v2818
        %v2820 = vmul.f32 %v2707, 1.442695
        %v2821 = vpow.pop %v2820
        %v2822 = vmul.f32 %v2708, 1.442695
        %v2823 = vpow.pop %v2822
        %v2824 = vmul.f32 %v2709, 1.442695
        %v2825 = vpow.pop %v2824
        %v2826 = vmul.f32 %v2710, 1.442695
        %v2827 = vpow.pop %v2826
        %v2828 = vmul.f32 %v2711, 1.442695
        %v2829 = vpow.pop %v2828
        %v2830 = vmul.f32 %v2712, 1.442695
        %v2831 = vpow.pop %v2830
        %v2832 = vmul.f32 %v2713, 1.442695
        %v2833 = vpow.pop %v2832
        %v2834 = vmul.f32 %v2714, 1.442695
        %v2835 = vpow.pop %v2834
        %v2836 = vmul.f32 %v2715, 1.442695
        %v2837 = vpow.pop %v2836
        %v2838 = vmul.f32 %v2716, 1.442695
        %v2839 = vpow.pop %v2838
        %v2840 = vmul.f32 %v2717, 1.442695
        %v2841 = vpow.pop %v2840
        %v2842 = vmul.f32 %v2718, 1.442695
        %v2843 = vpow.pop %v2842
        %v2844 = vmul.f32 %v2719, 1.442695
        %v2845 = vpow.pop %v2844
        %v2846 = vmul.f32 %v2720, 1.442695
        %v2847 = vpow.pop %v2846
        %v2848 = vmul.f32 %v2721, 1.442695
        %v2849 = vpow.pop %v2848
        %2850 = vadd.xlane.f32.xlu0 %v2723
        %v2851 = vpop.xlane.xlu0 %2850
        %2852 = vadd.xlane.f32.xlu0 %v2725
        %v2853 = vpop.xlane.xlu0 %2852
        %2854 = vadd.xlane.f32.xlu0 %v2727
        %v2855 = vpop.xlane.xlu0 %2854
        %2856 = vadd.xlane.f32.xlu0 %v2729
        %v2857 = vpop.xlane.xlu0 %2856
        %2858 = vadd.xlane.f32.xlu0 %v2731
        %v2859 = vpop.xlane.xlu0 %2858
        %2860 = vadd.xlane.f32.xlu0 %v2733
        %v2861 = vpop.xlane.xlu0 %2860
        %2862 = vadd.xlane.f32.xlu0 %v2735
        %v2863 = vpop.xlane.xlu0 %2862
        %2864 = vadd.xlane.f32.xlu0 %v2737
        %v2865 = vpop.xlane.xlu0 %2864
        %2866 = vadd.xlane.f32.xlu0 %v2739
        %v2867 = vpop.xlane.xlu0 %2866
        %2868 = vadd.xlane.f32.xlu0 %v2741
        %v2869 = vpop.xlane.xlu0 %2868
        %2870 = vadd.xlane.f32.xlu0 %v2743
        %v2871 = vpop.xlane.xlu0 %2870
        %2872 = vadd.xlane.f32.xlu0 %v2745
        %v2873 = vpop.xlane.xlu0 %2872
        %2874 = vadd.xlane.f32.xlu0 %v2747
        %v2875 = vpop.xlane.xlu0 %2874
        %2876 = vadd.xlane.f32.xlu0 %v2749
        %v2877 = vpop.xlane.xlu0 %2876
        %2878 = vadd.xlane.f32.xlu0 %v2751
        %v2879 = vpop.xlane.xlu0 %2878
        %2880 = vadd.xlane.f32.xlu0 %v2753
        %v2881 = vpop.xlane.xlu0 %2880
        %2882 = vadd.xlane.f32.xlu0 %v2755
        %v2883 = vpop.xlane.xlu0 %2882
        %2884 = vadd.xlane.f32.xlu0 %v2757
        %v2885 = vpop.xlane.xlu0 %2884
        %2886 = vadd.xlane.f32.xlu0 %v2759
        %v2887 = vpop.xlane.xlu0 %2886
        %2888 = vadd.xlane.f32.xlu0 %v2761
        %v2889 = vpop.xlane.xlu0 %2888
        %2890 = vadd.xlane.f32.xlu0 %v2763
        %v2891 = vpop.xlane.xlu0 %2890
        %2892 = vadd.xlane.f32.xlu0 %v2765
        %v2893 = vpop.xlane.xlu0 %2892
        %2894 = vadd.xlane.f32.xlu0 %v2767
        %v2895 = vpop.xlane.xlu0 %2894
        %2896 = vadd.xlane.f32.xlu0 %v2769
        %v2897 = vpop.xlane.xlu0 %2896
        %2898 = vadd.xlane.f32.xlu0 %v2771
        %v2899 = vpop.xlane.xlu0 %2898
        %2900 = vadd.xlane.f32.xlu0 %v2773
        %v2901 = vpop.xlane.xlu0 %2900
        %2902 = vadd.xlane.f32.xlu0 %v2775
        %v2903 = vpop.xlane.xlu0 %2902
        %2904 = vadd.xlane.f32.xlu0 %v2777
        %v2905 = vpop.xlane.xlu0 %2904
        %2906 = vadd.xlane.f32.xlu0 %v2779
        %v2907 = vpop.xlane.xlu0 %2906
        %2908 = vadd.xlane.f32.xlu0 %v2781
        %v2909 = vpop.xlane.xlu0 %2908
        %2910 = vadd.xlane.f32.xlu0 %v2783
        %v2911 = vpop.xlane.xlu0 %2910
        %2912 = vadd.xlane.f32.xlu0 %v2785
        %v2913 = vpop.xlane.xlu0 %2912
        %2914 = vadd.xlane.f32.xlu0 %v2787
        %v2915 = vpop.xlane.xlu0 %2914
        %2916 = vadd.xlane.f32.xlu0 %v2789
        %v2917 = vpop.xlane.xlu0 %2916
        %2918 = vadd.xlane.f32.xlu0 %v2791
        %v2919 = vpop.xlane.xlu0 %2918
        %2920 = vadd.xlane.f32.xlu0 %v2793
        %v2921 = vpop.xlane.xlu0 %2920
        %2922 = vadd.xlane.f32.xlu0 %v2795
        %v2923 = vpop.xlane.xlu0 %2922
        %2924 = vadd.xlane.f32.xlu0 %v2797
        %v2925 = vpop.xlane.xlu0 %2924
        %2926 = vadd.xlane.f32.xlu0 %v2799
        %v2927 = vpop.xlane.xlu0 %2926
        %2928 = vadd.xlane.f32.xlu0 %v2801
        %v2929 = vpop.xlane.xlu0 %2928
        %2930 = vadd.xlane.f32.xlu0 %v2803
        %v2931 = vpop.xlane.xlu0 %2930
        %2932 = vadd.xlane.f32.xlu0 %v2805
        %v2933 = vpop.xlane.xlu0 %2932
        %2934 = vadd.xlane.f32.xlu0 %v2807
        %v2935 = vpop.xlane.xlu0 %2934
        %2936 = vadd.xlane.f32.xlu0 %v2809
        %v2937 = vpop.xlane.xlu0 %2936
        %2938 = vadd.xlane.f32.xlu0 %v2811
        %v2939 = vpop.xlane.xlu0 %2938
        %2940 = vadd.xlane.f32.xlu0 %v2813
        %v2941 = vpop.xlane.xlu0 %2940
        %2942 = vadd.xlane.f32.xlu0 %v2815
        %v2943 = vpop.xlane.xlu0 %2942
        %2944 = vadd.xlane.f32.xlu0 %v2817
        %v2945 = vpop.xlane.xlu0 %2944
        %2946 = vadd.xlane.f32.xlu0 %v2819
        %v2947 = vpop.xlane.xlu0 %2946
        %2948 = vadd.xlane.f32.xlu0 %v2821
        %v2949 = vpop.xlane.xlu0 %2948
        %2950 = vadd.xlane.f32.xlu0 %v2823
        %v2951 = vpop.xlane.xlu0 %2950
        %2952 = vadd.xlane.f32.xlu0 %v2825
        %v2953 = vpop.xlane.xlu0 %2952
        %2954 = vadd.xlane.f32.xlu0 %v2827
        %v2955 = vpop.xlane.xlu0 %2954
        %2956 = vadd.xlane.f32.xlu0 %v2829
        %v2957 = vpop.xlane.xlu0 %2956
        %2958 = vadd.xlane.f32.xlu0 %v2831
        %v2959 = vpop.xlane.xlu0 %2958
        %2960 = vadd.xlane.f32.xlu0 %v2833
        %v2961 = vpop.xlane.xlu0 %2960
        %2962 = vadd.xlane.f32.xlu0 %v2835
        %v2963 = vpop.xlane.xlu0 %2962
        %2964 = vadd.xlane.f32.xlu0 %v2837
        %v2965 = vpop.xlane.xlu0 %2964
        %2966 = vadd.xlane.f32.xlu0 %v2839
        %v2967 = vpop.xlane.xlu0 %2966
        %2968 = vadd.xlane.f32.xlu0 %v2841
        %v2969 = vpop.xlane.xlu0 %2968
        %2970 = vadd.xlane.f32.xlu0 %v2843
        %v2971 = vpop.xlane.xlu0 %2970
        %2972 = vadd.xlane.f32.xlu0 %v2845
        %v2973 = vpop.xlane.xlu0 %2972
        %2974 = vadd.xlane.f32.xlu0 %v2847
        %v2975 = vpop.xlane.xlu0 %2974
        %2976 = vadd.xlane.f32.xlu0 %v2849
        %v2977 = vpop.xlane.xlu0 %2976
        %v2978 = vrcp.pop %v2851
        %v2979 = vrcp.pop %v2853
        %v2980 = vrcp.pop %v2855
        %v2981 = vrcp.pop %v2857
        %v2982 = vrcp.pop %v2859
        %v2983 = vrcp.pop %v2861
        %v2984 = vrcp.pop %v2863
        %v2985 = vrcp.pop %v2865
        %v2986 = vrcp.pop %v2867
        %v2987 = vrcp.pop %v2869
        %v2988 = vrcp.pop %v2871
        %v2989 = vrcp.pop %v2873
        %v2990 = vrcp.pop %v2875
        %v2991 = vrcp.pop %v2877
        %v2992 = vrcp.pop %v2879
        %v2993 = vrcp.pop %v2881
        %v2994 = vrcp.pop %v2883
        %v2995 = vrcp.pop %v2885
        %v2996 = vrcp.pop %v2887
        %v2997 = vrcp.pop %v2889
        %v2998 = vrcp.pop %v2891
        %v2999 = vrcp.pop %v2893
        %v3000 = vrcp.pop %v2895
        %v3001 = vrcp.pop %v2897
        %v3002 = vrcp.pop %v2899
        %v3003 = vrcp.pop %v2901
        %v3004 = vrcp.pop %v2903
        %v3005 = vrcp.pop %v2905
        %v3006 = vrcp.pop %v2907
        %v3007 = vrcp.pop %v2909
        %v3008 = vrcp.pop %v2911
        %v3009 = vrcp.pop %v2913
        %v3010 = vrcp.pop %v2915
        %v3011 = vrcp.pop %v2917
        %v3012 = vrcp.pop %v2919
        %v3013 = vrcp.pop %v2921
        %v3014 = vrcp.pop %v2923
        %v3015 = vrcp.pop %v2925
        %v3016 = vrcp.pop %v2927
        %v3017 = vrcp.pop %v2929
        %v3018 = vrcp.pop %v2931
        %v3019 = vrcp.pop %v2933
        %v3020 = vrcp.pop %v2935
        %v3021 = vrcp.pop %v2937
        %v3022 = vrcp.pop %v2939
        %v3023 = vrcp.pop %v2941
        %v3024 = vrcp.pop %v2943
        %v3025 = vrcp.pop %v2945
        %v3026 = vrcp.pop %v2947
        %v3027 = vrcp.pop %v2949
        %v3028 = vrcp.pop %v2951
        %v3029 = vrcp.pop %v2953
        %v3030 = vrcp.pop %v2955
        %v3031 = vrcp.pop %v2957
        %v3032 = vrcp.pop %v2959
        %v3033 = vrcp.pop %v2961
        %v3034 = vrcp.pop %v2963
        %v3035 = vrcp.pop %v2965
        %v3036 = vrcp.pop %v2967
        %v3037 = vrcp.pop %v2969
        %v3038 = vrcp.pop %v2971
        %v3039 = vrcp.pop %v2973
        %v3040 = vrcp.pop %v2975
        %v3041 = vrcp.pop %v2977
        %v3042 = vmul.f32 %v2723, %v2978
        %v3043 = vmul.f32 %v2725, %v2979
        %v3044 = vmul.f32 %v2727, %v2980
        %v3045 = vmul.f32 %v2729, %v2981
        %v3046 = vmul.f32 %v2731, %v2982
        %v3047 = vmul.f32 %v2733, %v2983
        %v3048 = vmul.f32 %v2735, %v2984
        %v3049 = vmul.f32 %v2737, %v2985
        %v3050 = vmul.f32 %v2739, %v2986
        %v3051 = vmul.f32 %v2741, %v2987
        %v3052 = vmul.f32 %v2743, %v2988
        %v3053 = vmul.f32 %v2745, %v2989
        %v3054 = vmul.f32 %v2747, %v2990
        %v3055 = vmul.f32 %v2749, %v2991
        %v3056 = vmul.f32 %v2751, %v2992
        %v3057 = vmul.f32 %v2753, %v2993
        %v3058 = vmul.f32 %v2755, %v2994
        %v3059 = vmul.f32 %v2757, %v2995
        %v3060 = vmul.f32 %v2759, %v2996
        %v3061 = vmul.f32 %v2761, %v2997
        %v3062 = vmul.f32 %v2763, %v2998
        %v3063 = vmul.f32 %v2765, %v2999
        %v3064 = vmul.f32 %v2767, %v3000
        %v3065 = vmul.f32 %v2769, %v3001
        %v3066 = vmul.f32 %v2771, %v3002
        %v3067 = vmul.f32 %v2773, %v3003
        %v3068 = vmul.f32 %v2775, %v3004
        %v3069 = vmul.f32 %v2777, %v3005
        %v3070 = vmul.f32 %v2779, %v3006
        %v3071 = vmul.f32 %v2781, %v3007
        %v3072 = vmul.f32 %v2783, %v3008
        %v3073 = vmul.f32 %v2785, %v3009
        %v3074 = vmul.f32 %v2787, %v3010
        %v3075 = vmul.f32 %v2789, %v3011
        %v3076 = vmul.f32 %v2791, %v3012
        %v3077 = vmul.f32 %v2793, %v3013
        %v3078 = vmul.f32 %v2795, %v3014
        %v3079 = vmul.f32 %v2797, %v3015
        %v3080 = vmul.f32 %v2799, %v3016
        %v3081 = vmul.f32 %v2801, %v3017
        %v3082 = vmul.f32 %v2803, %v3018
        %v3083 = vmul.f32 %v2805, %v3019
        %v3084 = vmul.f32 %v2807, %v3020
        %v3085 = vmul.f32 %v2809, %v3021
        %v3086 = vmul.f32 %v2811, %v3022
        %v3087 = vmul.f32 %v2813, %v3023
        %v3088 = vmul.f32 %v2815, %v3024
        %v3089 = vmul.f32 %v2817, %v3025
        %v3090 = vmul.f32 %v2819, %v3026
        %v3091 = vmul.f32 %v2821, %v3027
        %v3092 = vmul.f32 %v2823, %v3028
        %v3093 = vmul.f32 %v2825, %v3029
        %v3094 = vmul.f32 %v2827, %v3030
        %v3095 = vmul.f32 %v2829, %v3031
        %v3096 = vmul.f32 %v2831, %v3032
        %v3097 = vmul.f32 %v2833, %v3033
        %v3098 = vmul.f32 %v2835, %v3034
        %v3099 = vmul.f32 %v2837, %v3035
        %v3100 = vmul.f32 %v2839, %v3036
        %v3101 = vmul.f32 %v2841, %v3037
        %v3102 = vmul.f32 %v2843, %v3038
        %v3103 = vmul.f32 %v2845, %v3039
        %v3104 = vmul.f32 %v2847, %v3040
        %v3105 = vmul.f32 %v2849, %v3041
        %v3106 = vpack.c.bf16 %v3042, %v3042
        %v3107 = vpack.c.bf16 %v3043, %v3043
        %v3108 = vpack.c.bf16 %v3044, %v3044
        %v3109 = vpack.c.bf16 %v3045, %v3045
        %v3110 = vpack.c.bf16 %v3046, %v3046
        %v3111 = vpack.c.bf16 %v3047, %v3047
        %v3112 = vpack.c.bf16 %v3048, %v3048
        %v3113 = vpack.c.bf16 %v3049, %v3049
        %v3114 = vpack.c.bf16 %v3050, %v3050
        %v3115 = vpack.c.bf16 %v3051, %v3051
        %v3116 = vpack.c.bf16 %v3052, %v3052
        %v3117 = vpack.c.bf16 %v3053, %v3053
        %v3118 = vpack.c.bf16 %v3054, %v3054
        %v3119 = vpack.c.bf16 %v3055, %v3055
        %v3120 = vpack.c.bf16 %v3056, %v3056
        %v3121 = vpack.c.bf16 %v3057, %v3057
        %v3122 = vpack.c.bf16 %v3058, %v3058
        %v3123 = vpack.c.bf16 %v3059, %v3059
        %v3124 = vpack.c.bf16 %v3060, %v3060
        %v3125 = vpack.c.bf16 %v3061, %v3061
        %v3126 = vpack.c.bf16 %v3062, %v3062
        %v3127 = vpack.c.bf16 %v3063, %v3063
        %v3128 = vpack.c.bf16 %v3064, %v3064
        %v3129 = vpack.c.bf16 %v3065, %v3065
        %v3130 = vpack.c.bf16 %v3066, %v3066
        %v3131 = vpack.c.bf16 %v3067, %v3067
        %v3132 = vpack.c.bf16 %v3068, %v3068
        %v3133 = vpack.c.bf16 %v3069, %v3069
        %v3134 = vpack.c.bf16 %v3070, %v3070
        %v3135 = vpack.c.bf16 %v3071, %v3071
        %v3136 = vpack.c.bf16 %v3072, %v3072
        %v3137 = vpack.c.bf16 %v3073, %v3073
        %v3138 = vpack.c.bf16 %v3074, %v3074
        %v3139 = vpack.c.bf16 %v3075, %v3075
        %v3140 = vpack.c.bf16 %v3076, %v3076
        %v3141 = vpack.c.bf16 %v3077, %v3077
        %v3142 = vpack.c.bf16 %v3078, %v3078
        %v3143 = vpack.c.bf16 %v3079, %v3079
        %v3144 = vpack.c.bf16 %v3080, %v3080
        %v3145 = vpack.c.bf16 %v3081, %v3081
        %v3146 = vpack.c.bf16 %v3082, %v3082
        %v3147 = vpack.c.bf16 %v3083, %v3083
        %v3148 = vpack.c.bf16 %v3084, %v3084
        %v3149 = vpack.c.bf16 %v3085, %v3085
        %v3150 = vpack.c.bf16 %v3086, %v3086
        %v3151 = vpack.c.bf16 %v3087, %v3087
        %v3152 = vpack.c.bf16 %v3088, %v3088
        %v3153 = vpack.c.bf16 %v3089, %v3089
        %v3154 = vpack.c.bf16 %v3090, %v3090
        %v3155 = vpack.c.bf16 %v3091, %v3091
        %v3156 = vpack.c.bf16 %v3092, %v3092
        %v3157 = vpack.c.bf16 %v3093, %v3093
        %v3158 = vpack.c.bf16 %v3094, %v3094
        %v3159 = vpack.c.bf16 %v3095, %v3095
        %v3160 = vpack.c.bf16 %v3096, %v3096
        %v3161 = vpack.c.bf16 %v3097, %v3097
        %v3162 = vpack.c.bf16 %v3098, %v3098
        %v3163 = vpack.c.bf16 %v3099, %v3099
        %v3164 = vpack.c.bf16 %v3100, %v3100
        %v3165 = vpack.c.bf16 %v3101, %v3101
        %v3166 = vpack.c.bf16 %v3102, %v3102
        %v3167 = vpack.c.bf16 %v3103, %v3103
        %v3168 = vpack.c.bf16 %v3104, %v3104
        %v3169 = vpack.c.bf16 %v3105, %v3105
        %v3170 = vld [vmem:[#allocation3] sm:$0xf]
        %v3171 = vld [vmem:[#allocation3 + $0x4] sm:$0xf]
        %v3172 = vld [vmem:[#allocation3 + $0x8] sm:$0xf]
        %v3173 = vld [vmem:[#allocation3 + $0xc] sm:$0xf]
        %v3174 = vld [vmem:[#allocation3 + $0x10] sm:$0xf]
        %v3175 = vld [vmem:[#allocation3 + $0x14] sm:$0xf]
        %v3176 = vld [vmem:[#allocation3 + $0x18] sm:$0xf]
        %v3177 = vld [vmem:[#allocation3 + $0x1c] sm:$0xf]
        %v3178 = vld [vmem:[#allocation3 + $0x20] sm:$0xf]
        %v3179 = vld [vmem:[#allocation3 + $0x24] sm:$0xf]
        %v3180 = vld [vmem:[#allocation3 + $0x28] sm:$0xf]
        %v3181 = vld [vmem:[#allocation3 + $0x2c] sm:$0xf]
        %v3182 = vld [vmem:[#allocation3 + $0x30] sm:$0xf]
        %v3183 = vld [vmem:[#allocation3 + $0x34] sm:$0xf]
        %v3184 = vld [vmem:[#allocation3 + $0x38] sm:$0xf]
        %v3185 = vld [vmem:[#allocation3 + $0x3c] sm:$0xf]
        %v3186 = vld [vmem:[#allocation3 + $0x40] sm:$0xf]
        %v3187 = vld [vmem:[#allocation3 + $0x44] sm:$0xf]
        %v3188 = vld [vmem:[#allocation3 + $0x48] sm:$0xf]
        %v3189 = vld [vmem:[#allocation3 + $0x4c] sm:$0xf]
        %v3190 = vld [vmem:[#allocation3 + $0x50] sm:$0xf]
        %v3191 = vld [vmem:[#allocation3 + $0x54] sm:$0xf]
        %v3192 = vld [vmem:[#allocation3 + $0x58] sm:$0xf]
        %v3193 = vld [vmem:[#allocation3 + $0x5c] sm:$0xf]
        %v3194 = vld [vmem:[#allocation3 + $0x60] sm:$0xf]
        %v3195 = vld [vmem:[#allocation3 + $0x64] sm:$0xf]
        %v3196 = vld [vmem:[#allocation3 + $0x68] sm:$0xf]
        %v3197 = vld [vmem:[#allocation3 + $0x6c] sm:$0xf]
        %v3198 = vld [vmem:[#allocation3 + $0x70] sm:$0xf]
        %v3199 = vld [vmem:[#allocation3 + $0x74] sm:$0xf]
        %v3200 = vld [vmem:[#allocation3 + $0x78] sm:$0xf]
        %v3201 = vld [vmem:[#allocation3 + $0x7c] sm:$0xf]
        %v3202 = vld [vmem:[#allocation3 + $0x80] sm:$0xf]
        %v3203 = vld [vmem:[#allocation3 + $0x84] sm:$0xf]
        %v3204 = vld [vmem:[#allocation3 + $0x88] sm:$0xf]
        %v3205 = vld [vmem:[#allocation3 + $0x8c] sm:$0xf]
        %v3206 = vld [vmem:[#allocation3 + $0x90] sm:$0xf]
        %v3207 = vld [vmem:[#allocation3 + $0x94] sm:$0xf]
        %v3208 = vld [vmem:[#allocation3 + $0x98] sm:$0xf]
        %v3209 = vld [vmem:[#allocation3 + $0x9c] sm:$0xf]
        %v3210 = vld [vmem:[#allocation3 + $0xa0] sm:$0xf]
        %v3211 = vld [vmem:[#allocation3 + $0xa4] sm:$0xf]
        %v3212 = vld [vmem:[#allocation3 + $0xa8] sm:$0xf]
        %v3213 = vld [vmem:[#allocation3 + $0xac] sm:$0xf]
        %v3214 = vld [vmem:[#allocation3 + $0xb0] sm:$0xf]
        %v3215 = vld [vmem:[#allocation3 + $0xb4] sm:$0xf]
        %v3216 = vld [vmem:[#allocation3 + $0xb8] sm:$0xf]
        %v3217 = vld [vmem:[#allocation3 + $0xbc] sm:$0xf]
        %v3218 = vld [vmem:[#allocation3 + $0xc0] sm:$0xf]
        %v3219 = vld [vmem:[#allocation3 + $0xc4] sm:$0xf]
        %v3220 = vld [vmem:[#allocation3 + $0xc8] sm:$0xf]
        %v3221 = vld [vmem:[#allocation3 + $0xcc] sm:$0xf]
        %v3222 = vld [vmem:[#allocation3 + $0xd0] sm:$0xf]
        %v3223 = vld [vmem:[#allocation3 + $0xd4] sm:$0xf]
        %v3224 = vld [vmem:[#allocation3 + $0xd8] sm:$0xf]
        %v3225 = vld [vmem:[#allocation3 + $0xdc] sm:$0xf]
        %v3226 = vld [vmem:[#allocation3 + $0xe0] sm:$0xf]
        %v3227 = vld [vmem:[#allocation3 + $0xe4] sm:$0xf]
        %v3228 = vld [vmem:[#allocation3 + $0xe8] sm:$0xf]
        %v3229 = vld [vmem:[#allocation3 + $0xec] sm:$0xf]
        %v3230 = vld [vmem:[#allocation3 + $0xf0] sm:$0xf]
        %v3231 = vld [vmem:[#allocation3 + $0xf4] sm:$0xf]
        %v3232 = vld [vmem:[#allocation3 + $0xf8] sm:$0xf]
        %v3233 = vld [vmem:[#allocation3 + $0xfc] sm:$0xf]
        %v3250 = vunpack.c.l.b16 %v3106
        %v3251 = vunpack.c.l.b16 %v3107
        %v3252 = vunpack.c.l.b16 %v3108
        %v3253 = vunpack.c.l.b16 %v3109
        %v3254 = vunpack.c.l.b16 %v3110
        %v3255 = vunpack.c.l.b16 %v3111
        %v3256 = vunpack.c.l.b16 %v3112
        %v3257 = vunpack.c.l.b16 %v3113
        %v3258 = vunpack.c.l.b16 %v3114
        %v3259 = vunpack.c.l.b16 %v3115
        %v3260 = vunpack.c.l.b16 %v3116
        %v3261 = vunpack.c.l.b16 %v3117
        %v3262 = vunpack.c.l.b16 %v3118
        %v3263 = vunpack.c.l.b16 %v3119
        %v3264 = vunpack.c.l.b16 %v3120
        %v3265 = vunpack.c.l.b16 %v3121
        %v3266 = vpack.c.b16 %v3251, %v3250
        %v3267 = vpack.c.b16 %v3253, %v3252
        %v3268 = vpack.c.b16 %v3255, %v3254
        %v3269 = vpack.c.b16 %v3257, %v3256
        %v3270 = vpack.c.b16 %v3259, %v3258
        %v3271 = vpack.c.b16 %v3261, %v3260
        %v3272 = vpack.c.b16 %v3263, %v3262
        %v3273 = vpack.c.b16 %v3265, %v3264
        %v3298 = vunpack.c.l.b16 %v3170
        %v3299 = vunpack.c.l.b16 %v3171
        %v3300 = vunpack.c.l.b16 %v3172
        %v3301 = vunpack.c.l.b16 %v3173
        %v3302 = vunpack.c.l.b16 %v3174
        %v3303 = vunpack.c.l.b16 %v3175
        %v3304 = vunpack.c.l.b16 %v3176
        %v3305 = vunpack.c.l.b16 %v3177
        %v3306 = vunpack.c.l.b16 %v3178
        %v3307 = vunpack.c.l.b16 %v3179
        %v3308 = vunpack.c.l.b16 %v3180
        %v3309 = vunpack.c.l.b16 %v3181
        %v3310 = vunpack.c.l.b16 %v3182
        %v3311 = vunpack.c.l.b16 %v3183
        %v3312 = vunpack.c.l.b16 %v3184
        %v3313 = vunpack.c.l.b16 %v3185
        %v3314 = vpack.c.b16 %v3299, %v3298
        %v3315 = vpack.c.b16 %v3301, %v3300
        %v3316 = vpack.c.b16 %v3303, %v3302
        %v3317 = vpack.c.b16 %v3305, %v3304
        %v3318 = vpack.c.b16 %v3307, %v3306
        %v3319 = vpack.c.b16 %v3309, %v3308
        %v3320 = vpack.c.b16 %v3311, %v3310
        %v3321 = vpack.c.b16 %v3313, %v3312
        %3330 = vmatpush.bf16.msra.mxu0 %v3321
        %3331 = vmatpush.bf16.msra.mxu0 %v3320
        %3332 = vmatpush.bf16.msra.mxu0 %v3319
        %3333 = vmatpush.bf16.msra.mxu0 %v3318
        %3334 = vmatpush.bf16.msra.mxu0 %v3317
        %3335 = vmatpush.bf16.msra.mxu0 %v3316
        %3336 = vmatpush.bf16.msra.mxu0 %v3315
        %3337 = vmatpush.bf16.msra.mxu0 %v3314
        %3338 = vmatmul.bf16.gmra.mxu0 %v3266
        %v3339 = vpop.f32.mrf.mxu0
        %v3340 = vadd.f32 0.0, %v3339
        %v3341 = vpop.f32.mrf.mxu0
        %v3342 = vadd.f32 0.0, %v3341
        %3343 = vmatmul.bf16.gmra.mxu0 %v3267
        %v3344 = vpop.f32.mrf.mxu0
        %v3345 = vadd.f32 0.0, %v3344
        %v3346 = vpop.f32.mrf.mxu0
        %v3347 = vadd.f32 0.0, %v3346
        %3348 = vmatmul.bf16.gmra.mxu0 %v3268
        %v3349 = vpop.f32.mrf.mxu0
        %v3350 = vadd.f32 0.0, %v3349
        %v3351 = vpop.f32.mrf.mxu0
        %v3352 = vadd.f32 0.0, %v3351
        %3353 = vmatmul.bf16.gmra.mxu0 %v3269
        %v3354 = vpop.f32.mrf.mxu0
        %v3355 = vadd.f32 0.0, %v3354
        %v3356 = vpop.f32.mrf.mxu0
        %v3357 = vadd.f32 0.0, %v3356
        %3358 = vmatmul.bf16.gmra.mxu0 %v3270
        %v3359 = vpop.f32.mrf.mxu0
        %v3360 = vadd.f32 0.0, %v3359
        %v3361 = vpop.f32.mrf.mxu0
        %v3362 = vadd.f32 0.0, %v3361
        %3363 = vmatmul.bf16.gmra.mxu0 %v3271
        %v3364 = vpop.f32.mrf.mxu0
        %v3365 = vadd.f32 0.0, %v3364
        %v3366 = vpop.f32.mrf.mxu0
        %v3367 = vadd.f32 0.0, %v3366
        %3368 = vmatmul.bf16.gmra.mxu0 %v3272
        %v3369 = vpop.f32.mrf.mxu0
        %v3370 = vadd.f32 0.0, %v3369
        %v3371 = vpop.f32.mrf.mxu0
        %v3372 = vadd.f32 0.0, %v3371
        %3373 = vmatmul.bf16.gmra.mxu0 %v3273
        %v3374 = vpop.f32.mrf.mxu0
        %v3375 = vadd.f32 0.0, %v3374
        %v3376 = vpop.f32.mrf.mxu0
        %v3377 = vadd.f32 0.0, %v3376
        %3378 = vdwg.mxu0
        %v3395 = vunpack.c.l.b16 %v3122
        %v3396 = vunpack.c.l.b16 %v3123
        %v3397 = vunpack.c.l.b16 %v3124
        %v3398 = vunpack.c.l.b16 %v3125
        %v3399 = vunpack.c.l.b16 %v3126
        %v3400 = vunpack.c.l.b16 %v3127
        %v3401 = vunpack.c.l.b16 %v3128
        %v3402 = vunpack.c.l.b16 %v3129
        %v3403 = vunpack.c.l.b16 %v3130
        %v3404 = vunpack.c.l.b16 %v3131
        %v3405 = vunpack.c.l.b16 %v3132
        %v3406 = vunpack.c.l.b16 %v3133
        %v3407 = vunpack.c.l.b16 %v3134
        %v3408 = vunpack.c.l.b16 %v3135
        %v3409 = vunpack.c.l.b16 %v3136
        %v3410 = vunpack.c.l.b16 %v3137
        %v3411 = vpack.c.b16 %v3396, %v3395
        %v3412 = vpack.c.b16 %v3398, %v3397
        %v3413 = vpack.c.b16 %v3400, %v3399
        %v3414 = vpack.c.b16 %v3402, %v3401
        %v3415 = vpack.c.b16 %v3404, %v3403
        %v3416 = vpack.c.b16 %v3406, %v3405
        %v3417 = vpack.c.b16 %v3408, %v3407
        %v3418 = vpack.c.b16 %v3410, %v3409
        %v3443 = vunpack.c.l.b16 %v3186
        %v3444 = vunpack.c.l.b16 %v3187
        %v3445 = vunpack.c.l.b16 %v3188
        %v3446 = vunpack.c.l.b16 %v3189
        %v3447 = vunpack.c.l.b16 %v3190
        %v3448 = vunpack.c.l.b16 %v3191
        %v3449 = vunpack.c.l.b16 %v3192
        %v3450 = vunpack.c.l.b16 %v3193
        %v3451 = vunpack.c.l.b16 %v3194
        %v3452 = vunpack.c.l.b16 %v3195
        %v3453 = vunpack.c.l.b16 %v3196
        %v3454 = vunpack.c.l.b16 %v3197
        %v3455 = vunpack.c.l.b16 %v3198
        %v3456 = vunpack.c.l.b16 %v3199
        %v3457 = vunpack.c.l.b16 %v3200
        %v3458 = vunpack.c.l.b16 %v3201
        %v3459 = vpack.c.b16 %v3444, %v3443
        %v3460 = vpack.c.b16 %v3446, %v3445
        %v3461 = vpack.c.b16 %v3448, %v3447
        %v3462 = vpack.c.b16 %v3450, %v3449
        %v3463 = vpack.c.b16 %v3452, %v3451
        %v3464 = vpack.c.b16 %v3454, %v3453
        %v3465 = vpack.c.b16 %v3456, %v3455
        %v3466 = vpack.c.b16 %v3458, %v3457
        %3475 = vmatpush.bf16.msra.mxu0 %v3466
        %3476 = vmatpush.bf16.msra.mxu0 %v3465
        %3477 = vmatpush.bf16.msra.mxu0 %v3464
        %3478 = vmatpush.bf16.msra.mxu0 %v3463
        %3479 = vmatpush.bf16.msra.mxu0 %v3462
        %3480 = vmatpush.bf16.msra.mxu0 %v3461
        %3481 = vmatpush.bf16.msra.mxu0 %v3460
        %3482 = vmatpush.bf16.msra.mxu0 %v3459
        %3483 = vmatmul.bf16.gmra.mxu0 %v3411
        %v3484 = vpop.f32.mrf.mxu0
        %v3485 = vadd.f32 0.0, %v3484
        %v3486 = vpop.f32.mrf.mxu0
        %v3487 = vadd.f32 0.0, %v3486
        %3488 = vmatmul.bf16.gmra.mxu0 %v3412
        %v3489 = vpop.f32.mrf.mxu0
        %v3490 = vadd.f32 0.0, %v3489
        %v3491 = vpop.f32.mrf.mxu0
        %v3492 = vadd.f32 0.0, %v3491
        %3493 = vmatmul.bf16.gmra.mxu0 %v3413
        %v3494 = vpop.f32.mrf.mxu0
        %v3495 = vadd.f32 0.0, %v3494
        %v3496 = vpop.f32.mrf.mxu0
        %v3497 = vadd.f32 0.0, %v3496
        %3498 = vmatmul.bf16.gmra.mxu0 %v3414
        %v3499 = vpop.f32.mrf.mxu0
        %v3500 = vadd.f32 0.0, %v3499
        %v3501 = vpop.f32.mrf.mxu0
        %v3502 = vadd.f32 0.0, %v3501
        %3503 = vmatmul.bf16.gmra.mxu0 %v3415
        %v3504 = vpop.f32.mrf.mxu0
        %v3505 = vadd.f32 0.0, %v3504
        %v3506 = vpop.f32.mrf.mxu0
        %v3507 = vadd.f32 0.0, %v3506
        %3508 = vmatmul.bf16.gmra.mxu0 %v3416
        %v3509 = vpop.f32.mrf.mxu0
        %v3510 = vadd.f32 0.0, %v3509
        %v3511 = vpop.f32.mrf.mxu0
        %v3512 = vadd.f32 0.0, %v3511
        %3513 = vmatmul.bf16.gmra.mxu0 %v3417
        %v3514 = vpop.f32.mrf.mxu0
        %v3515 = vadd.f32 0.0, %v3514
        %v3516 = vpop.f32.mrf.mxu0
        %v3517 = vadd.f32 0.0, %v3516
        %3518 = vmatmul.bf16.gmra.mxu0 %v3418
        %v3519 = vpop.f32.mrf.mxu0
        %v3520 = vadd.f32 0.0, %v3519
        %v3521 = vpop.f32.mrf.mxu0
        %v3522 = vadd.f32 0.0, %v3521
        %3523 = vdwg.mxu0
        %v3540 = vunpack.c.l.b16 %v3138
        %v3541 = vunpack.c.l.b16 %v3139
        %v3542 = vunpack.c.l.b16 %v3140
        %v3543 = vunpack.c.l.b16 %v3141
        %v3544 = vunpack.c.l.b16 %v3142
        %v3545 = vunpack.c.l.b16 %v3143
        %v3546 = vunpack.c.l.b16 %v3144
        %v3547 = vunpack.c.l.b16 %v3145
        %v3548 = vunpack.c.l.b16 %v3146
        %v3549 = vunpack.c.l.b16 %v3147
        %v3550 = vunpack.c.l.b16 %v3148
        %v3551 = vunpack.c.l.b16 %v3149
        %v3552 = vunpack.c.l.b16 %v3150
        %v3553 = vunpack.c.l.b16 %v3151
        %v3554 = vunpack.c.l.b16 %v3152
        %v3555 = vunpack.c.l.b16 %v3153
        %v3556 = vpack.c.b16 %v3541, %v3540
        %v3557 = vpack.c.b16 %v3543, %v3542
        %v3558 = vpack.c.b16 %v3545, %v3544
        %v3559 = vpack.c.b16 %v3547, %v3546
        %v3560 = vpack.c.b16 %v3549, %v3548
        %v3561 = vpack.c.b16 %v3551, %v3550
        %v3562 = vpack.c.b16 %v3553, %v3552
        %v3563 = vpack.c.b16 %v3555, %v3554
        %v3588 = vunpack.c.l.b16 %v3202
        %v3589 = vunpack.c.l.b16 %v3203
        %v3590 = vunpack.c.l.b16 %v3204
        %v3591 = vunpack.c.l.b16 %v3205
        %v3592 = vunpack.c.l.b16 %v3206
        %v3593 = vunpack.c.l.b16 %v3207
        %v3594 = vunpack.c.l.b16 %v3208
        %v3595 = vunpack.c.l.b16 %v3209
        %v3596 = vunpack.c.l.b16 %v3210
        %v3597 = vunpack.c.l.b16 %v3211
        %v3598 = vunpack.c.l.b16 %v3212
        %v3599 = vunpack.c.l.b16 %v3213
        %v3600 = vunpack.c.l.b16 %v3214
        %v3601 = vunpack.c.l.b16 %v3215
        %v3602 = vunpack.c.l.b16 %v3216
        %v3603 = vunpack.c.l.b16 %v3217
        %v3604 = vpack.c.b16 %v3589, %v3588
        %v3605 = vpack.c.b16 %v3591, %v3590
        %v3606 = vpack.c.b16 %v3593, %v3592
        %v3607 = vpack.c.b16 %v3595, %v3594
        %v3608 = vpack.c.b16 %v3597, %v3596
        %v3609 = vpack.c.b16 %v3599, %v3598
        %v3610 = vpack.c.b16 %v3601, %v3600
        %v3611 = vpack.c.b16 %v3603, %v3602
        %3620 = vmatpush.bf16.msra.mxu0 %v3611
        %3621 = vmatpush.bf16.msra.mxu0 %v3610
        %3622 = vmatpush.bf16.msra.mxu0 %v3609
        %3623 = vmatpush.bf16.msra.mxu0 %v3608
        %3624 = vmatpush.bf16.msra.mxu0 %v3607
        %3625 = vmatpush.bf16.msra.mxu0 %v3606
        %3626 = vmatpush.bf16.msra.mxu0 %v3605
        %3627 = vmatpush.bf16.msra.mxu0 %v3604
        %3628 = vmatmul.bf16.gmra.mxu0 %v3556
        %v3629 = vpop.f32.mrf.mxu0
        %v3630 = vadd.f32 0.0, %v3629
        %v3631 = vpop.f32.mrf.mxu0
        %v3632 = vadd.f32 0.0, %v3631
        %3633 = vmatmul.bf16.gmra.mxu0 %v3557
        %v3634 = vpop.f32.mrf.mxu0
        %v3635 = vadd.f32 0.0, %v3634
        %v3636 = vpop.f32.mrf.mxu0
        %v3637 = vadd.f32 0.0, %v3636
        %3638 = vmatmul.bf16.gmra.mxu0 %v3558
        %v3639 = vpop.f32.mrf.mxu0
        %v3640 = vadd.f32 0.0, %v3639
        %v3641 = vpop.f32.mrf.mxu0
        %v3642 = vadd.f32 0.0, %v3641
        %3643 = vmatmul.bf16.gmra.mxu0 %v3559
        %v3644 = vpop.f32.mrf.mxu0
        %v3645 = vadd.f32 0.0, %v3644
        %v3646 = vpop.f32.mrf.mxu0
        %v3647 = vadd.f32 0.0, %v3646
        %3648 = vmatmul.bf16.gmra.mxu0 %v3560
        %v3649 = vpop.f32.mrf.mxu0
        %v3650 = vadd.f32 0.0, %v3649
        %v3651 = vpop.f32.mrf.mxu0
        %v3652 = vadd.f32 0.0, %v3651
        %3653 = vmatmul.bf16.gmra.mxu0 %v3561
        %v3654 = vpop.f32.mrf.mxu0
        %v3655 = vadd.f32 0.0, %v3654
        %v3656 = vpop.f32.mrf.mxu0
        %v3657 = vadd.f32 0.0, %v3656
        %3658 = vmatmul.bf16.gmra.mxu0 %v3562
        %v3659 = vpop.f32.mrf.mxu0
        %v3660 = vadd.f32 0.0, %v3659
        %v3661 = vpop.f32.mrf.mxu0
        %v3662 = vadd.f32 0.0, %v3661
        %3663 = vmatmul.bf16.gmra.mxu0 %v3563
        %v3664 = vpop.f32.mrf.mxu0
        %v3665 = vadd.f32 0.0, %v3664
        %v3666 = vpop.f32.mrf.mxu0
        %v3667 = vadd.f32 0.0, %v3666
        %3668 = vdwg.mxu0
        %v3685 = vunpack.c.l.b16 %v3154
        %v3686 = vunpack.c.l.b16 %v3155
        %v3687 = vunpack.c.l.b16 %v3156
        %v3688 = vunpack.c.l.b16 %v3157
        %v3689 = vunpack.c.l.b16 %v3158
        %v3690 = vunpack.c.l.b16 %v3159
        %v3691 = vunpack.c.l.b16 %v3160
        %v3692 = vunpack.c.l.b16 %v3161
        %v3693 = vunpack.c.l.b16 %v3162
        %v3694 = vunpack.c.l.b16 %v3163
        %v3695 = vunpack.c.l.b16 %v3164
        %v3696 = vunpack.c.l.b16 %v3165
        %v3697 = vunpack.c.l.b16 %v3166
        %v3698 = vunpack.c.l.b16 %v3167
        %v3699 = vunpack.c.l.b16 %v3168
        %v3700 = vunpack.c.l.b16 %v3169
        %v3701 = vpack.c.b16 %v3686, %v3685
        %v3702 = vpack.c.b16 %v3688, %v3687
        %v3703 = vpack.c.b16 %v3690, %v3689
        %v3704 = vpack.c.b16 %v3692, %v3691
        %v3705 = vpack.c.b16 %v3694, %v3693
        %v3706 = vpack.c.b16 %v3696, %v3695
        %v3707 = vpack.c.b16 %v3698, %v3697
        %v3708 = vpack.c.b16 %v3700, %v3699
        %v3733 = vunpack.c.l.b16 %v3218
        %v3734 = vunpack.c.l.b16 %v3219
        %v3735 = vunpack.c.l.b16 %v3220
        %v3736 = vunpack.c.l.b16 %v3221
        %v3737 = vunpack.c.l.b16 %v3222
        %v3738 = vunpack.c.l.b16 %v3223
        %v3739 = vunpack.c.l.b16 %v3224
        %v3740 = vunpack.c.l.b16 %v3225
        %v3741 = vunpack.c.l.b16 %v3226
        %v3742 = vunpack.c.l.b16 %v3227
        %v3743 = vunpack.c.l.b16 %v3228
        %v3744 = vunpack.c.l.b16 %v3229
        %v3745 = vunpack.c.l.b16 %v3230
        %v3746 = vunpack.c.l.b16 %v3231
        %v3747 = vunpack.c.l.b16 %v3232
        %v3748 = vunpack.c.l.b16 %v3233
        %v3749 = vpack.c.b16 %v3734, %v3733
        %v3750 = vpack.c.b16 %v3736, %v3735
        %v3751 = vpack.c.b16 %v3738, %v3737
        %v3752 = vpack.c.b16 %v3740, %v3739
        %v3753 = vpack.c.b16 %v3742, %v3741
        %v3754 = vpack.c.b16 %v3744, %v3743
        %v3755 = vpack.c.b16 %v3746, %v3745
        %v3756 = vpack.c.b16 %v3748, %v3747
        %3765 = vmatpush.bf16.msra.mxu0 %v3756
        %3766 = vmatpush.bf16.msra.mxu0 %v3755
        %3767 = vmatpush.bf16.msra.mxu0 %v3754
        %3768 = vmatpush.bf16.msra.mxu0 %v3753
        %3769 = vmatpush.bf16.msra.mxu0 %v3752
        %3770 = vmatpush.bf16.msra.mxu0 %v3751
        %3771 = vmatpush.bf16.msra.mxu0 %v3750
        %3772 = vmatpush.bf16.msra.mxu0 %v3749
        %3773 = vmatmul.bf16.gmra.mxu0 %v3701
        %v3774 = vpop.f32.mrf.mxu0
        %v3775 = vadd.f32 0.0, %v3774
        %v3776 = vpop.f32.mrf.mxu0
        %v3777 = vadd.f32 0.0, %v3776
        %3778 = vmatmul.bf16.gmra.mxu0 %v3702
        %v3779 = vpop.f32.mrf.mxu0
        %v3780 = vadd.f32 0.0, %v3779
        %v3781 = vpop.f32.mrf.mxu0
        %v3782 = vadd.f32 0.0, %v3781
        %3783 = vmatmul.bf16.gmra.mxu0 %v3703
        %v3784 = vpop.f32.mrf.mxu0
        %v3785 = vadd.f32 0.0, %v3784
        %v3786 = vpop.f32.mrf.mxu0
        %v3787 = vadd.f32 0.0, %v3786
        %3788 = vmatmul.bf16.gmra.mxu0 %v3704
        %v3789 = vpop.f32.mrf.mxu0
        %v3790 = vadd.f32 0.0, %v3789
        %v3791 = vpop.f32.mrf.mxu0
        %v3792 = vadd.f32 0.0, %v3791
        %3793 = vmatmul.bf16.gmra.mxu0 %v3705
        %v3794 = vpop.f32.mrf.mxu0
        %v3795 = vadd.f32 0.0, %v3794
        %v3796 = vpop.f32.mrf.mxu0
        %v3797 = vadd.f32 0.0, %v3796
        %3798 = vmatmul.bf16.gmra.mxu0 %v3706
        %v3799 = vpop.f32.mrf.mxu0
        %v3800 = vadd.f32 0.0, %v3799
        %v3801 = vpop.f32.mrf.mxu0
        %v3802 = vadd.f32 0.0, %v3801
        %3803 = vmatmul.bf16.gmra.mxu0 %v3707
        %v3804 = vpop.f32.mrf.mxu0
        %v3805 = vadd.f32 0.0, %v3804
        %v3806 = vpop.f32.mrf.mxu0
        %v3807 = vadd.f32 0.0, %v3806
        %3808 = vmatmul.bf16.gmra.mxu0 %v3708
        %v3809 = vpop.f32.mrf.mxu0
        %v3810 = vadd.f32 0.0, %v3809
        %v3811 = vpop.f32.mrf.mxu0
        %v3812 = vadd.f32 0.0, %v3811
        %3813 = vdwg.mxu0
        %v3814 = vpack.c.bf16 %v3340, %v3340
        %v3815 = vpack.c.bf16 %v3342, %v3342
        %v3816 = vpack.c.bf16 %v3345, %v3345
        %v3817 = vpack.c.bf16 %v3347, %v3347
        %v3818 = vpack.c.bf16 %v3350, %v3350
        %v3819 = vpack.c.bf16 %v3352, %v3352
        %v3820 = vpack.c.bf16 %v3355, %v3355
        %v3821 = vpack.c.bf16 %v3357, %v3357
        %v3822 = vpack.c.bf16 %v3360, %v3360
        %v3823 = vpack.c.bf16 %v3362, %v3362
        %v3824 = vpack.c.bf16 %v3365, %v3365
        %v3825 = vpack.c.bf16 %v3367, %v3367
        %v3826 = vpack.c.bf16 %v3370, %v3370
        %v3827 = vpack.c.bf16 %v3372, %v3372
        %v3828 = vpack.c.bf16 %v3375, %v3375
        %v3829 = vpack.c.bf16 %v3377, %v3377
        %3830 = vst.msk [vmem:[#allocation5] sm:$0xf] %vm1465, %v3814
        %3831 = vst.msk [vmem:[#allocation5 + $0x4] sm:$0xf] %vm1465, %v3815
        %3832 = vst.msk [vmem:[#allocation5 + $0x8] sm:$0xf] %vm1465, %v3816
        %3833 = vst.msk [vmem:[#allocation5 + $0xc] sm:$0xf] %vm1465, %v3817
        %3834 = vst.msk [vmem:[#allocation5 + $0x10] sm:$0xf] %vm1465, %v3818
        %3835 = vst.msk [vmem:[#allocation5 + $0x14] sm:$0xf] %vm1465, %v3819
        %3836 = vst.msk [vmem:[#allocation5 + $0x18] sm:$0xf] %vm1465, %v3820
        %3837 = vst.msk [vmem:[#allocation5 + $0x1c] sm:$0xf] %vm1465, %v3821
        %3838 = vst.msk [vmem:[#allocation5 + $0x20] sm:$0xf] %vm1465, %v3822
        %3839 = vst.msk [vmem:[#allocation5 + $0x24] sm:$0xf] %vm1465, %v3823
        %3840 = vst.msk [vmem:[#allocation5 + $0x28] sm:$0xf] %vm1465, %v3824
        %3841 = vst.msk [vmem:[#allocation5 + $0x2c] sm:$0xf] %vm1465, %v3825
        %3842 = vst.msk [vmem:[#allocation5 + $0x30] sm:$0xf] %vm1465, %v3826
        %3843 = vst.msk [vmem:[#allocation5 + $0x34] sm:$0xf] %vm1465, %v3827
        %3844 = vst.msk [vmem:[#allocation5 + $0x38] sm:$0xf] %vm1465, %v3828
        %3845 = vst.msk [vmem:[#allocation5 + $0x3c] sm:$0xf] %vm1465, %v3829
        %v3846 = vpack.c.bf16 %v3485, %v3485
        %v3847 = vpack.c.bf16 %v3487, %v3487
        %v3848 = vpack.c.bf16 %v3490, %v3490
        %v3849 = vpack.c.bf16 %v3492, %v3492
        %v3850 = vpack.c.bf16 %v3495, %v3495
        %v3851 = vpack.c.bf16 %v3497, %v3497
        %v3852 = vpack.c.bf16 %v3500, %v3500
        %v3853 = vpack.c.bf16 %v3502, %v3502
        %v3854 = vpack.c.bf16 %v3505, %v3505
        %v3855 = vpack.c.bf16 %v3507, %v3507
        %v3856 = vpack.c.bf16 %v3510, %v3510
        %v3857 = vpack.c.bf16 %v3512, %v3512
        %v3858 = vpack.c.bf16 %v3515, %v3515
        %v3859 = vpack.c.bf16 %v3517, %v3517
        %v3860 = vpack.c.bf16 %v3520, %v3520
        %v3861 = vpack.c.bf16 %v3522, %v3522
        %3878 = vrot.lane.b32.xlu0 %v3846, 32
        %v3879 = vpop.permute.xlu0 %3878
        %3880 = vrot.lane.b32.xlu0 %v3847, 32
        %v3881 = vpop.permute.xlu0 %3880
        %3882 = vrot.lane.b32.xlu0 %v3848, 32
        %v3883 = vpop.permute.xlu0 %3882
        %3884 = vrot.lane.b32.xlu0 %v3849, 32
        %v3885 = vpop.permute.xlu0 %3884
        %3886 = vrot.lane.b32.xlu0 %v3850, 32
        %v3887 = vpop.permute.xlu0 %3886
        %3888 = vrot.lane.b32.xlu0 %v3851, 32
        %v3889 = vpop.permute.xlu0 %3888
        %3890 = vrot.lane.b32.xlu0 %v3852, 32
        %v3891 = vpop.permute.xlu0 %3890
        %3892 = vrot.lane.b32.xlu0 %v3853, 32
        %v3893 = vpop.permute.xlu0 %3892
        %3894 = vrot.lane.b32.xlu0 %v3854, 32
        %v3895 = vpop.permute.xlu0 %3894
        %3896 = vrot.lane.b32.xlu0 %v3855, 32
        %v3897 = vpop.permute.xlu0 %3896
        %3898 = vrot.lane.b32.xlu0 %v3856, 32
        %v3899 = vpop.permute.xlu0 %3898
        %3900 = vrot.lane.b32.xlu0 %v3857, 32
        %v3901 = vpop.permute.xlu0 %3900
        %3902 = vrot.lane.b32.xlu0 %v3858, 32
        %v3903 = vpop.permute.xlu0 %3902
        %3904 = vrot.lane.b32.xlu0 %v3859, 32
        %v3905 = vpop.permute.xlu0 %3904
        %3906 = vrot.lane.b32.xlu0 %v3860, 32
        %v3907 = vpop.permute.xlu0 %3906
        %3908 = vrot.lane.b32.xlu0 %v3861, 32
        %v3909 = vpop.permute.xlu0 %3908
        %vm3926 = vcmask 519424
        %3927 = vst.msk [vmem:[#allocation5] sm:$0xf] %vm3926, %v3879
        %3928 = vst.msk [vmem:[#allocation5 + $0x4] sm:$0xf] %vm3926, %v3881
        %3929 = vst.msk [vmem:[#allocation5 + $0x8] sm:$0xf] %vm3926, %v3883
        %3930 = vst.msk [vmem:[#allocation5 + $0xc] sm:$0xf] %vm3926, %v3885
        %3931 = vst.msk [vmem:[#allocation5 + $0x10] sm:$0xf] %vm3926, %v3887
        %3932 = vst.msk [vmem:[#allocation5 + $0x14] sm:$0xf] %vm3926, %v3889
        %3933 = vst.msk [vmem:[#allocation5 + $0x18] sm:$0xf] %vm3926, %v3891
        %3934 = vst.msk [vmem:[#allocation5 + $0x1c] sm:$0xf] %vm3926, %v3893
        %3935 = vst.msk [vmem:[#allocation5 + $0x20] sm:$0xf] %vm3926, %v3895
        %3936 = vst.msk [vmem:[#allocation5 + $0x24] sm:$0xf] %vm3926, %v3897
        %3937 = vst.msk [vmem:[#allocation5 + $0x28] sm:$0xf] %vm3926, %v3899
        %3938 = vst.msk [vmem:[#allocation5 + $0x2c] sm:$0xf] %vm3926, %v3901
        %3939 = vst.msk [vmem:[#allocation5 + $0x30] sm:$0xf] %vm3926, %v3903
        %3940 = vst.msk [vmem:[#allocation5 + $0x34] sm:$0xf] %vm3926, %v3905
        %3941 = vst.msk [vmem:[#allocation5 + $0x38] sm:$0xf] %vm3926, %v3907
        %3942 = vst.msk [vmem:[#allocation5 + $0x3c] sm:$0xf] %vm3926, %v3909
        %v3943 = vpack.c.bf16 %v3630, %v3630
        %v3944 = vpack.c.bf16 %v3632, %v3632
        %v3945 = vpack.c.bf16 %v3635, %v3635
        %v3946 = vpack.c.bf16 %v3637, %v3637
        %v3947 = vpack.c.bf16 %v3640, %v3640
        %v3948 = vpack.c.bf16 %v3642, %v3642
        %v3949 = vpack.c.bf16 %v3645, %v3645
        %v3950 = vpack.c.bf16 %v3647, %v3647
        %v3951 = vpack.c.bf16 %v3650, %v3650
        %v3952 = vpack.c.bf16 %v3652, %v3652
        %v3953 = vpack.c.bf16 %v3655, %v3655
        %v3954 = vpack.c.bf16 %v3657, %v3657
        %v3955 = vpack.c.bf16 %v3660, %v3660
        %v3956 = vpack.c.bf16 %v3662, %v3662
        %v3957 = vpack.c.bf16 %v3665, %v3665
        %v3958 = vpack.c.bf16 %v3667, %v3667
        %3975 = vrot.lane.b32.xlu0 %v3943, 64
        %v3976 = vpop.permute.xlu0 %3975
        %3977 = vrot.lane.b32.xlu0 %v3944, 64
        %v3978 = vpop.permute.xlu0 %3977
        %3979 = vrot.lane.b32.xlu0 %v3945, 64
        %v3980 = vpop.permute.xlu0 %3979
        %3981 = vrot.lane.b32.xlu0 %v3946, 64
        %v3982 = vpop.permute.xlu0 %3981
        %3983 = vrot.lane.b32.xlu0 %v3947, 64
        %v3984 = vpop.permute.xlu0 %3983
        %3985 = vrot.lane.b32.xlu0 %v3948, 64
        %v3986 = vpop.permute.xlu0 %3985
        %3987 = vrot.lane.b32.xlu0 %v3949, 64
        %v3988 = vpop.permute.xlu0 %3987
        %3989 = vrot.lane.b32.xlu0 %v3950, 64
        %v3990 = vpop.permute.xlu0 %3989
        %3991 = vrot.lane.b32.xlu0 %v3951, 64
        %v3992 = vpop.permute.xlu0 %3991
        %3993 = vrot.lane.b32.xlu0 %v3952, 64
        %v3994 = vpop.permute.xlu0 %3993
        %3995 = vrot.lane.b32.xlu0 %v3953, 64
        %v3996 = vpop.permute.xlu0 %3995
        %3997 = vrot.lane.b32.xlu0 %v3954, 64
        %v3998 = vpop.permute.xlu0 %3997
        %3999 = vrot.lane.b32.xlu0 %v3955, 64
        %v4000 = vpop.permute.xlu0 %3999
        %4001 = vrot.lane.b32.xlu0 %v3956, 64
        %v4002 = vpop.permute.xlu0 %4001
        %4003 = vrot.lane.b32.xlu0 %v3957, 64
        %v4004 = vpop.permute.xlu0 %4003
        %4005 = vrot.lane.b32.xlu0 %v3958, 64
        %v4006 = vpop.permute.xlu0 %4005
        %vm4023 = vcmask 781824
        %4024 = vst.msk [vmem:[#allocation5] sm:$0xf] %vm4023, %v3976
        %4025 = vst.msk [vmem:[#allocation5 + $0x4] sm:$0xf] %vm4023, %v3978
        %4026 = vst.msk [vmem:[#allocation5 + $0x8] sm:$0xf] %vm4023, %v3980
        %4027 = vst.msk [vmem:[#allocation5 + $0xc] sm:$0xf] %vm4023, %v3982
        %4028 = vst.msk [vmem:[#allocation5 + $0x10] sm:$0xf] %vm4023, %v3984
        %4029 = vst.msk [vmem:[#allocation5 + $0x14] sm:$0xf] %vm4023, %v3986
        %4030 = vst.msk [vmem:[#allocation5 + $0x18] sm:$0xf] %vm4023, %v3988
        %4031 = vst.msk [vmem:[#allocation5 + $0x1c] sm:$0xf] %vm4023, %v3990
        %4032 = vst.msk [vmem:[#allocation5 + $0x20] sm:$0xf] %vm4023, %v3992
        %4033 = vst.msk [vmem:[#allocation5 + $0x24] sm:$0xf] %vm4023, %v3994
        %4034 = vst.msk [vmem:[#allocation5 + $0x28] sm:$0xf] %vm4023, %v3996
        %4035 = vst.msk [vmem:[#allocation5 + $0x2c] sm:$0xf] %vm4023, %v3998
        %4036 = vst.msk [vmem:[#allocation5 + $0x30] sm:$0xf] %vm4023, %v4000
        %4037 = vst.msk [vmem:[#allocation5 + $0x34] sm:$0xf] %vm4023, %v4002
        %4038 = vst.msk [vmem:[#allocation5 + $0x38] sm:$0xf] %vm4023, %v4004
        %4039 = vst.msk [vmem:[#allocation5 + $0x3c] sm:$0xf] %vm4023, %v4006
        %v4040 = vpack.c.bf16 %v3775, %v3775
        %v4041 = vpack.c.bf16 %v3777, %v3777
        %v4042 = vpack.c.bf16 %v3780, %v3780
        %v4043 = vpack.c.bf16 %v3782, %v3782
        %v4044 = vpack.c.bf16 %v3785, %v3785
        %v4045 = vpack.c.bf16 %v3787, %v3787
        %v4046 = vpack.c.bf16 %v3790, %v3790
        %v4047 = vpack.c.bf16 %v3792, %v3792
        %v4048 = vpack.c.bf16 %v3795, %v3795
        %v4049 = vpack.c.bf16 %v3797, %v3797
        %v4050 = vpack.c.bf16 %v3800, %v3800
        %v4051 = vpack.c.bf16 %v3802, %v3802
        %v4052 = vpack.c.bf16 %v3805, %v3805
        %v4053 = vpack.c.bf16 %v3807, %v3807
        %v4054 = vpack.c.bf16 %v3810, %v3810
        %v4055 = vpack.c.bf16 %v3812, %v3812
        %4072 = vrot.lane.b32.xlu0 %v4040, 96
        %v4073 = vpop.permute.xlu0 %4072
        %4074 = vrot.lane.b32.xlu0 %v4041, 96
        %v4075 = vpop.permute.xlu0 %4074
        %4076 = vrot.lane.b32.xlu0 %v4042, 96
        %v4077 = vpop.permute.xlu0 %4076
        %4078 = vrot.lane.b32.xlu0 %v4043, 96
        %v4079 = vpop.permute.xlu0 %4078
        %4080 = vrot.lane.b32.xlu0 %v4044, 96
        %v4081 = vpop.permute.xlu0 %4080
        %4082 = vrot.lane.b32.xlu0 %v4045, 96
        %v4083 = vpop.permute.xlu0 %4082
        %4084 = vrot.lane.b32.xlu0 %v4046, 96
        %v4085 = vpop.permute.xlu0 %4084
        %4086 = vrot.lane.b32.xlu0 %v4047, 96
        %v4087 = vpop.permute.xlu0 %4086
        %4088 = vrot.lane.b32.xlu0 %v4048, 96
        %v4089 = vpop.permute.xlu0 %4088
        %4090 = vrot.lane.b32.xlu0 %v4049, 96
        %v4091 = vpop.permute.xlu0 %4090
        %4092 = vrot.lane.b32.xlu0 %v4050, 96
        %v4093 = vpop.permute.xlu0 %4092
        %4094 = vrot.lane.b32.xlu0 %v4051, 96
        %v4095 = vpop.permute.xlu0 %4094
        %4096 = vrot.lane.b32.xlu0 %v4052, 96
        %v4097 = vpop.permute.xlu0 %4096
        %4098 = vrot.lane.b32.xlu0 %v4053, 96
        %v4099 = vpop.permute.xlu0 %4098
        %4100 = vrot.lane.b32.xlu0 %v4054, 96
        %v4101 = vpop.permute.xlu0 %4100
        %4102 = vrot.lane.b32.xlu0 %v4055, 96
        %v4103 = vpop.permute.xlu0 %4102
        %vm4120 = vcmask 1044224
        %4121 = vst.msk [vmem:[#allocation5] sm:$0xf] %vm4120, %v4073
        %4122 = vst.msk [vmem:[#allocation5 + $0x4] sm:$0xf] %vm4120, %v4075
        %4123 = vst.msk [vmem:[#allocation5 + $0x8] sm:$0xf] %vm4120, %v4077
        %4124 = vst.msk [vmem:[#allocation5 + $0xc] sm:$0xf] %vm4120, %v4079
        %4125 = vst.msk [vmem:[#allocation5 + $0x10] sm:$0xf] %vm4120, %v4081
        %4126 = vst.msk [vmem:[#allocation5 + $0x14] sm:$0xf] %vm4120, %v4083
        %4127 = vst.msk [vmem:[#allocation5 + $0x18] sm:$0xf] %vm4120, %v4085
        %4128 = vst.msk [vmem:[#allocation5 + $0x1c] sm:$0xf] %vm4120, %v4087
        %4129 = vst.msk [vmem:[#allocation5 + $0x20] sm:$0xf] %vm4120, %v4089
        %4130 = vst.msk [vmem:[#allocation5 + $0x24] sm:$0xf] %vm4120, %v4091
        %4131 = vst.msk [vmem:[#allocation5 + $0x28] sm:$0xf] %vm4120, %v4093
        %4132 = vst.msk [vmem:[#allocation5 + $0x2c] sm:$0xf] %vm4120, %v4095
        %4133 = vst.msk [vmem:[#allocation5 + $0x30] sm:$0xf] %vm4120, %v4097
        %4134 = vst.msk [vmem:[#allocation5 + $0x34] sm:$0xf] %vm4120, %v4099
        %4135 = vst.msk [vmem:[#allocation5 + $0x38] sm:$0xf] %vm4120, %v4101
        %4136 = vst.msk [vmem:[#allocation5 + $0x3c] sm:$0xf] %vm4120, %v4103
        %v4137 = vld [vmem:[#allocation5] sm:$0xf]
        %v4138 = vld [vmem:[#allocation5 + $0x4] sm:$0xf]
        %v4139 = vld [vmem:[#allocation5 + $0x8] sm:$0xf]
        %v4140 = vld [vmem:[#allocation5 + $0xc] sm:$0xf]
        %v4141 = vld [vmem:[#allocation5 + $0x10] sm:$0xf]
        %v4142 = vld [vmem:[#allocation5 + $0x14] sm:$0xf]
        %v4143 = vld [vmem:[#allocation5 + $0x18] sm:$0xf]
        %v4144 = vld [vmem:[#allocation5 + $0x1c] sm:$0xf]
        %v4145 = vld [vmem:[#allocation5 + $0x20] sm:$0xf]
        %v4146 = vld [vmem:[#allocation5 + $0x24] sm:$0xf]
        %v4147 = vld [vmem:[#allocation5 + $0x28] sm:$0xf]
        %v4148 = vld [vmem:[#allocation5 + $0x2c] sm:$0xf]
        %v4149 = vld [vmem:[#allocation5 + $0x30] sm:$0xf]
        %v4150 = vld [vmem:[#allocation5 + $0x34] sm:$0xf]
        %v4151 = vld [vmem:[#allocation5 + $0x38] sm:$0xf]
        %v4152 = vld [vmem:[#allocation5 + $0x3c] sm:$0xf]
        %v4153 = vld [vmem:[%s5] sm:$0xf]
        %v4154 = vld [vmem:[%s5 + $0x4] sm:$0xf]
        %v4155 = vld [vmem:[%s5 + $0x8] sm:$0xf]
        %v4156 = vld [vmem:[%s5 + $0xc] sm:$0xf]
        %v4157 = vld [vmem:[%s5 + $0x10] sm:$0xf]
        %v4158 = vld [vmem:[%s5 + $0x14] sm:$0xf]
        %v4159 = vld [vmem:[%s5 + $0x18] sm:$0xf]
        %v4160 = vld [vmem:[%s5 + $0x1c] sm:$0xf]
        %v4161 = vld [vmem:[%s5 + $0x20] sm:$0xf]
        %v4162 = vld [vmem:[%s5 + $0x24] sm:$0xf]
        %v4163 = vld [vmem:[%s5 + $0x28] sm:$0xf]
        %v4164 = vld [vmem:[%s5 + $0x2c] sm:$0xf]
        %v4165 = vld [vmem:[%s5 + $0x30] sm:$0xf]
        %v4166 = vld [vmem:[%s5 + $0x34] sm:$0xf]
        %v4167 = vld [vmem:[%s5 + $0x38] sm:$0xf]
        %v4168 = vld [vmem:[%s5 + $0x3c] sm:$0xf]
        %v4169 = vld [vmem:[%s6] sm:$0x1]
        %v4171 = vperm.slane %v4169, 0
        %v4189 = vunpack.c.l.b16 %v4137
        %v4190 = vunpack.c.l.b16 %v4138
        %v4191 = vunpack.c.l.b16 %v4139
        %v4192 = vunpack.c.l.b16 %v4140
        %v4193 = vunpack.c.l.b16 %v4141
        %v4194 = vunpack.c.l.b16 %v4142
        %v4195 = vunpack.c.l.b16 %v4143
        %v4196 = vunpack.c.l.b16 %v4144
        %v4197 = vunpack.c.l.b16 %v4145
        %v4198 = vunpack.c.l.b16 %v4146
        %v4199 = vunpack.c.l.b16 %v4147
        %v4200 = vunpack.c.l.b16 %v4148
        %v4201 = vunpack.c.l.b16 %v4149
        %v4202 = vunpack.c.l.b16 %v4150
        %v4203 = vunpack.c.l.b16 %v4151
        %v4204 = vunpack.c.l.b16 %v4152
        %v4205 = vpack.c.b16 %v4190, %v4189
        %v4206 = vpack.c.b16 %v4192, %v4191
        %v4207 = vpack.c.b16 %v4194, %v4193
        %v4208 = vpack.c.b16 %v4196, %v4195
        %v4209 = vpack.c.b16 %v4198, %v4197
        %v4210 = vpack.c.b16 %v4200, %v4199
        %v4211 = vpack.c.b16 %v4202, %v4201
        %v4212 = vpack.c.b16 %v4204, %v4203
        %v4237 = vunpack.c.l.b16 %v4153
        %v4238 = vunpack.c.l.b16 %v4154
        %v4239 = vunpack.c.l.b16 %v4155
        %v4240 = vunpack.c.l.b16 %v4156
        %v4241 = vunpack.c.l.b16 %v4157
        %v4242 = vunpack.c.l.b16 %v4158
        %v4243 = vunpack.c.l.b16 %v4159
        %v4244 = vunpack.c.l.b16 %v4160
        %v4245 = vunpack.c.l.b16 %v4161
        %v4246 = vunpack.c.l.b16 %v4162
        %v4247 = vunpack.c.l.b16 %v4163
        %v4248 = vunpack.c.l.b16 %v4164
        %v4249 = vunpack.c.l.b16 %v4165
        %v4250 = vunpack.c.l.b16 %v4166
        %v4251 = vunpack.c.l.b16 %v4167
        %v4252 = vunpack.c.l.b16 %v4168
        %v4253 = vpack.c.b16 %v4238, %v4237
        %v4254 = vpack.c.b16 %v4240, %v4239
        %v4255 = vpack.c.b16 %v4242, %v4241
        %v4256 = vpack.c.b16 %v4244, %v4243
        %v4257 = vpack.c.b16 %v4246, %v4245
        %v4258 = vpack.c.b16 %v4248, %v4247
        %v4259 = vpack.c.b16 %v4250, %v4249
        %v4260 = vpack.c.b16 %v4252, %v4251
        %4269 = vmatpush.bf16.msra.mxu0 %v4260
        %4270 = vmatpush.bf16.msra.mxu0 %v4259
        %4271 = vmatpush.bf16.msra.mxu0 %v4258
        %4272 = vmatpush.bf16.msra.mxu0 %v4257
        %4273 = vmatpush.bf16.msra.mxu0 %v4256
        %4274 = vmatpush.bf16.msra.mxu0 %v4255
        %4275 = vmatpush.bf16.msra.mxu0 %v4254
        %4276 = vmatpush.bf16.msra.mxu0 %v4253
        %4277 = vmatmul.bf16.gmra.mxu0 %v4205
        %v4278 = vpop.f32.mrf.mxu0
        %v4279 = vadd.f32 %v4171, %v4278
        %v4280 = vpop.f32.mrf.mxu0
        %v4281 = vadd.f32 %v4171, %v4280
        %4282 = vmatmul.bf16.gmra.mxu0 %v4206
        %v4283 = vpop.f32.mrf.mxu0
        %v4284 = vadd.f32 %v4171, %v4283
        %v4285 = vpop.f32.mrf.mxu0
        %v4286 = vadd.f32 %v4171, %v4285
        %4287 = vmatmul.bf16.gmra.mxu0 %v4207
        %v4288 = vpop.f32.mrf.mxu0
        %v4289 = vadd.f32 %v4171, %v4288
        %v4290 = vpop.f32.mrf.mxu0
        %v4291 = vadd.f32 %v4171, %v4290
        %4292 = vmatmul.bf16.gmra.mxu0 %v4208
        %v4293 = vpop.f32.mrf.mxu0
        %v4294 = vadd.f32 %v4171, %v4293
        %v4295 = vpop.f32.mrf.mxu0
        %v4296 = vadd.f32 %v4171, %v4295
        %4297 = vmatmul.bf16.gmra.mxu0 %v4209
        %v4298 = vpop.f32.mrf.mxu0
        %v4299 = vadd.f32 %v4171, %v4298
        %v4300 = vpop.f32.mrf.mxu0
        %v4301 = vadd.f32 %v4171, %v4300
        %4302 = vmatmul.bf16.gmra.mxu0 %v4210
        %v4303 = vpop.f32.mrf.mxu0
        %v4304 = vadd.f32 %v4171, %v4303
        %v4305 = vpop.f32.mrf.mxu0
        %v4306 = vadd.f32 %v4171, %v4305
        %4307 = vmatmul.bf16.gmra.mxu0 %v4211
        %v4308 = vpop.f32.mrf.mxu0
        %v4309 = vadd.f32 %v4171, %v4308
        %v4310 = vpop.f32.mrf.mxu0
        %v4311 = vadd.f32 %v4171, %v4310
        %4312 = vmatmul.bf16.gmra.mxu0 %v4212
        %v4313 = vpop.f32.mrf.mxu0
        %v4314 = vadd.f32 %v4171, %v4313
        %v4315 = vpop.f32.mrf.mxu0
        %v4316 = vadd.f32 %v4171, %v4315
        %4317 = vdwg.mxu0
        %v4318 = vadd.f32 %v1308, %v4279
        %v4319 = vadd.f32 %v1309, %v4281
        %v4320 = vadd.f32 %v1310, %v4284
        %v4321 = vadd.f32 %v1311, %v4286
        %v4322 = vadd.f32 %v1312, %v4289
        %v4323 = vadd.f32 %v1313, %v4291
        %v4324 = vadd.f32 %v1314, %v4294
        %v4325 = vadd.f32 %v1315, %v4296
        %v4326 = vadd.f32 %v1316, %v4299
        %v4327 = vadd.f32 %v1317, %v4301
        %v4328 = vadd.f32 %v1318, %v4304
        %v4329 = vadd.f32 %v1319, %v4306
        %v4330 = vadd.f32 %v1320, %v4309
        %v4331 = vadd.f32 %v1321, %v4311
        %v4332 = vadd.f32 %v1322, %v4314
        %v4333 = vadd.f32 %v1323, %v4316
        %4334 = vadd.xlane.f32.xlu0 %v4318
        %v4335 = vpop.xlane.xlu0 %4334
        %4336 = vadd.xlane.f32.xlu0 %v4319
        %v4337 = vpop.xlane.xlu0 %4336
        %4338 = vadd.xlane.f32.xlu0 %v4320
        %v4339 = vpop.xlane.xlu0 %4338
        %4340 = vadd.xlane.f32.xlu0 %v4321
        %v4341 = vpop.xlane.xlu0 %4340
        %4342 = vadd.xlane.f32.xlu0 %v4322
        %v4343 = vpop.xlane.xlu0 %4342
        %4344 = vadd.xlane.f32.xlu0 %v4323
        %v4345 = vpop.xlane.xlu0 %4344
        %4346 = vadd.xlane.f32.xlu0 %v4324
        %v4347 = vpop.xlane.xlu0 %4346
        %4348 = vadd.xlane.f32.xlu0 %v4325
        %v4349 = vpop.xlane.xlu0 %4348
        %4350 = vadd.xlane.f32.xlu0 %v4326
        %v4351 = vpop.xlane.xlu0 %4350
        %4352 = vadd.xlane.f32.xlu0 %v4327
        %v4353 = vpop.xlane.xlu0 %4352
        %4354 = vadd.xlane.f32.xlu0 %v4328
        %v4355 = vpop.xlane.xlu0 %4354
        %4356 = vadd.xlane.f32.xlu0 %v4329
        %v4357 = vpop.xlane.xlu0 %4356
        %4358 = vadd.xlane.f32.xlu0 %v4330
        %v4359 = vpop.xlane.xlu0 %4358
        %4360 = vadd.xlane.f32.xlu0 %v4331
        %v4361 = vpop.xlane.xlu0 %4360
        %4362 = vadd.xlane.f32.xlu0 %v4332
        %v4363 = vpop.xlane.xlu0 %4362
        %4364 = vadd.xlane.f32.xlu0 %v4333
        %v4365 = vpop.xlane.xlu0 %4364
        %v4366 = vrcp.pop 128.0
        %v4367 = vmul.f32 128.0, %v4366
        %v4368 = vsub.f32 1.0, %v4367
        %v4369 = vmul.f32 %v4366, %v4368
        %v4370 = vadd.f32 %v4366, %v4369
        %vm4371 = vweird.f32 %v4366
        %v4372 = vsel %vm4371, %v4366, %v4370
        %v4373 = vmul.f32 %v4335, %v4372
        %v4374 = vmul.f32 %v4337, %v4372
        %v4375 = vmul.f32 %v4339, %v4372
        %v4376 = vmul.f32 %v4341, %v4372
        %v4377 = vmul.f32 %v4343, %v4372
        %v4378 = vmul.f32 %v4345, %v4372
        %v4379 = vmul.f32 %v4347, %v4372
        %v4380 = vmul.f32 %v4349, %v4372
        %v4381 = vmul.f32 %v4351, %v4372
        %v4382 = vmul.f32 %v4353, %v4372
        %v4383 = vmul.f32 %v4355, %v4372
        %v4384 = vmul.f32 %v4357, %v4372
        %v4385 = vmul.f32 %v4359, %v4372
        %v4386 = vmul.f32 %v4361, %v4372
        %v4387 = vmul.f32 %v4363, %v4372
        %v4388 = vmul.f32 %v4365, %v4372
        %v4389 = vsub.f32 %v4318, %v4373
        %v4390 = vsub.f32 %v4319, %v4374
        %v4391 = vsub.f32 %v4320, %v4375
        %v4392 = vsub.f32 %v4321, %v4376
        %v4393 = vsub.f32 %v4322, %v4377
        %v4394 = vsub.f32 %v4323, %v4378
        %v4395 = vsub.f32 %v4324, %v4379
        %v4396 = vsub.f32 %v4325, %v4380
        %v4397 = vsub.f32 %v4326, %v4381
        %v4398 = vsub.f32 %v4327, %v4382
        %v4399 = vsub.f32 %v4328, %v4383
        %v4400 = vsub.f32 %v4329, %v4384
        %v4401 = vsub.f32 %v4330, %v4385
        %v4402 = vsub.f32 %v4331, %v4386
        %v4403 = vsub.f32 %v4332, %v4387
        %v4404 = vsub.f32 %v4333, %v4388
        %v4405 = vmul.f32 %v4389, %v4389
        %v4406 = vmul.f32 %v4390, %v4390
        %v4407 = vmul.f32 %v4391, %v4391
        %v4408 = vmul.f32 %v4392, %v4392
        %v4409 = vmul.f32 %v4393, %v4393
        %v4410 = vmul.f32 %v4394, %v4394
        %v4411 = vmul.f32 %v4395, %v4395
        %v4412 = vmul.f32 %v4396, %v4396
        %v4413 = vmul.f32 %v4397, %v4397
        %v4414 = vmul.f32 %v4398, %v4398
        %v4415 = vmul.f32 %v4399, %v4399
        %v4416 = vmul.f32 %v4400, %v4400
        %v4417 = vmul.f32 %v4401, %v4401
        %v4418 = vmul.f32 %v4402, %v4402
        %v4419 = vmul.f32 %v4403, %v4403
        %v4420 = vmul.f32 %v4404, %v4404
        %4421 = vadd.xlane.f32.xlu0 %v4405
        %v4422 = vpop.xlane.xlu0 %4421
        %4423 = vadd.xlane.f32.xlu0 %v4406
        %v4424 = vpop.xlane.xlu0 %4423
        %4425 = vadd.xlane.f32.xlu0 %v4407
        %v4426 = vpop.xlane.xlu0 %4425
        %4427 = vadd.xlane.f32.xlu0 %v4408
        %v4428 = vpop.xlane.xlu0 %4427
        %4429 = vadd.xlane.f32.xlu0 %v4409
        %v4430 = vpop.xlane.xlu0 %4429
        %4431 = vadd.xlane.f32.xlu0 %v4410
        %v4432 = vpop.xlane.xlu0 %4431
        %4433 = vadd.xlane.f32.xlu0 %v4411
        %v4434 = vpop.xlane.xlu0 %4433
        %4435 = vadd.xlane.f32.xlu0 %v4412
        %v4436 = vpop.xlane.xlu0 %4435
        %4437 = vadd.xlane.f32.xlu0 %v4413
        %v4438 = vpop.xlane.xlu0 %4437
        %4439 = vadd.xlane.f32.xlu0 %v4414
        %v4440 = vpop.xlane.xlu0 %4439
        %4441 = vadd.xlane.f32.xlu0 %v4415
        %v4442 = vpop.xlane.xlu0 %4441
        %4443 = vadd.xlane.f32.xlu0 %v4416
        %v4444 = vpop.xlane.xlu0 %4443
        %4445 = vadd.xlane.f32.xlu0 %v4417
        %v4446 = vpop.xlane.xlu0 %4445
        %4447 = vadd.xlane.f32.xlu0 %v4418
        %v4448 = vpop.xlane.xlu0 %4447
        %4449 = vadd.xlane.f32.xlu0 %v4419
        %v4450 = vpop.xlane.xlu0 %4449
        %4451 = vadd.xlane.f32.xlu0 %v4420
        %v4452 = vpop.xlane.xlu0 %4451
        %v4453 = vmul.f32 %v4422, %v4372
        %v4454 = vmul.f32 %v4424, %v4372
        %v4455 = vmul.f32 %v4426, %v4372
        %v4456 = vmul.f32 %v4428, %v4372
        %v4457 = vmul.f32 %v4430, %v4372
        %v4458 = vmul.f32 %v4432, %v4372
        %v4459 = vmul.f32 %v4434, %v4372
        %v4460 = vmul.f32 %v4436, %v4372
        %v4461 = vmul.f32 %v4438, %v4372
        %v4462 = vmul.f32 %v4440, %v4372
        %v4463 = vmul.f32 %v4442, %v4372
        %v4464 = vmul.f32 %v4444, %v4372
        %v4465 = vmul.f32 %v4446, %v4372
        %v4466 = vmul.f32 %v4448, %v4372
        %v4467 = vmul.f32 %v4450, %v4372
        %v4468 = vmul.f32 %v4452, %v4372
        %v4469 = vadd.f32 %v4453, 1e-05
        %v4470 = vadd.f32 %v4454, 1e-05
        %v4471 = vadd.f32 %v4455, 1e-05
        %v4472 = vadd.f32 %v4456, 1e-05
        %v4473 = vadd.f32 %v4457, 1e-05
        %v4474 = vadd.f32 %v4458, 1e-05
        %v4475 = vadd.f32 %v4459, 1e-05
        %v4476 = vadd.f32 %v4460, 1e-05
        %v4477 = vadd.f32 %v4461, 1e-05
        %v4478 = vadd.f32 %v4462, 1e-05
        %v4479 = vadd.f32 %v4463, 1e-05
        %v4480 = vadd.f32 %v4464, 1e-05
        %v4481 = vadd.f32 %v4465, 1e-05
        %v4482 = vadd.f32 %v4466, 1e-05
        %v4483 = vadd.f32 %v4467, 1e-05
        %v4484 = vadd.f32 %v4468, 1e-05
        %v4485 = vrsqrt.pop %v4469
        %v4486 = vmul.f32 %v4485, %v4469
        %v4487 = vmul.f32 %v4486, %v4485
        %v4488 = vmul.f32 0.5, %v4487
        %v4489 = vsub.f32 1.5, %v4488
        %v4490 = vmul.f32 %v4485, %v4489
        %vm4491 = vweird.f32 %v4469
        %vm4492 = vweird.f32 %v4485
        %vm4493 = vmor %vm4491, %vm4492
        %v4494 = vsel %vm4493, %v4485, %v4490
        %v4495 = vrsqrt.pop %v4470
        %v4496 = vmul.f32 %v4495, %v4470
        %v4497 = vmul.f32 %v4496, %v4495
        %v4498 = vmul.f32 0.5, %v4497
        %v4499 = vsub.f32 1.5, %v4498
        %v4500 = vmul.f32 %v4495, %v4499
        %vm4501 = vweird.f32 %v4470
        %vm4502 = vweird.f32 %v4495
        %vm4503 = vmor %vm4501, %vm4502
        %v4504 = vsel %vm4503, %v4495, %v4500
        %v4505 = vrsqrt.pop %v4471
        %v4506 = vmul.f32 %v4505, %v4471
        %v4507 = vmul.f32 %v4506, %v4505
        %v4508 = vmul.f32 0.5, %v4507
        %v4509 = vsub.f32 1.5, %v4508
        %v4510 = vmul.f32 %v4505, %v4509
        %vm4511 = vweird.f32 %v4471
        %vm4512 = vweird.f32 %v4505
        %vm4513 = vmor %vm4511, %vm4512
        %v4514 = vsel %vm4513, %v4505, %v4510
        %v4515 = vrsqrt.pop %v4472
        %v4516 = vmul.f32 %v4515, %v4472
        %v4517 = vmul.f32 %v4516, %v4515
        %v4518 = vmul.f32 0.5, %v4517
        %v4519 = vsub.f32 1.5, %v4518
        %v4520 = vmul.f32 %v4515, %v4519
        %vm4521 = vweird.f32 %v4472
        %vm4522 = vweird.f32 %v4515
        %vm4523 = vmor %vm4521, %vm4522
        %v4524 = vsel %vm4523, %v4515, %v4520
        %v4525 = vrsqrt.pop %v4473
        %v4526 = vmul.f32 %v4525, %v4473
        %v4527 = vmul.f32 %v4526, %v4525
        %v4528 = vmul.f32 0.5, %v4527
        %v4529 = vsub.f32 1.5, %v4528
        %v4530 = vmul.f32 %v4525, %v4529
        %vm4531 = vweird.f32 %v4473
        %vm4532 = vweird.f32 %v4525
        %vm4533 = vmor %vm4531, %vm4532
        %v4534 = vsel %vm4533, %v4525, %v4530
        %v4535 = vrsqrt.pop %v4474
        %v4536 = vmul.f32 %v4535, %v4474
        %v4537 = vmul.f32 %v4536, %v4535
        %v4538 = vmul.f32 0.5, %v4537
        %v4539 = vsub.f32 1.5, %v4538
        %v4540 = vmul.f32 %v4535, %v4539
        %vm4541 = vweird.f32 %v4474
        %vm4542 = vweird.f32 %v4535
        %vm4543 = vmor %vm4541, %vm4542
        %v4544 = vsel %vm4543, %v4535, %v4540
        %v4545 = vrsqrt.pop %v4475
        %v4546 = vmul.f32 %v4545, %v4475
        %v4547 = vmul.f32 %v4546, %v4545
        %v4548 = vmul.f32 0.5, %v4547
        %v4549 = vsub.f32 1.5, %v4548
        %v4550 = vmul.f32 %v4545, %v4549
        %vm4551 = vweird.f32 %v4475
        %vm4552 = vweird.f32 %v4545
        %vm4553 = vmor %vm4551, %vm4552
        %v4554 = vsel %vm4553, %v4545, %v4550
        %v4555 = vrsqrt.pop %v4476
        %v4556 = vmul.f32 %v4555, %v4476
        %v4557 = vmul.f32 %v4556, %v4555
        %v4558 = vmul.f32 0.5, %v4557
        %v4559 = vsub.f32 1.5, %v4558
        %v4560 = vmul.f32 %v4555, %v4559
        %vm4561 = vweird.f32 %v4476
        %vm4562 = vweird.f32 %v4555
        %vm4563 = vmor %vm4561, %vm4562
        %v4564 = vsel %vm4563, %v4555, %v4560
        %v4565 = vrsqrt.pop %v4477
        %v4566 = vmul.f32 %v4565, %v4477
        %v4567 = vmul.f32 %v4566, %v4565
        %v4568 = vmul.f32 0.5, %v4567
        %v4569 = vsub.f32 1.5, %v4568
        %v4570 = vmul.f32 %v4565, %v4569
        %vm4571 = vweird.f32 %v4477
        %vm4572 = vweird.f32 %v4565
        %vm4573 = vmor %vm4571, %vm4572
        %v4574 = vsel %vm4573, %v4565, %v4570
        %v4575 = vrsqrt.pop %v4478
        %v4576 = vmul.f32 %v4575, %v4478
        %v4577 = vmul.f32 %v4576, %v4575
        %v4578 = vmul.f32 0.5, %v4577
        %v4579 = vsub.f32 1.5, %v4578
        %v4580 = vmul.f32 %v4575, %v4579
        %vm4581 = vweird.f32 %v4478
        %vm4582 = vweird.f32 %v4575
        %vm4583 = vmor %vm4581, %vm4582
        %v4584 = vsel %vm4583, %v4575, %v4580
        %v4585 = vrsqrt.pop %v4479
        %v4586 = vmul.f32 %v4585, %v4479
        %v4587 = vmul.f32 %v4586, %v4585
        %v4588 = vmul.f32 0.5, %v4587
        %v4589 = vsub.f32 1.5, %v4588
        %v4590 = vmul.f32 %v4585, %v4589
        %vm4591 = vweird.f32 %v4479
        %vm4592 = vweird.f32 %v4585
        %vm4593 = vmor %vm4591, %vm4592
        %v4594 = vsel %vm4593, %v4585, %v4590
        %v4595 = vrsqrt.pop %v4480
        %v4596 = vmul.f32 %v4595, %v4480
        %v4597 = vmul.f32 %v4596, %v4595
        %v4598 = vmul.f32 0.5, %v4597
        %v4599 = vsub.f32 1.5, %v4598
        %v4600 = vmul.f32 %v4595, %v4599
        %vm4601 = vweird.f32 %v4480
        %vm4602 = vweird.f32 %v4595
        %vm4603 = vmor %vm4601, %vm4602
        %v4604 = vsel %vm4603, %v4595, %v4600
        %v4605 = vrsqrt.pop %v4481
        %v4606 = vmul.f32 %v4605, %v4481
        %v4607 = vmul.f32 %v4606, %v4605
        %v4608 = vmul.f32 0.5, %v4607
        %v4609 = vsub.f32 1.5, %v4608
        %v4610 = vmul.f32 %v4605, %v4609
        %vm4611 = vweird.f32 %v4481
        %vm4612 = vweird.f32 %v4605
        %vm4613 = vmor %vm4611, %vm4612
        %v4614 = vsel %vm4613, %v4605, %v4610
        %v4615 = vrsqrt.pop %v4482
        %v4616 = vmul.f32 %v4615, %v4482
        %v4617 = vmul.f32 %v4616, %v4615
        %v4618 = vmul.f32 0.5, %v4617
        %v4619 = vsub.f32 1.5, %v4618
        %v4620 = vmul.f32 %v4615, %v4619
        %vm4621 = vweird.f32 %v4482
        %vm4622 = vweird.f32 %v4615
        %vm4623 = vmor %vm4621, %vm4622
        %v4624 = vsel %vm4623, %v4615, %v4620
        %v4625 = vrsqrt.pop %v4483
        %v4626 = vmul.f32 %v4625, %v4483
        %v4627 = vmul.f32 %v4626, %v4625
        %v4628 = vmul.f32 0.5, %v4627
        %v4629 = vsub.f32 1.5, %v4628
        %v4630 = vmul.f32 %v4625, %v4629
        %vm4631 = vweird.f32 %v4483
        %vm4632 = vweird.f32 %v4625
        %vm4633 = vmor %vm4631, %vm4632
        %v4634 = vsel %vm4633, %v4625, %v4630
        %v4635 = vrsqrt.pop %v4484
        %v4636 = vmul.f32 %v4635, %v4484
        %v4637 = vmul.f32 %v4636, %v4635
        %v4638 = vmul.f32 0.5, %v4637
        %v4639 = vsub.f32 1.5, %v4638
        %v4640 = vmul.f32 %v4635, %v4639
        %vm4641 = vweird.f32 %v4484
        %vm4642 = vweird.f32 %v4635
        %vm4643 = vmor %vm4641, %vm4642
        %v4644 = vsel %vm4643, %v4635, %v4640
        %v4645 = vmul.f32 %v4389, %v4494
        %v4646 = vmul.f32 %v4390, %v4504
        %v4647 = vmul.f32 %v4391, %v4514
        %v4648 = vmul.f32 %v4392, %v4524
        %v4649 = vmul.f32 %v4393, %v4534
        %v4650 = vmul.f32 %v4394, %v4544
        %v4651 = vmul.f32 %v4395, %v4554
        %v4652 = vmul.f32 %v4396, %v4564
        %v4653 = vmul.f32 %v4397, %v4574
        %v4654 = vmul.f32 %v4398, %v4584
        %v4655 = vmul.f32 %v4399, %v4594
        %v4656 = vmul.f32 %v4400, %v4604
        %v4657 = vmul.f32 %v4401, %v4614
        %v4658 = vmul.f32 %v4402, %v4624
        %v4659 = vmul.f32 %v4403, %v4634
        %v4660 = vmul.f32 %v4404, %v4644
        %v4661 = vld [vmem:[%s7] sm:$0x1]
        %v4663 = vperm.slane %v4661, 0
        %v4665 = vmul.f32 %v4645, %v4663
        %v4666 = vmul.f32 %v4646, %v4663
        %v4667 = vmul.f32 %v4647, %v4663
        %v4668 = vmul.f32 %v4648, %v4663
        %v4669 = vmul.f32 %v4649, %v4663
        %v4670 = vmul.f32 %v4650, %v4663
        %v4671 = vmul.f32 %v4651, %v4663
        %v4672 = vmul.f32 %v4652, %v4663
        %v4673 = vmul.f32 %v4653, %v4663
        %v4674 = vmul.f32 %v4654, %v4663
        %v4675 = vmul.f32 %v4655, %v4663
        %v4676 = vmul.f32 %v4656, %v4663
        %v4677 = vmul.f32 %v4657, %v4663
        %v4678 = vmul.f32 %v4658, %v4663
        %v4679 = vmul.f32 %v4659, %v4663
        %v4680 = vmul.f32 %v4660, %v4663
        %v4681 = vld [vmem:[#allocation8] sm:$0x1]
        %v4683 = vperm.slane %v4681, 0
        %v4685 = vadd.f32 %v4665, %v4683
        %v4686 = vadd.f32 %v4666, %v4683
        %v4687 = vadd.f32 %v4667, %v4683
        %v4688 = vadd.f32 %v4668, %v4683
        %v4689 = vadd.f32 %v4669, %v4683
        %v4690 = vadd.f32 %v4670, %v4683
        %v4691 = vadd.f32 %v4671, %v4683
        %v4692 = vadd.f32 %v4672, %v4683
        %v4693 = vadd.f32 %v4673, %v4683
        %v4694 = vadd.f32 %v4674, %v4683
        %v4695 = vadd.f32 %v4675, %v4683
        %v4696 = vadd.f32 %v4676, %v4683
        %v4697 = vadd.f32 %v4677, %v4683
        %v4698 = vadd.f32 %v4678, %v4683
        %v4699 = vadd.f32 %v4679, %v4683
        %v4700 = vadd.f32 %v4680, %v4683
        %v4701 = vpack.c.bf16 %v4686, %v4685
        %v4702 = vpack.c.bf16 %v4688, %v4687
        %v4703 = vpack.c.bf16 %v4690, %v4689
        %v4704 = vpack.c.bf16 %v4692, %v4691
        %v4705 = vpack.c.bf16 %v4694, %v4693
        %v4706 = vpack.c.bf16 %v4696, %v4695
        %v4707 = vpack.c.bf16 %v4698, %v4697
        %v4708 = vpack.c.bf16 %v4700, %v4699
        %v4709 = vld [vmem:[%s9] sm:$0xff]
        %v4710 = vld [vmem:[%s9 + $0x8] sm:$0xff]
        %v4711 = vld [vmem:[%s9 + $0x10] sm:$0xff]
        %v4712 = vld [vmem:[%s9 + $0x18] sm:$0xff]
        %v4713 = vld [vmem:[%s9 + $0x20] sm:$0xff]
        %v4714 = vld [vmem:[%s9 + $0x28] sm:$0xff]
        %v4715 = vld [vmem:[%s9 + $0x30] sm:$0xff]
        %v4716 = vld [vmem:[%s9 + $0x38] sm:$0xff]
        %v4717 = vld [vmem:[%s9 + $0x40] sm:$0xff]
        %v4718 = vld [vmem:[%s9 + $0x48] sm:$0xff]
        %v4719 = vld [vmem:[%s9 + $0x50] sm:$0xff]
        %v4720 = vld [vmem:[%s9 + $0x58] sm:$0xff]
        %v4721 = vld [vmem:[%s9 + $0x60] sm:$0xff]
        %v4722 = vld [vmem:[%s9 + $0x68] sm:$0xff]
        %v4723 = vld [vmem:[%s9 + $0x70] sm:$0xff]
        %v4724 = vld [vmem:[%s9 + $0x78] sm:$0xff]
        %v4725 = vld [vmem:[#allocation10] sm:$0x3]
        %v4727 = vperm.slane %v4725, 0
        %v4728 = vperm.slane %v4725, 1
        %v4747 = vunpack.c.l.b16 %v4709
        %v4748 = vunpack.c.h.b16 %v4709
        %v4749 = vunpack.c.l.b16 %v4710
        %v4750 = vunpack.c.h.b16 %v4710
        %v4751 = vunpack.c.l.b16 %v4711
        %v4752 = vunpack.c.h.b16 %v4711
        %v4753 = vunpack.c.l.b16 %v4712
        %v4754 = vunpack.c.h.b16 %v4712
        %v4755 = vunpack.c.l.b16 %v4713
        %v4756 = vunpack.c.h.b16 %v4713
        %v4757 = vunpack.c.l.b16 %v4714
        %v4758 = vunpack.c.h.b16 %v4714
        %v4759 = vunpack.c.l.b16 %v4715
        %v4760 = vunpack.c.h.b16 %v4715
        %v4761 = vunpack.c.l.b16 %v4716
        %v4762 = vunpack.c.h.b16 %v4716
        %v4763 = vunpack.c.l.b16 %v4717
        %v4764 = vunpack.c.h.b16 %v4717
        %v4765 = vunpack.c.l.b16 %v4718
        %v4766 = vunpack.c.h.b16 %v4718
        %v4767 = vunpack.c.l.b16 %v4719
        %v4768 = vunpack.c.h.b16 %v4719
        %v4769 = vunpack.c.l.b16 %v4720
        %v4770 = vunpack.c.h.b16 %v4720
        %v4771 = vunpack.c.l.b16 %v4721
        %v4772 = vunpack.c.h.b16 %v4721
        %v4773 = vunpack.c.l.b16 %v4722
        %v4774 = vunpack.c.h.b16 %v4722
        %v4775 = vunpack.c.l.b16 %v4723
        %v4776 = vunpack.c.h.b16 %v4723
        %v4777 = vunpack.c.l.b16 %v4724
        %v4778 = vunpack.c.h.b16 %v4724
        %v4779 = vpack.c.b16 %v4749, %v4747
        %v4780 = vpack.c.b16 %v4750, %v4748
        %v4781 = vpack.c.b16 %v4753, %v4751
        %v4782 = vpack.c.b16 %v4754, %v4752
        %v4783 = vpack.c.b16 %v4757, %v4755
        %v4784 = vpack.c.b16 %v4758, %v4756
        %v4785 = vpack.c.b16 %v4761, %v4759
        %v4786 = vpack.c.b16 %v4762, %v4760
        %v4787 = vpack.c.b16 %v4765, %v4763
        %v4788 = vpack.c.b16 %v4766, %v4764
        %v4789 = vpack.c.b16 %v4769, %v4767
        %v4790 = vpack.c.b16 %v4770, %v4768
        %v4791 = vpack.c.b16 %v4773, %v4771
        %v4792 = vpack.c.b16 %v4774, %v4772
        %v4793 = vpack.c.b16 %v4777, %v4775
        %v4794 = vpack.c.b16 %v4778, %v4776
        %4811 = vmatpush.bf16.msra.mxu0 %v4793
        %4812 = vmatpush.bf16.msra.mxu0 %v4791
        %4813 = vmatpush.bf16.msra.mxu0 %v4789
        %4814 = vmatpush.bf16.msra.mxu0 %v4787
        %4815 = vmatpush.bf16.msra.mxu0 %v4785
        %4816 = vmatpush.bf16.msra.mxu0 %v4783
        %4817 = vmatpush.bf16.msra.mxu0 %v4781
        %4818 = vmatpush.bf16.msra.mxu0 %v4779
        %4819 = vmatmul.bf16.gmra.mxu0 %v4701
        %v4820 = vpop.f32.mrf.mxu0
        %v4821 = vadd.f32 %v4727, %v4820
        %v4822 = vpop.f32.mrf.mxu0
        %v4823 = vadd.f32 %v4727, %v4822
        %4824 = vmatmul.bf16.gmra.mxu0 %v4702
        %v4825 = vpop.f32.mrf.mxu0
        %v4826 = vadd.f32 %v4727, %v4825
        %v4827 = vpop.f32.mrf.mxu0
        %v4828 = vadd.f32 %v4727, %v4827
        %4829 = vmatmul.bf16.gmra.mxu0 %v4703
        %v4830 = vpop.f32.mrf.mxu0
        %v4831 = vadd.f32 %v4727, %v4830
        %v4832 = vpop.f32.mrf.mxu0
        %v4833 = vadd.f32 %v4727, %v4832
        %4834 = vmatmul.bf16.gmra.mxu0 %v4704
        %v4835 = vpop.f32.mrf.mxu0
        %v4836 = vadd.f32 %v4727, %v4835
        %v4837 = vpop.f32.mrf.mxu0
        %v4838 = vadd.f32 %v4727, %v4837
        %4839 = vmatmul.bf16.gmra.mxu0 %v4705
        %v4840 = vpop.f32.mrf.mxu0
        %v4841 = vadd.f32 %v4727, %v4840
        %v4842 = vpop.f32.mrf.mxu0
        %v4843 = vadd.f32 %v4727, %v4842
        %4844 = vmatmul.bf16.gmra.mxu0 %v4706
        %v4845 = vpop.f32.mrf.mxu0
        %v4846 = vadd.f32 %v4727, %v4845
        %v4847 = vpop.f32.mrf.mxu0
        %v4848 = vadd.f32 %v4727, %v4847
        %4849 = vmatmul.bf16.gmra.mxu0 %v4707
        %v4850 = vpop.f32.mrf.mxu0
        %v4851 = vadd.f32 %v4727, %v4850
        %v4852 = vpop.f32.mrf.mxu0
        %v4853 = vadd.f32 %v4727, %v4852
        %4854 = vmatmul.bf16.gmra.mxu0 %v4708
        %v4855 = vpop.f32.mrf.mxu0
        %v4856 = vadd.f32 %v4727, %v4855
        %v4857 = vpop.f32.mrf.mxu0
        %v4858 = vadd.f32 %v4727, %v4857
        %4859 = vdwg.mxu0
        %4860 = vmatpush.bf16.msra.mxu0 %v4794
        %4861 = vmatpush.bf16.msra.mxu0 %v4792
        %4862 = vmatpush.bf16.msra.mxu0 %v4790
        %4863 = vmatpush.bf16.msra.mxu0 %v4788
        %4864 = vmatpush.bf16.msra.mxu0 %v4786
        %4865 = vmatpush.bf16.msra.mxu0 %v4784
        %4866 = vmatpush.bf16.msra.mxu0 %v4782
        %4867 = vmatpush.bf16.msra.mxu0 %v4780
        %4868 = vmatmul.bf16.gmra.mxu0 %v4701
        %v4869 = vpop.f32.mrf.mxu0
        %v4870 = vadd.f32 %v4728, %v4869
        %v4871 = vpop.f32.mrf.mxu0
        %v4872 = vadd.f32 %v4728, %v4871
        %4873 = vmatmul.bf16.gmra.mxu0 %v4702
        %v4874 = vpop.f32.mrf.mxu0
        %v4875 = vadd.f32 %v4728, %v4874
        %v4876 = vpop.f32.mrf.mxu0
        %v4877 = vadd.f32 %v4728, %v4876
        %4878 = vmatmul.bf16.gmra.mxu0 %v4703
        %v4879 = vpop.f32.mrf.mxu0
        %v4880 = vadd.f32 %v4728, %v4879
        %v4881 = vpop.f32.mrf.mxu0
        %v4882 = vadd.f32 %v4728, %v4881
        %4883 = vmatmul.bf16.gmra.mxu0 %v4704
        %v4884 = vpop.f32.mrf.mxu0
        %v4885 = vadd.f32 %v4728, %v4884
        %v4886 = vpop.f32.mrf.mxu0
        %v4887 = vadd.f32 %v4728, %v4886
        %4888 = vmatmul.bf16.gmra.mxu0 %v4705
        %v4889 = vpop.f32.mrf.mxu0
        %v4890 = vadd.f32 %v4728, %v4889
        %v4891 = vpop.f32.mrf.mxu0
        %v4892 = vadd.f32 %v4728, %v4891
        %4893 = vmatmul.bf16.gmra.mxu0 %v4706
        %v4894 = vpop.f32.mrf.mxu0
        %v4895 = vadd.f32 %v4728, %v4894
        %v4896 = vpop.f32.mrf.mxu0
        %v4897 = vadd.f32 %v4728, %v4896
        %4898 = vmatmul.bf16.gmra.mxu0 %v4707
        %v4899 = vpop.f32.mrf.mxu0
        %v4900 = vadd.f32 %v4728, %v4899
        %v4901 = vpop.f32.mrf.mxu0
        %v4902 = vadd.f32 %v4728, %v4901
        %4903 = vmatmul.bf16.gmra.mxu0 %v4708
        %v4904 = vpop.f32.mrf.mxu0
        %v4905 = vadd.f32 %v4728, %v4904
        %v4906 = vpop.f32.mrf.mxu0
        %v4907 = vadd.f32 %v4728, %v4906
        %4908 = vdwg.mxu0
        %v4909 = vmax.f32 %v4821, 0.0
        %v4910 = vmax.f32 %v4870, 0.0
        %v4911 = vmax.f32 %v4823, 0.0
        %v4912 = vmax.f32 %v4872, 0.0
        %v4913 = vmax.f32 %v4826, 0.0
        %v4914 = vmax.f32 %v4875, 0.0
        %v4915 = vmax.f32 %v4828, 0.0
        %v4916 = vmax.f32 %v4877, 0.0
        %v4917 = vmax.f32 %v4831, 0.0
        %v4918 = vmax.f32 %v4880, 0.0
        %v4919 = vmax.f32 %v4833, 0.0
        %v4920 = vmax.f32 %v4882, 0.0
        %v4921 = vmax.f32 %v4836, 0.0
        %v4922 = vmax.f32 %v4885, 0.0
        %v4923 = vmax.f32 %v4838, 0.0
        %v4924 = vmax.f32 %v4887, 0.0
        %v4925 = vmax.f32 %v4841, 0.0
        %v4926 = vmax.f32 %v4890, 0.0
        %v4927 = vmax.f32 %v4843, 0.0
        %v4928 = vmax.f32 %v4892, 0.0
        %v4929 = vmax.f32 %v4846, 0.0
        %v4930 = vmax.f32 %v4895, 0.0
        %v4931 = vmax.f32 %v4848, 0.0
        %v4932 = vmax.f32 %v4897, 0.0
        %v4933 = vmax.f32 %v4851, 0.0
        %v4934 = vmax.f32 %v4900, 0.0
        %v4935 = vmax.f32 %v4853, 0.0
        %v4936 = vmax.f32 %v4902, 0.0
        %v4937 = vmax.f32 %v4856, 0.0
        %v4938 = vmax.f32 %v4905, 0.0
        %v4939 = vmax.f32 %v4858, 0.0
        %v4940 = vmax.f32 %v4907, 0.0
        %v4941 = vpack.c.bf16 %v4911, %v4909
        %v4942 = vpack.c.bf16 %v4912, %v4910
        %v4943 = vpack.c.bf16 %v4915, %v4913
        %v4944 = vpack.c.bf16 %v4916, %v4914
        %v4945 = vpack.c.bf16 %v4919, %v4917
        %v4946 = vpack.c.bf16 %v4920, %v4918
        %v4947 = vpack.c.bf16 %v4923, %v4921
        %v4948 = vpack.c.bf16 %v4924, %v4922
        %v4949 = vpack.c.bf16 %v4927, %v4925
        %v4950 = vpack.c.bf16 %v4928, %v4926
        %v4951 = vpack.c.bf16 %v4931, %v4929
        %v4952 = vpack.c.bf16 %v4932, %v4930
        %v4953 = vpack.c.bf16 %v4935, %v4933
        %v4954 = vpack.c.bf16 %v4936, %v4934
        %v4955 = vpack.c.bf16 %v4939, %v4937
        %v4956 = vpack.c.bf16 %v4940, %v4938
        %v4957 = vld [vmem:[%s11] sm:$0xf]
        %v4958 = vld [vmem:[%s11 + $0x4] sm:$0xf]
        %v4959 = vld [vmem:[%s11 + $0x8] sm:$0xf]
        %v4960 = vld [vmem:[%s11 + $0xc] sm:$0xf]
        %v4961 = vld [vmem:[%s11 + $0x10] sm:$0xf]
        %v4962 = vld [vmem:[%s11 + $0x14] sm:$0xf]
        %v4963 = vld [vmem:[%s11 + $0x18] sm:$0xf]
        %v4964 = vld [vmem:[%s11 + $0x1c] sm:$0xf]
        %v4965 = vld [vmem:[%s11 + $0x20] sm:$0xf]
        %v4966 = vld [vmem:[%s11 + $0x24] sm:$0xf]
        %v4967 = vld [vmem:[%s11 + $0x28] sm:$0xf]
        %v4968 = vld [vmem:[%s11 + $0x2c] sm:$0xf]
        %v4969 = vld [vmem:[%s11 + $0x30] sm:$0xf]
        %v4970 = vld [vmem:[%s11 + $0x34] sm:$0xf]
        %v4971 = vld [vmem:[%s11 + $0x38] sm:$0xf]
        %v4972 = vld [vmem:[%s11 + $0x3c] sm:$0xf]
        %v4973 = vld [vmem:[%s11 + $0x40] sm:$0xf]
        %v4974 = vld [vmem:[%s11 + $0x44] sm:$0xf]
        %v4975 = vld [vmem:[%s11 + $0x48] sm:$0xf]
        %v4976 = vld [vmem:[%s11 + $0x4c] sm:$0xf]
        %v4977 = vld [vmem:[%s11 + $0x50] sm:$0xf]
        %v4978 = vld [vmem:[%s11 + $0x54] sm:$0xf]
        %v4979 = vld [vmem:[%s11 + $0x58] sm:$0xf]
        %v4980 = vld [vmem:[%s11 + $0x5c] sm:$0xf]
        %v4981 = vld [vmem:[%s11 + $0x60] sm:$0xf]
        %v4982 = vld [vmem:[%s11 + $0x64] sm:$0xf]
        %v4983 = vld [vmem:[%s11 + $0x68] sm:$0xf]
        %v4984 = vld [vmem:[%s11 + $0x6c] sm:$0xf]
        %v4985 = vld [vmem:[%s11 + $0x70] sm:$0xf]
        %v4986 = vld [vmem:[%s11 + $0x74] sm:$0xf]
        %v4987 = vld [vmem:[%s11 + $0x78] sm:$0xf]
        %v4988 = vld [vmem:[%s11 + $0x7c] sm:$0xf]
        %v4989 = vld [vmem:[#allocation11] sm:$0x1]
        %v4991 = vperm.slane %v4989, 0
        %v5025 = vunpack.c.l.b16 %v4957
        %v5026 = vunpack.c.l.b16 %v4958
        %v5027 = vunpack.c.l.b16 %v4959
        %v5028 = vunpack.c.l.b16 %v4960
        %v5029 = vunpack.c.l.b16 %v4961
        %v5030 = vunpack.c.l.b16 %v4962
        %v5031 = vunpack.c.l.b16 %v4963
        %v5032 = vunpack.c.l.b16 %v4964
        %v5033 = vunpack.c.l.b16 %v4965
        %v5034 = vunpack.c.l.b16 %v4966
        %v5035 = vunpack.c.l.b16 %v4967
        %v5036 = vunpack.c.l.b16 %v4968
        %v5037 = vunpack.c.l.b16 %v4969
        %v5038 = vunpack.c.l.b16 %v4970
        %v5039 = vunpack.c.l.b16 %v4971
        %v5040 = vunpack.c.l.b16 %v4972
        %v5041 = vunpack.c.l.b16 %v4973
        %v5042 = vunpack.c.l.b16 %v4974
        %v5043 = vunpack.c.l.b16 %v4975
        %v5044 = vunpack.c.l.b16 %v4976
        %v5045 = vunpack.c.l.b16 %v4977
        %v5046 = vunpack.c.l.b16 %v4978
        %v5047 = vunpack.c.l.b16 %v4979
        %v5048 = vunpack.c.l.b16 %v4980
        %v5049 = vunpack.c.l.b16 %v4981
        %v5050 = vunpack.c.l.b16 %v4982
        %v5051 = vunpack.c.l.b16 %v4983
        %v5052 = vunpack.c.l.b16 %v4984
        %v5053 = vunpack.c.l.b16 %v4985
        %v5054 = vunpack.c.l.b16 %v4986
        %v5055 = vunpack.c.l.b16 %v4987
        %v5056 = vunpack.c.l.b16 %v4988
        %v5057 = vpack.c.b16 %v5026, %v5025
        %v5058 = vpack.c.b16 %v5028, %v5027
        %v5059 = vpack.c.b16 %v5030, %v5029
        %v5060 = vpack.c.b16 %v5032, %v5031
        %v5061 = vpack.c.b16 %v5034, %v5033
        %v5062 = vpack.c.b16 %v5036, %v5035
        %v5063 = vpack.c.b16 %v5038, %v5037
        %v5064 = vpack.c.b16 %v5040, %v5039
        %v5065 = vpack.c.b16 %v5042, %v5041
        %v5066 = vpack.c.b16 %v5044, %v5043
        %v5067 = vpack.c.b16 %v5046, %v5045
        %v5068 = vpack.c.b16 %v5048, %v5047
        %v5069 = vpack.c.b16 %v5050, %v5049
        %v5070 = vpack.c.b16 %v5052, %v5051
        %v5071 = vpack.c.b16 %v5054, %v5053
        %v5072 = vpack.c.b16 %v5056, %v5055
        %5089 = vmatpush.bf16.msra.mxu0 %v5064
        %5090 = vmatpush.bf16.msra.mxu0 %v5063
        %5091 = vmatpush.bf16.msra.mxu0 %v5062
        %5092 = vmatpush.bf16.msra.mxu0 %v5061
        %5093 = vmatpush.bf16.msra.mxu0 %v5060
        %5094 = vmatpush.bf16.msra.mxu0 %v5059
        %5095 = vmatpush.bf16.msra.mxu0 %v5058
        %5096 = vmatpush.bf16.msra.mxu0 %v5057
        %5097 = vmatmul.bf16.gmra.mxu0 %v4941
        %v5098 = vpop.f32.mrf.mxu0
        %v5099 = vadd.f32 %v4991, %v5098
        %v5100 = vpop.f32.mrf.mxu0
        %v5101 = vadd.f32 %v4991, %v5100
        %5102 = vmatmul.bf16.gmra.mxu0 %v4943
        %v5103 = vpop.f32.mrf.mxu0
        %v5104 = vadd.f32 %v4991, %v5103
        %v5105 = vpop.f32.mrf.mxu0
        %v5106 = vadd.f32 %v4991, %v5105
        %5107 = vmatmul.bf16.gmra.mxu0 %v4945
        %v5108 = vpop.f32.mrf.mxu0
        %v5109 = vadd.f32 %v4991, %v5108
        %v5110 = vpop.f32.mrf.mxu0
        %v5111 = vadd.f32 %v4991, %v5110
        %5112 = vmatmul.bf16.gmra.mxu0 %v4947
        %v5113 = vpop.f32.mrf.mxu0
        %v5114 = vadd.f32 %v4991, %v5113
        %v5115 = vpop.f32.mrf.mxu0
        %v5116 = vadd.f32 %v4991, %v5115
        %5117 = vmatmul.bf16.gmra.mxu0 %v4949
        %v5118 = vpop.f32.mrf.mxu0
        %v5119 = vadd.f32 %v4991, %v5118
        %v5120 = vpop.f32.mrf.mxu0
        %v5121 = vadd.f32 %v4991, %v5120
        %5122 = vmatmul.bf16.gmra.mxu0 %v4951
        %v5123 = vpop.f32.mrf.mxu0
        %v5124 = vadd.f32 %v4991, %v5123
        %v5125 = vpop.f32.mrf.mxu0
        %v5126 = vadd.f32 %v4991, %v5125
        %5127 = vmatmul.bf16.gmra.mxu0 %v4953
        %v5128 = vpop.f32.mrf.mxu0
        %v5129 = vadd.f32 %v4991, %v5128
        %v5130 = vpop.f32.mrf.mxu0
        %v5131 = vadd.f32 %v4991, %v5130
        %5132 = vmatmul.bf16.gmra.mxu0 %v4955
        %v5133 = vpop.f32.mrf.mxu0
        %v5134 = vadd.f32 %v4991, %v5133
        %v5135 = vpop.f32.mrf.mxu0
        %v5136 = vadd.f32 %v4991, %v5135
        %5137 = vdwg.mxu0
        %5138 = vmatpush.bf16.msra.mxu0 %v5072
        %5139 = vmatpush.bf16.msra.mxu0 %v5071
        %5140 = vmatpush.bf16.msra.mxu0 %v5070
        %5141 = vmatpush.bf16.msra.mxu0 %v5069
        %5142 = vmatpush.bf16.msra.mxu0 %v5068
        %5143 = vmatpush.bf16.msra.mxu0 %v5067
        %5144 = vmatpush.bf16.msra.mxu0 %v5066
        %5145 = vmatpush.bf16.msra.mxu0 %v5065
        %5146 = vmatmul.bf16.gmra.mxu0 %v4942
        %v5147 = vpop.f32.mrf.mxu0
        %v5148 = vadd.f32 %v5099, %v5147
        %v5149 = vpop.f32.mrf.mxu0
        %v5150 = vadd.f32 %v5101, %v5149
        %5151 = vmatmul.bf16.gmra.mxu0 %v4944
        %v5152 = vpop.f32.mrf.mxu0
        %v5153 = vadd.f32 %v5104, %v5152
        %v5154 = vpop.f32.mrf.mxu0
        %v5155 = vadd.f32 %v5106, %v5154
        %5156 = vmatmul.bf16.gmra.mxu0 %v4946
        %v5157 = vpop.f32.mrf.mxu0
        %v5158 = vadd.f32 %v5109, %v5157
        %v5159 = vpop.f32.mrf.mxu0
        %v5160 = vadd.f32 %v5111, %v5159
        %5161 = vmatmul.bf16.gmra.mxu0 %v4948
        %v5162 = vpop.f32.mrf.mxu0
        %v5163 = vadd.f32 %v5114, %v5162
        %v5164 = vpop.f32.mrf.mxu0
        %v5165 = vadd.f32 %v5116, %v5164
        %5166 = vmatmul.bf16.gmra.mxu0 %v4950
        %v5167 = vpop.f32.mrf.mxu0
        %v5168 = vadd.f32 %v5119, %v5167
        %v5169 = vpop.f32.mrf.mxu0
        %v5170 = vadd.f32 %v5121, %v5169
        %5171 = vmatmul.bf16.gmra.mxu0 %v4952
        %v5172 = vpop.f32.mrf.mxu0
        %v5173 = vadd.f32 %v5124, %v5172
        %v5174 = vpop.f32.mrf.mxu0
        %v5175 = vadd.f32 %v5126, %v5174
        %5176 = vmatmul.bf16.gmra.mxu0 %v4954
        %v5177 = vpop.f32.mrf.mxu0
        %v5178 = vadd.f32 %v5129, %v5177
        %v5179 = vpop.f32.mrf.mxu0
        %v5180 = vadd.f32 %v5131, %v5179
        %5181 = vmatmul.bf16.gmra.mxu0 %v4956
        %v5182 = vpop.f32.mrf.mxu0
        %v5183 = vadd.f32 %v5134, %v5182
        %v5184 = vpop.f32.mrf.mxu0
        %v5185 = vadd.f32 %v5136, %v5184
        %5186 = vdwg.mxu0
        %v5187 = vadd.f32 %v4685, %v5148
        %v5188 = vadd.f32 %v4686, %v5150
        %v5189 = vadd.f32 %v4687, %v5153
        %v5190 = vadd.f32 %v4688, %v5155
        %v5191 = vadd.f32 %v4689, %v5158
        %v5192 = vadd.f32 %v4690, %v5160
        %v5193 = vadd.f32 %v4691, %v5163
        %v5194 = vadd.f32 %v4692, %v5165
        %v5195 = vadd.f32 %v4693, %v5168
        %v5196 = vadd.f32 %v4694, %v5170
        %v5197 = vadd.f32 %v4695, %v5173
        %v5198 = vadd.f32 %v4696, %v5175
        %v5199 = vadd.f32 %v4697, %v5178
        %v5200 = vadd.f32 %v4698, %v5180
        %v5201 = vadd.f32 %v4699, %v5183
        %v5202 = vadd.f32 %v4700, %v5185
        %5203 = vadd.xlane.f32.xlu0 %v5187
        %v5204 = vpop.xlane.xlu0 %5203
        %5205 = vadd.xlane.f32.xlu0 %v5188
        %v5206 = vpop.xlane.xlu0 %5205
        %5207 = vadd.xlane.f32.xlu0 %v5189
        %v5208 = vpop.xlane.xlu0 %5207
        %5209 = vadd.xlane.f32.xlu0 %v5190
        %v5210 = vpop.xlane.xlu0 %5209
        %5211 = vadd.xlane.f32.xlu0 %v5191
        %v5212 = vpop.xlane.xlu0 %5211
        %5213 = vadd.xlane.f32.xlu0 %v5192
        %v5214 = vpop.xlane.xlu0 %5213
        %5215 = vadd.xlane.f32.xlu0 %v5193
        %v5216 = vpop.xlane.xlu0 %5215
        %5217 = vadd.xlane.f32.xlu0 %v5194
        %v5218 = vpop.xlane.xlu0 %5217
        %5219 = vadd.xlane.f32.xlu0 %v5195
        %v5220 = vpop.xlane.xlu0 %5219
        %5221 = vadd.xlane.f32.xlu0 %v5196
        %v5222 = vpop.xlane.xlu0 %5221
        %5223 = vadd.xlane.f32.xlu0 %v5197
        %v5224 = vpop.xlane.xlu0 %5223
        %5225 = vadd.xlane.f32.xlu0 %v5198
        %v5226 = vpop.xlane.xlu0 %5225
        %5227 = vadd.xlane.f32.xlu0 %v5199
        %v5228 = vpop.xlane.xlu0 %5227
        %5229 = vadd.xlane.f32.xlu0 %v5200
        %v5230 = vpop.xlane.xlu0 %5229
        %5231 = vadd.xlane.f32.xlu0 %v5201
        %v5232 = vpop.xlane.xlu0 %5231
        %5233 = vadd.xlane.f32.xlu0 %v5202
        %v5234 = vpop.xlane.xlu0 %5233
        %v5235 = vmul.f32 %v5204, %v4372
        %v5236 = vmul.f32 %v5206, %v4372
        %v5237 = vmul.f32 %v5208, %v4372
        %v5238 = vmul.f32 %v5210, %v4372
        %v5239 = vmul.f32 %v5212, %v4372
        %v5240 = vmul.f32 %v5214, %v4372
        %v5241 = vmul.f32 %v5216, %v4372
        %v5242 = vmul.f32 %v5218, %v4372
        %v5243 = vmul.f32 %v5220, %v4372
        %v5244 = vmul.f32 %v5222, %v4372
        %v5245 = vmul.f32 %v5224, %v4372
        %v5246 = vmul.f32 %v5226, %v4372
        %v5247 = vmul.f32 %v5228, %v4372
        %v5248 = vmul.f32 %v5230, %v4372
        %v5249 = vmul.f32 %v5232, %v4372
        %v5250 = vmul.f32 %v5234, %v4372
        %v5251 = vsub.f32 %v5187, %v5235
        %v5252 = vsub.f32 %v5188, %v5236
        %v5253 = vsub.f32 %v5189, %v5237
        %v5254 = vsub.f32 %v5190, %v5238
        %v5255 = vsub.f32 %v5191, %v5239
        %v5256 = vsub.f32 %v5192, %v5240
        %v5257 = vsub.f32 %v5193, %v5241
        %v5258 = vsub.f32 %v5194, %v5242
        %v5259 = vsub.f32 %v5195, %v5243
        %v5260 = vsub.f32 %v5196, %v5244
        %v5261 = vsub.f32 %v5197, %v5245
        %v5262 = vsub.f32 %v5198, %v5246
        %v5263 = vsub.f32 %v5199, %v5247
        %v5264 = vsub.f32 %v5200, %v5248
        %v5265 = vsub.f32 %v5201, %v5249
        %v5266 = vsub.f32 %v5202, %v5250
        %v5267 = vmul.f32 %v5251, %v5251
        %v5268 = vmul.f32 %v5252, %v5252
        %v5269 = vmul.f32 %v5253, %v5253
        %v5270 = vmul.f32 %v5254, %v5254
        %v5271 = vmul.f32 %v5255, %v5255
        %v5272 = vmul.f32 %v5256, %v5256
        %v5273 = vmul.f32 %v5257, %v5257
        %v5274 = vmul.f32 %v5258, %v5258
        %v5275 = vmul.f32 %v5259, %v5259
        %v5276 = vmul.f32 %v5260, %v5260
        %v5277 = vmul.f32 %v5261, %v5261
        %v5278 = vmul.f32 %v5262, %v5262
        %v5279 = vmul.f32 %v5263, %v5263
        %v5280 = vmul.f32 %v5264, %v5264
        %v5281 = vmul.f32 %v5265, %v5265
        %v5282 = vmul.f32 %v5266, %v5266
        %5283 = vadd.xlane.f32.xlu0 %v5267
        %v5284 = vpop.xlane.xlu0 %5283
        %5285 = vadd.xlane.f32.xlu0 %v5268
        %v5286 = vpop.xlane.xlu0 %5285
        %5287 = vadd.xlane.f32.xlu0 %v5269
        %v5288 = vpop.xlane.xlu0 %5287
        %5289 = vadd.xlane.f32.xlu0 %v5270
        %v5290 = vpop.xlane.xlu0 %5289
        %5291 = vadd.xlane.f32.xlu0 %v5271
        %v5292 = vpop.xlane.xlu0 %5291
        %5293 = vadd.xlane.f32.xlu0 %v5272
        %v5294 = vpop.xlane.xlu0 %5293
        %5295 = vadd.xlane.f32.xlu0 %v5273
        %v5296 = vpop.xlane.xlu0 %5295
        %5297 = vadd.xlane.f32.xlu0 %v5274
        %v5298 = vpop.xlane.xlu0 %5297
        %5299 = vadd.xlane.f32.xlu0 %v5275
        %v5300 = vpop.xlane.xlu0 %5299
        %5301 = vadd.xlane.f32.xlu0 %v5276
        %v5302 = vpop.xlane.xlu0 %5301
        %5303 = vadd.xlane.f32.xlu0 %v5277
        %v5304 = vpop.xlane.xlu0 %5303
        %5305 = vadd.xlane.f32.xlu0 %v5278
        %v5306 = vpop.xlane.xlu0 %5305
        %5307 = vadd.xlane.f32.xlu0 %v5279
        %v5308 = vpop.xlane.xlu0 %5307
        %5309 = vadd.xlane.f32.xlu0 %v5280
        %v5310 = vpop.xlane.xlu0 %5309
        %5311 = vadd.xlane.f32.xlu0 %v5281
        %v5312 = vpop.xlane.xlu0 %5311
        %5313 = vadd.xlane.f32.xlu0 %v5282
        %v5314 = vpop.xlane.xlu0 %5313
        %v5315 = vmul.f32 %v5284, %v4372
        %v5316 = vmul.f32 %v5286, %v4372
        %v5317 = vmul.f32 %v5288, %v4372
        %v5318 = vmul.f32 %v5290, %v4372
        %v5319 = vmul.f32 %v5292, %v4372
        %v5320 = vmul.f32 %v5294, %v4372
        %v5321 = vmul.f32 %v5296, %v4372
        %v5322 = vmul.f32 %v5298, %v4372
        %v5323 = vmul.f32 %v5300, %v4372
        %v5324 = vmul.f32 %v5302, %v4372
        %v5325 = vmul.f32 %v5304, %v4372
        %v5326 = vmul.f32 %v5306, %v4372
        %v5327 = vmul.f32 %v5308, %v4372
        %v5328 = vmul.f32 %v5310, %v4372
        %v5329 = vmul.f32 %v5312, %v4372
        %v5330 = vmul.f32 %v5314, %v4372
        %v5331 = vadd.f32 %v5315, 1e-05
        %v5332 = vadd.f32 %v5316, 1e-05
        %v5333 = vadd.f32 %v5317, 1e-05
        %v5334 = vadd.f32 %v5318, 1e-05
        %v5335 = vadd.f32 %v5319, 1e-05
        %v5336 = vadd.f32 %v5320, 1e-05
        %v5337 = vadd.f32 %v5321, 1e-05
        %v5338 = vadd.f32 %v5322, 1e-05
        %v5339 = vadd.f32 %v5323, 1e-05
        %v5340 = vadd.f32 %v5324, 1e-05
        %v5341 = vadd.f32 %v5325, 1e-05
        %v5342 = vadd.f32 %v5326, 1e-05
        %v5343 = vadd.f32 %v5327, 1e-05
        %v5344 = vadd.f32 %v5328, 1e-05
        %v5345 = vadd.f32 %v5329, 1e-05
        %v5346 = vadd.f32 %v5330, 1e-05
        %v5347 = vrsqrt.pop %v5331
        %v5348 = vmul.f32 %v5347, %v5331
        %v5349 = vmul.f32 %v5348, %v5347
        %v5350 = vmul.f32 0.5, %v5349
        %v5351 = vsub.f32 1.5, %v5350
        %v5352 = vmul.f32 %v5347, %v5351
        %vm5353 = vweird.f32 %v5331
        %vm5354 = vweird.f32 %v5347
        %vm5355 = vmor %vm5353, %vm5354
        %v5356 = vsel %vm5355, %v5347, %v5352
        %v5357 = vrsqrt.pop %v5332
        %v5358 = vmul.f32 %v5357, %v5332
        %v5359 = vmul.f32 %v5358, %v5357
        %v5360 = vmul.f32 0.5, %v5359
        %v5361 = vsub.f32 1.5, %v5360
        %v5362 = vmul.f32 %v5357, %v5361
        %vm5363 = vweird.f32 %v5332
        %vm5364 = vweird.f32 %v5357
        %vm5365 = vmor %vm5363, %vm5364
        %v5366 = vsel %vm5365, %v5357, %v5362
        %v5367 = vrsqrt.pop %v5333
        %v5368 = vmul.f32 %v5367, %v5333
        %v5369 = vmul.f32 %v5368, %v5367
        %v5370 = vmul.f32 0.5, %v5369
        %v5371 = vsub.f32 1.5, %v5370
        %v5372 = vmul.f32 %v5367, %v5371
        %vm5373 = vweird.f32 %v5333
        %vm5374 = vweird.f32 %v5367
        %vm5375 = vmor %vm5373, %vm5374
        %v5376 = vsel %vm5375, %v5367, %v5372
        %v5377 = vrsqrt.pop %v5334
        %v5378 = vmul.f32 %v5377, %v5334
        %v5379 = vmul.f32 %v5378, %v5377
        %v5380 = vmul.f32 0.5, %v5379
        %v5381 = vsub.f32 1.5, %v5380
        %v5382 = vmul.f32 %v5377, %v5381
        %vm5383 = vweird.f32 %v5334
        %vm5384 = vweird.f32 %v5377
        %vm5385 = vmor %vm5383, %vm5384
        %v5386 = vsel %vm5385, %v5377, %v5382
        %v5387 = vrsqrt.pop %v5335
        %v5388 = vmul.f32 %v5387, %v5335
        %v5389 = vmul.f32 %v5388, %v5387
        %v5390 = vmul.f32 0.5, %v5389
        %v5391 = vsub.f32 1.5, %v5390
        %v5392 = vmul.f32 %v5387, %v5391
        %vm5393 = vweird.f32 %v5335
        %vm5394 = vweird.f32 %v5387
        %vm5395 = vmor %vm5393, %vm5394
        %v5396 = vsel %vm5395, %v5387, %v5392
        %v5397 = vrsqrt.pop %v5336
        %v5398 = vmul.f32 %v5397, %v5336
        %v5399 = vmul.f32 %v5398, %v5397
        %v5400 = vmul.f32 0.5, %v5399
        %v5401 = vsub.f32 1.5, %v5400
        %v5402 = vmul.f32 %v5397, %v5401
        %vm5403 = vweird.f32 %v5336
        %vm5404 = vweird.f32 %v5397
        %vm5405 = vmor %vm5403, %vm5404
        %v5406 = vsel %vm5405, %v5397, %v5402
        %v5407 = vrsqrt.pop %v5337
        %v5408 = vmul.f32 %v5407, %v5337
        %v5409 = vmul.f32 %v5408, %v5407
        %v5410 = vmul.f32 0.5, %v5409
        %v5411 = vsub.f32 1.5, %v5410
        %v5412 = vmul.f32 %v5407, %v5411
        %vm5413 = vweird.f32 %v5337
        %vm5414 = vweird.f32 %v5407
        %vm5415 = vmor %vm5413, %vm5414
        %v5416 = vsel %vm5415, %v5407, %v5412
        %v5417 = vrsqrt.pop %v5338
        %v5418 = vmul.f32 %v5417, %v5338
        %v5419 = vmul.f32 %v5418, %v5417
        %v5420 = vmul.f32 0.5, %v5419
        %v5421 = vsub.f32 1.5, %v5420
        %v5422 = vmul.f32 %v5417, %v5421
        %vm5423 = vweird.f32 %v5338
        %vm5424 = vweird.f32 %v5417
        %vm5425 = vmor %vm5423, %vm5424
        %v5426 = vsel %vm5425, %v5417, %v5422
        %v5427 = vrsqrt.pop %v5339
        %v5428 = vmul.f32 %v5427, %v5339
        %v5429 = vmul.f32 %v5428, %v5427
        %v5430 = vmul.f32 0.5, %v5429
        %v5431 = vsub.f32 1.5, %v5430
        %v5432 = vmul.f32 %v5427, %v5431
        %vm5433 = vweird.f32 %v5339
        %vm5434 = vweird.f32 %v5427
        %vm5435 = vmor %vm5433, %vm5434
        %v5436 = vsel %vm5435, %v5427, %v5432
        %v5437 = vrsqrt.pop %v5340
        %v5438 = vmul.f32 %v5437, %v5340
        %v5439 = vmul.f32 %v5438, %v5437
        %v5440 = vmul.f32 0.5, %v5439
        %v5441 = vsub.f32 1.5, %v5440
        %v5442 = vmul.f32 %v5437, %v5441
        %vm5443 = vweird.f32 %v5340
        %vm5444 = vweird.f32 %v5437
        %vm5445 = vmor %vm5443, %vm5444
        %v5446 = vsel %vm5445, %v5437, %v5442
        %v5447 = vrsqrt.pop %v5341
        %v5448 = vmul.f32 %v5447, %v5341
        %v5449 = vmul.f32 %v5448, %v5447
        %v5450 = vmul.f32 0.5, %v5449
        %v5451 = vsub.f32 1.5, %v5450
        %v5452 = vmul.f32 %v5447, %v5451
        %vm5453 = vweird.f32 %v5341
        %vm5454 = vweird.f32 %v5447
        %vm5455 = vmor %vm5453, %vm5454
        %v5456 = vsel %vm5455, %v5447, %v5452
        %v5457 = vrsqrt.pop %v5342
        %v5458 = vmul.f32 %v5457, %v5342
        %v5459 = vmul.f32 %v5458, %v5457
        %v5460 = vmul.f32 0.5, %v5459
        %v5461 = vsub.f32 1.5, %v5460
        %v5462 = vmul.f32 %v5457, %v5461
        %vm5463 = vweird.f32 %v5342
        %vm5464 = vweird.f32 %v5457
        %vm5465 = vmor %vm5463, %vm5464
        %v5466 = vsel %vm5465, %v5457, %v5462
        %v5467 = vrsqrt.pop %v5343
        %v5468 = vmul.f32 %v5467, %v5343
        %v5469 = vmul.f32 %v5468, %v5467
        %v5470 = vmul.f32 0.5, %v5469
        %v5471 = vsub.f32 1.5, %v5470
        %v5472 = vmul.f32 %v5467, %v5471
        %vm5473 = vweird.f32 %v5343
        %vm5474 = vweird.f32 %v5467
        %vm5475 = vmor %vm5473, %vm5474
        %v5476 = vsel %vm5475, %v5467, %v5472
        %v5477 = vrsqrt.pop %v5344
        %v5478 = vmul.f32 %v5477, %v5344
        %v5479 = vmul.f32 %v5478, %v5477
        %v5480 = vmul.f32 0.5, %v5479
        %v5481 = vsub.f32 1.5, %v5480
        %v5482 = vmul.f32 %v5477, %v5481
        %vm5483 = vweird.f32 %v5344
        %vm5484 = vweird.f32 %v5477
        %vm5485 = vmor %vm5483, %vm5484
        %v5486 = vsel %vm5485, %v5477, %v5482
        %v5487 = vrsqrt.pop %v5345
        %v5488 = vmul.f32 %v5487, %v5345
        %v5489 = vmul.f32 %v5488, %v5487
        %v5490 = vmul.f32 0.5, %v5489
        %v5491 = vsub.f32 1.5, %v5490
        %v5492 = vmul.f32 %v5487, %v5491
        %vm5493 = vweird.f32 %v5345
        %vm5494 = vweird.f32 %v5487
        %vm5495 = vmor %vm5493, %vm5494
        %v5496 = vsel %vm5495, %v5487, %v5492
        %v5497 = vrsqrt.pop %v5346
        %v5498 = vmul.f32 %v5497, %v5346
        %v5499 = vmul.f32 %v5498, %v5497
        %v5500 = vmul.f32 0.5, %v5499
        %v5501 = vsub.f32 1.5, %v5500
        %v5502 = vmul.f32 %v5497, %v5501
        %vm5503 = vweird.f32 %v5346
        %vm5504 = vweird.f32 %v5497
        %vm5505 = vmor %vm5503, %vm5504
        %v5506 = vsel %vm5505, %v5497, %v5502
        %v5507 = vmul.f32 %v5251, %v5356
        %v5508 = vmul.f32 %v5252, %v5366
        %v5509 = vmul.f32 %v5253, %v5376
        %v5510 = vmul.f32 %v5254, %v5386
        %v5511 = vmul.f32 %v5255, %v5396
        %v5512 = vmul.f32 %v5256, %v5406
        %v5513 = vmul.f32 %v5257, %v5416
        %v5514 = vmul.f32 %v5258, %v5426
        %v5515 = vmul.f32 %v5259, %v5436
        %v5516 = vmul.f32 %v5260, %v5446
        %v5517 = vmul.f32 %v5261, %v5456
        %v5518 = vmul.f32 %v5262, %v5466
        %v5519 = vmul.f32 %v5263, %v5476
        %v5520 = vmul.f32 %v5264, %v5486
        %v5521 = vmul.f32 %v5265, %v5496
        %v5522 = vmul.f32 %v5266, %v5506
        %v5523 = vld [vmem:[%s13] sm:$0x1]
        %v5525 = vperm.slane %v5523, 0
        %v5527 = vmul.f32 %v5507, %v5525
        %v5528 = vmul.f32 %v5508, %v5525
        %v5529 = vmul.f32 %v5509, %v5525
        %v5530 = vmul.f32 %v5510, %v5525
        %v5531 = vmul.f32 %v5511, %v5525
        %v5532 = vmul.f32 %v5512, %v5525
        %v5533 = vmul.f32 %v5513, %v5525
        %v5534 = vmul.f32 %v5514, %v5525
        %v5535 = vmul.f32 %v5515, %v5525
        %v5536 = vmul.f32 %v5516, %v5525
        %v5537 = vmul.f32 %v5517, %v5525
        %v5538 = vmul.f32 %v5518, %v5525
        %v5539 = vmul.f32 %v5519, %v5525
        %v5540 = vmul.f32 %v5520, %v5525
        %v5541 = vmul.f32 %v5521, %v5525
        %v5542 = vmul.f32 %v5522, %v5525
        %v5543 = vld [vmem:[#allocation13] sm:$0x1]
        %v5545 = vperm.slane %v5543, 0
        %v5547 = vadd.f32 %v5527, %v5545
        %v5548 = vadd.f32 %v5528, %v5545
        %v5549 = vadd.f32 %v5529, %v5545
        %v5550 = vadd.f32 %v5530, %v5545
        %v5551 = vadd.f32 %v5531, %v5545
        %v5552 = vadd.f32 %v5532, %v5545
        %v5553 = vadd.f32 %v5533, %v5545
        %v5554 = vadd.f32 %v5534, %v5545
        %v5555 = vadd.f32 %v5535, %v5545
        %v5556 = vadd.f32 %v5536, %v5545
        %v5557 = vadd.f32 %v5537, %v5545
        %v5558 = vadd.f32 %v5538, %v5545
        %v5559 = vadd.f32 %v5539, %v5545
        %v5560 = vadd.f32 %v5540, %v5545
        %v5561 = vadd.f32 %v5541, %v5545
        %v5562 = vadd.f32 %v5542, %v5545
        %5563 = vst [vmem:[%s589] sm:$0xff] %v5547
        %5564 = vst [vmem:[%s589 + $0x8] sm:$0xff] %v5548
        %5565 = vst [vmem:[%s589 + $0x10] sm:$0xff] %v5549
        %5566 = vst [vmem:[%s589 + $0x18] sm:$0xff] %v5550
        %5567 = vst [vmem:[%s589 + $0x20] sm:$0xff] %v5551
        %5568 = vst [vmem:[%s589 + $0x28] sm:$0xff] %v5552
        %5569 = vst [vmem:[%s589 + $0x30] sm:$0xff] %v5553
        %5570 = vst [vmem:[%s589 + $0x38] sm:$0xff] %v5554
        %5571 = vst [vmem:[%s589 + $0x40] sm:$0xff] %v5555
        %5572 = vst [vmem:[%s589 + $0x48] sm:$0xff] %v5556
        %5573 = vst [vmem:[%s589 + $0x50] sm:$0xff] %v5557
        %5574 = vst [vmem:[%s589 + $0x58] sm:$0xff] %v5558
        %5575 = vst [vmem:[%s589 + $0x60] sm:$0xff] %v5559
        %5576 = vst [vmem:[%s589 + $0x68] sm:$0xff] %v5560
        %5577 = vst [vmem:[%s589 + $0x70] sm:$0xff] %v5561
        %5578 = vst [vmem:[%s589 + $0x78] sm:$0xff] %v5562
        %s5579 = smul.u32 16, %s34
        %p5580 = scmp.lt.s32.totalorder %s33, 1
        %s5581 = scalar_select %p5580, %s33, 1
        %p5582 = scmp.lt.s32.totalorder %s5579, 15
        %s5583 = scalar_select %p5582, %s5579, 15
        %s5584 = smul.addr %s5581, 16
        %s5585 = sadd.s32 %s5583, %s5584
        %s5586 = smul.addr %s5585, 8
        %s5587 = scalar_lea.vmem %s15, %s5586
        // Predicated region
        $region105: #{encoder_layer_pallas.1} parent=79 // pred_check
          %p5588 = pneg %p381
        $region106: #{encoder_layer_pallas.1} parent=79 // pred_check_branch
          %5590 = sbr.rel (%p5588) target = $region108
        $region107: #{encoder_layer_pallas.1} parent=79 // pred_region
          %s5591 = smul.u32 16, %s34
        $region108: #{encoder_layer_pallas.1} parent=79 // pred_fallthru
          _
      $region80: #{encoder_layer_pallas.1} parent=5 // pred_fallthru
        _
      %p5592 = scmp.le.s32.totalorder 2, %s24
      // Predicated region
      $region109: #{encoder_layer_pallas.1} parent=5 // pred_check
        %p5593 = pneg %p5592
      $region110: #{encoder_layer_pallas.1} parent=5 // pred_check_branch
        %5595 = sbr.rel (%p5593) target = $region112
      $region111: #{encoder_layer_pallas.1} parent=5 // pred_region
        %s5596 = ssub.s32 %s24, 2
        // Predicated region
        $region113: #{encoder_layer_pallas.1} parent=111 // pred_check
          %p5597 = pneg %p387
        $region114: #{encoder_layer_pallas.1} parent=111 // pred_check_branch
          %5599 = sbr.rel (%p5597) target = $region116
        $region115: #{encoder_layer_pallas.1} parent=111 // pred_region
          %s5600 = smul.u32 16, %s36
          %p5601 = scmp.lt.s32.totalorder %s35, 1
          %s5602 = scalar_select %p5601, %s35, 1
          %p5603 = scmp.lt.s32.totalorder %s5600, 15
          %s5604 = scalar_select %p5603, %s5600, 15
          %s5605 = smul.addr %s5602, 16
          %s5606 = sadd.s32 %s5604, %s5605
          %s5607 = smul.addr %s5606, 8
          %s5608 = scalar_lea.vmem %s15, %s5607
        $region116: #{encoder_layer_pallas.1} parent=111 // pred_fallthru
          _
      $region112: #{encoder_layer_pallas.1} parent=5 // pred_fallthru
        _
    $region6: #{encoder_layer_pallas.1} parent=1 // loop_footer
      %s28 = sadd.s32 1, %s24
    $region7: #{encoder_layer_pallas.1} parent=1 // loop_footer_branch
      %23 = sbr.rel target = $region3
    $region8: #{encoder_layer_pallas.1} parent=1 // loop_exit
      _
    %5609 = vsyncpa [#allocation7], 1
    %s5610 = scalar_lea.sflag [#allocation7], 1
    %5611 = vsyncpa %s5610, 1
    %5612 = vsyncpa [#allocation9], 1
    %5613 = vsyncpa [#allocation12], 1

</llo_original>
